<compile_context>
chip_gen: v7x
topology: tpu7x:2x2x1
jax: 0.10.0
libtpu: 0.0.40
codegen_flags: <defaults>
</compile_context>

<pallas_src>
import functools

import jax
import jax.numpy as jnp
from jax.experimental import pallas as pl
from jax.experimental.pallas import tpu as pltpu

# ----------------------------- model config ---------------------------------
D = 8                    # number of encoder layers
W = 64                   # hidden width (small & test-friendly; module default 256)
IN_CHANNELS_XYZ = 34     # embedded xyz channels (module default)
SKIPS = (4,)             # skip-concat layers
OUT_CHANNELS = 3
SIGMOID_OFFSET = 0.0


def _round_up(n, m):
    return ((n + m - 1) // m) * m


# ------------------------------ Pallas kernel --------------------------------
def _implicit_video_kernel(x_ref, wx_ref, wh_ref, wout_ref, benc_ref, bout_ref,
                           out_ref, *, sigmoid_offset):
    """Whole MLP for one batch tile.

    x_ref    : (TB, C)           f32   embedded xyz (cast to bf16 in-kernel)
    wx_ref   : (1+#skips, C, W)  bf16  weights acting on the raw input
                                       (layer 0 + x-half of each skip layer)
    wh_ref   : (D-1, W, W)       bf16  weights acting on the hidden state
                                       (layers 1..D-1; skip layers use h-half)
    wout_ref : (W, OUT)          bf16  fused xyz_encoding_final @ rgb weight
    benc_ref : (D, 1, W)         f32   encoder biases
    bout_ref : (1, OUT)          f32   fused output bias
    out_ref  : (TB, OUT)         f32
    """
    cd = wx_ref.dtype
    # Cast after the DMA: avoids a wrapper-side HBM cast pass over x.
    x = x_ref[...].astype(cd)                                    # (TB, C) bf16

    # layer 0
    acc = jnp.dot(x, wx_ref[0], preferred_element_type=jnp.float32)
    h = jnp.maximum(acc + benc_ref[0], 0.0).astype(cd)           # carry bf16

    skip_idx = 1
    for i in range(1, D):
        acc = jnp.dot(h, wh_ref[i - 1], preferred_element_type=jnp.float32)
        if i in SKIPS:
            # concat([x, h]) @ W_skip  ==  x @ W_skip[:C] + h @ W_skip[C:]
            acc = acc + jnp.dot(x, wx_ref[skip_idx],
                                preferred_element_type=jnp.float32)
            skip_idx += 1
        h = jnp.maximum(acc + benc_ref[i], 0.0).astype(cd)       # carry bf16

    # fused (xyz_encoding_final ∘ rgb) linear, then sigmoid - offset
    o = jnp.dot(h, wout_ref[...],
                preferred_element_type=jnp.float32) + bout_ref[...]
    out_ref[...] = (jax.nn.sigmoid(o) - sigmoid_offset).astype(out_ref.dtype)


# --------------------------- parameter packing --------------------------------
def pack_params(params, compute_dtype=jnp.bfloat16):
    """Flat [w0,b0,...,w7,b7,w_final,b_final,w_rgb,b_rgb] -> 5 packed slabs."""
    w = [params[2 * i] for i in range(D)]
    b = [params[2 * i + 1] for i in range(D)]
    w_final, b_final = params[2 * D], params[2 * D + 1]
    w_rgb, b_rgb = params[2 * D + 2], params[2 * D + 3]

    wx_list = [w[0]]                   # layer 0: acts on the raw input
    wh_list = []
    for i in range(1, D):
        if i in SKIPS:
            wx_list.append(w[i][:IN_CHANNELS_XYZ])    # x-half of skip weight
            wh_list.append(w[i][IN_CHANNELS_XYZ:])    # h-half of skip weight
        else:
            wh_list.append(w[i])
    wx = jnp.stack(wx_list).astype(compute_dtype)     # (1+#skips, C, W)
    wh = jnp.stack(wh_list).astype(compute_dtype)     # (D-1, W, W)

    # No nonlinearity between xyz_encoding_final and rgb -> fuse the linears.
    w_fused = (w_final @ w_rgb).astype(compute_dtype)             # (W, OUT)
    b_fused = (b_final @ w_rgb + b_rgb).astype(jnp.float32)       # (OUT,)

    benc = jnp.stack(b).astype(jnp.float32)[:, None, :]           # (D, 1, W)
    bout = b_fused[None, :]                                       # (1, OUT)
    return wx, wh, w_fused, benc, bout


# ------------------------------ forward wrapper -------------------------------
def implicit_video_forward(x, params, *, tile_b=2048,
                           compute_dtype=jnp.bfloat16):
    """x: (B, IN_CHANNELS_XYZ) f32; params: flat list [w0,b0,...,w_rgb,b_rgb]."""
    B, C = x.shape
    assert C == IN_CHANNELS_XYZ

    wx, wh, wout, benc, bout = pack_params(params, compute_dtype)

    # Big batch tiles amortize the ~0.35us/grid-step overhead and the
    # per-matmul weight-load/drain at W=64, but keep the grid >= 2 steps so
    # both v7x TensorCores (and megacore on v5e/v6e) get work.  Tile stays a
    # multiple of 256 (MXU-row friendly); the last ragged block is masked by
    # Pallas, so no wrapper-side pad / cast passes over x are needed.
    tile_b = max(256, min(tile_b, _round_up(pl.cdiv(B, 2), 256)))
    grid = (pl.cdiv(B, tile_b),)

    const3 = lambda i: (0, 0, 0)
    const2 = lambda i: (0, 0)
    in_specs = [
        pl.BlockSpec((tile_b, C), lambda i: (i, 0)),   # x: tiled over batch
        pl.BlockSpec(wx.shape, const3),                # weight slabs: resident
        pl.BlockSpec(wh.shape, const3),
        pl.BlockSpec(wout.shape, const2),
        pl.BlockSpec(benc.shape, const3),
        pl.BlockSpec(bout.shape, const2),
    ]
    out_spec = pl.BlockSpec((tile_b, OUT_CHANNELS), lambda i: (i, 0))

    kernel = functools.partial(_implicit_video_kernel,
                               sigmoid_offset=SIGMOID_OFFSET)

    out = pl.pallas_call(
        kernel,
        out_shape=jax.ShapeDtypeStruct((B, OUT_CHANNELS), jnp.float32),
        grid_spec=pltpu.PrefetchScalarGridSpec(
            num_scalar_prefetch=0,
            grid=grid,
            in_specs=in_specs,
            out_specs=out_spec,
        ),
        compiler_params=pltpu.CompilerParams(
            # Batch tiles are independent -> megacore / both v7x TCs can split.
            dimension_semantics=("parallel",)),
    )(x, wx, wh, wout, benc, bout)
    return out


# --------------------------- parameter construction --------------------------
def _xavier_uniform(key, fan_in, fan_out):
    limit = (6.0 / (fan_in + fan_out)) ** 0.5
    # Stored (in_dim, out_dim) so the kernel does h @ W (xavier is symmetric in
    # fan_in/fan_out so the distribution matches torch's (out,in) init).
    return jax.random.uniform(key, (fan_in, fan_out), jnp.float32, -limit, limit)


def make_params(key):
    # Note: the torch module zero-inits biases; small random biases exercise
    # the bias path of the kernel (forward semantics are identical for any
    # loaded weights).
    params = []
    keys = jax.random.split(key, 2 * (D + 2))
    for i in range(D):
        if i == 0:
            in_dim = IN_CHANNELS_XYZ
        elif i in SKIPS:
            in_dim = W + IN_CHANNELS_XYZ
        else:
            in_dim = W
        params.append(_xavier_uniform(keys[2 * i], in_dim, W))
        params.append(0.01 * jax.random.normal(keys[2 * i + 1], (W,), jnp.float32))
    # xyz_encoding_final
    params.append(_xavier_uniform(keys[2 * D], W, W))
    params.append(0.01 * jax.random.normal(keys[2 * D + 1], (W,), jnp.float32))
    # rgb head
    params.append(_xavier_uniform(keys[2 * D + 2], W, OUT_CHANNELS))
    params.append(0.01 * jax.random.normal(keys[2 * D + 3], (OUT_CHANNELS,),
                                           jnp.float32))
    return params


# ------------------------------ pure-JAX reference ---------------------------
def reference_forward(x, params):
    h = x
    for i in range(D):
        w, b = params[2 * i], params[2 * i + 1]
        if i in SKIPS:
            h = jnp.concatenate([x, h], axis=-1)
        h = jnp.maximum(h @ w + b, 0.0)
    h = h @ params[2 * D] + params[2 * D + 1]
    o = h @ params[2 * D + 2] + params[2 * D + 3]
    return jax.nn.sigmoid(o) - SIGMOID_OFFSET


# ----------------------------------- main ------------------------------------
if __name__ == "__main__":
    key = jax.random.PRNGKey(0)
    k_x, k_p = jax.random.split(key)

    B = 1000   # not a multiple of the tile -> exercises the ragged-block path
    x = jax.random.normal(k_x, (B, IN_CHANNELS_XYZ), jnp.float32)
    params = make_params(k_p)

    out = implicit_video_forward(x, params)   # tile_b clamps to 512, grid=(2,)
    out = jax.block_until_ready(out)

    ref = reference_forward(x, params)
    assert out.shape == (B, OUT_CHANNELS)
    err = float(jnp.max(jnp.abs(out - ref)))
    # bf16 matmul operands / bf16-carried hidden state with f32 accumulation
    # vs. an all-f32 reference: loose-but-meaningful tolerance (~1e-3 observed).
    assert err < 2e-2, f"mismatch vs reference: max abs err {err}"

    print("KERNEL_OK")
</pallas_src>

<mosaic_0001>
module attributes {stable_mosaic.version = 11 : i64} {
  func.func @_implicit_video_kernel(%arg0: i32, %arg1: memref<512x34xf32, #tpu.memory_space<vmem>>, %arg2: memref<2x34x64xbf16, #tpu.memory_space<vmem>>, %arg3: memref<7x64x64xbf16, #tpu.memory_space<vmem>>, %arg4: memref<64x3xbf16, #tpu.memory_space<vmem>>, %arg5: memref<8x1x64xf32, #tpu.memory_space<vmem>>, %arg6: memref<1x3xf32, #tpu.memory_space<vmem>>, %arg7: memref<512x3xf32, #tpu.memory_space<vmem>>) attributes {dimension_semantics = [#tpu.dimension_semantics<parallel>], iteration_bounds = array<i64: 2>, scalar_prefetch = 0 : i64, scratch_operands = 0 : i64, tpu.core_type = #tpu.core_type<tc>, window_params = [{transform_indices = @transform_0, window_bounds = array<i64: 512, 34>}, {pipeline_mode = #tpu.pipeline_mode<synchronous>, transform_indices = @transform_1, window_bounds = array<i64: 2, 34, 64>}, {pipeline_mode = #tpu.pipeline_mode<synchronous>, transform_indices = @transform_2, window_bounds = array<i64: 7, 64, 64>}, {pipeline_mode = #tpu.pipeline_mode<synchronous>, transform_indices = @transform_3, window_bounds = array<i64: 64, 3>}, {pipeline_mode = #tpu.pipeline_mode<synchronous>, transform_indices = @transform_4, window_bounds = array<i64: 8, 1, 64>}, {pipeline_mode = #tpu.pipeline_mode<synchronous>, transform_indices = @transform_5, window_bounds = array<i64: 1, 3>}, {transform_indices = @transform_6, window_bounds = array<i64: 512, 3>}]} {
    %c0 = arith.constant 0 : index
    %c0_0 = arith.constant 0 : index
    %0 = vector.load %arg1[%c0, %c0_0] : memref<512x34xf32, #tpu.memory_space<vmem>>, vector<512x34xf32>
    %1 = arith.truncf %0 : vector<512x34xf32> to vector<512x34xbf16>
    %c0_1 = arith.constant 0 : index
    %c0_2 = arith.constant 0 : index
    %c0_3 = arith.constant 0 : index
    %2 = vector.load %arg2[%c0_1, %c0_2, %c0_3] : memref<2x34x64xbf16, #tpu.memory_space<vmem>>, vector<1x34x64xbf16>
    %3 = vector.shape_cast %2 : vector<1x34x64xbf16> to vector<34x64xbf16>
    %cst = arith.constant dense<0.000000e+00> : vector<512x64xf32>
    %4 = tpu.matmul %1, %3, %cst {dimension_numbers = #tpu.dot_dimension_numbers<[1], [0], [0], [1], [0, 0, 1, 1], [], []>} : vector<512x34xbf16>, vector<34x64xbf16>, vector<512x64xf32> -> vector<512x64xf32>
    %c0_4 = arith.constant 0 : index
    %c0_5 = arith.constant 0 : index
    %c0_6 = arith.constant 0 : index
    %5 = vector.load %arg5[%c0_4, %c0_5, %c0_6] : memref<8x1x64xf32, #tpu.memory_space<vmem>>, vector<1x1x64xf32>
    %6 = vector.shape_cast %5 : vector<1x1x64xf32> to vector<1x64xf32>
    %7 = vector.broadcast %6 : vector<1x64xf32> to vector<512x64xf32>
    %8 = arith.addf %4, %7 : vector<512x64xf32>
    %cst_7 = arith.constant 0.000000e+00 : f32
    %9 = vector.broadcast %cst_7 : f32 to vector<512x64xf32>
    %10 = arith.maximumf %8, %9 : vector<512x64xf32>
    %11 = arith.truncf %10 : vector<512x64xf32> to vector<512x64xbf16>
    %c0_8 = arith.constant 0 : index
    %c0_9 = arith.constant 0 : index
    %c0_10 = arith.constant 0 : index
    %12 = vector.load %arg3[%c0_8, %c0_9, %c0_10] : memref<7x64x64xbf16, #tpu.memory_space<vmem>>, vector<1x64x64xbf16>
    %13 = vector.shape_cast %12 : vector<1x64x64xbf16> to vector<64x64xbf16>
    %cst_11 = arith.constant dense<0.000000e+00> : vector<512x64xf32>
    %14 = tpu.matmul %11, %13, %cst_11 {dimension_numbers = #tpu.dot_dimension_numbers<[1], [0], [0], [1], [0, 0, 1, 1], [], []>} : vector<512x64xbf16>, vector<64x64xbf16>, vector<512x64xf32> -> vector<512x64xf32>
    %c1 = arith.constant 1 : index
    %c0_12 = arith.constant 0 : index
    %c0_13 = arith.constant 0 : index
    %15 = vector.load %arg5[%c1, %c0_12, %c0_13] : memref<8x1x64xf32, #tpu.memory_space<vmem>>, vector<1x1x64xf32>
    %16 = vector.shape_cast %15 : vector<1x1x64xf32> to vector<1x64xf32>
    %17 = vector.broadcast %16 : vector<1x64xf32> to vector<512x64xf32>
    %18 = arith.addf %14, %17 : vector<512x64xf32>
    %cst_14 = arith.constant 0.000000e+00 : f32
    %19 = vector.broadcast %cst_14 : f32 to vector<512x64xf32>
    %20 = arith.maximumf %18, %19 : vector<512x64xf32>
    %21 = arith.truncf %20 : vector<512x64xf32> to vector<512x64xbf16>
    %c1_15 = arith.constant 1 : index
    %c0_16 = arith.constant 0 : index
    %c0_17 = arith.constant 0 : index
    %22 = vector.load %arg3[%c1_15, %c0_16, %c0_17] : memref<7x64x64xbf16, #tpu.memory_space<vmem>>, vector<1x64x64xbf16>
    %23 = vector.shape_cast %22 : vector<1x64x64xbf16> to vector<64x64xbf16>
    %cst_18 = arith.constant dense<0.000000e+00> : vector<512x64xf32>
    %24 = tpu.matmul %21, %23, %cst_18 {dimension_numbers = #tpu.dot_dimension_numbers<[1], [0], [0], [1], [0, 0, 1, 1], [], []>} : vector<512x64xbf16>, vector<64x64xbf16>, vector<512x64xf32> -> vector<512x64xf32>
    %c2 = arith.constant 2 : index
    %c0_19 = arith.constant 0 : index
    %c0_20 = arith.constant 0 : index
    %25 = vector.load %arg5[%c2, %c0_19, %c0_20] : memref<8x1x64xf32, #tpu.memory_space<vmem>>, vector<1x1x64xf32>
    %26 = vector.shape_cast %25 : vector<1x1x64xf32> to vector<1x64xf32>
    %27 = vector.broadcast %26 : vector<1x64xf32> to vector<512x64xf32>
    %28 = arith.addf %24, %27 : vector<512x64xf32>
    %cst_21 = arith.constant 0.000000e+00 : f32
    %29 = vector.broadcast %cst_21 : f32 to vector<512x64xf32>
    %30 = arith.maximumf %28, %29 : vector<512x64xf32>
    %31 = arith.truncf %30 : vector<512x64xf32> to vector<512x64xbf16>
    %c2_22 = arith.constant 2 : index
    %c0_23 = arith.constant 0 : index
    %c0_24 = arith.constant 0 : index
    %32 = vector.load %arg3[%c2_22, %c0_23, %c0_24] : memref<7x64x64xbf16, #tpu.memory_space<vmem>>, vector<1x64x64xbf16>
    %33 = vector.shape_cast %32 : vector<1x64x64xbf16> to vector<64x64xbf16>
    %cst_25 = arith.constant dense<0.000000e+00> : vector<512x64xf32>
    %34 = tpu.matmul %31, %33, %cst_25 {dimension_numbers = #tpu.dot_dimension_numbers<[1], [0], [0], [1], [0, 0, 1, 1], [], []>} : vector<512x64xbf16>, vector<64x64xbf16>, vector<512x64xf32> -> vector<512x64xf32>
    %c3 = arith.constant 3 : index
    %c0_26 = arith.constant 0 : index
    %c0_27 = arith.constant 0 : index
    %35 = vector.load %arg5[%c3, %c0_26, %c0_27] : memref<8x1x64xf32, #tpu.memory_space<vmem>>, vector<1x1x64xf32>
    %36 = vector.shape_cast %35 : vector<1x1x64xf32> to vector<1x64xf32>
    %37 = vector.broadcast %36 : vector<1x64xf32> to vector<512x64xf32>
    %38 = arith.addf %34, %37 : vector<512x64xf32>
    %cst_28 = arith.constant 0.000000e+00 : f32
    %39 = vector.broadcast %cst_28 : f32 to vector<512x64xf32>
    %40 = arith.maximumf %38, %39 : vector<512x64xf32>
    %41 = arith.truncf %40 : vector<512x64xf32> to vector<512x64xbf16>
    %c3_29 = arith.constant 3 : index
    %c0_30 = arith.constant 0 : index
    %c0_31 = arith.constant 0 : index
    %42 = vector.load %arg3[%c3_29, %c0_30, %c0_31] : memref<7x64x64xbf16, #tpu.memory_space<vmem>>, vector<1x64x64xbf16>
    %43 = vector.shape_cast %42 : vector<1x64x64xbf16> to vector<64x64xbf16>
    %cst_32 = arith.constant dense<0.000000e+00> : vector<512x64xf32>
    %44 = tpu.matmul %41, %43, %cst_32 {dimension_numbers = #tpu.dot_dimension_numbers<[1], [0], [0], [1], [0, 0, 1, 1], [], []>} : vector<512x64xbf16>, vector<64x64xbf16>, vector<512x64xf32> -> vector<512x64xf32>
    %c1_33 = arith.constant 1 : index
    %c0_34 = arith.constant 0 : index
    %c0_35 = arith.constant 0 : index
    %45 = vector.load %arg2[%c1_33, %c0_34, %c0_35] : memref<2x34x64xbf16, #tpu.memory_space<vmem>>, vector<1x34x64xbf16>
    %46 = vector.shape_cast %45 : vector<1x34x64xbf16> to vector<34x64xbf16>
    %cst_36 = arith.constant dense<0.000000e+00> : vector<512x64xf32>
    %47 = tpu.matmul %1, %46, %cst_36 {dimension_numbers = #tpu.dot_dimension_numbers<[1], [0], [0], [1], [0, 0, 1, 1], [], []>} : vector<512x34xbf16>, vector<34x64xbf16>, vector<512x64xf32> -> vector<512x64xf32>
    %48 = arith.addf %44, %47 : vector<512x64xf32>
    %c4 = arith.constant 4 : index
    %c0_37 = arith.constant 0 : index
    %c0_38 = arith.constant 0 : index
    %49 = vector.load %arg5[%c4, %c0_37, %c0_38] : memref<8x1x64xf32, #tpu.memory_space<vmem>>, vector<1x1x64xf32>
    %50 = vector.shape_cast %49 : vector<1x1x64xf32> to vector<1x64xf32>
    %51 = vector.broadcast %50 : vector<1x64xf32> to vector<512x64xf32>
    %52 = arith.addf %48, %51 : vector<512x64xf32>
    %cst_39 = arith.constant 0.000000e+00 : f32
    %53 = vector.broadcast %cst_39 : f32 to vector<512x64xf32>
    %54 = arith.maximumf %52, %53 : vector<512x64xf32>
    %55 = arith.truncf %54 : vector<512x64xf32> to vector<512x64xbf16>
    %c4_40 = arith.constant 4 : index
    %c0_41 = arith.constant 0 : index
    %c0_42 = arith.constant 0 : index
    %56 = vector.load %arg3[%c4_40, %c0_41, %c0_42] : memref<7x64x64xbf16, #tpu.memory_space<vmem>>, vector<1x64x64xbf16>
    %57 = vector.shape_cast %56 : vector<1x64x64xbf16> to vector<64x64xbf16>
    %cst_43 = arith.constant dense<0.000000e+00> : vector<512x64xf32>
    %58 = tpu.matmul %55, %57, %cst_43 {dimension_numbers = #tpu.dot_dimension_numbers<[1], [0], [0], [1], [0, 0, 1, 1], [], []>} : vector<512x64xbf16>, vector<64x64xbf16>, vector<512x64xf32> -> vector<512x64xf32>
    %c5 = arith.constant 5 : index
    %c0_44 = arith.constant 0 : index
    %c0_45 = arith.constant 0 : index
    %59 = vector.load %arg5[%c5, %c0_44, %c0_45] : memref<8x1x64xf32, #tpu.memory_space<vmem>>, vector<1x1x64xf32>
    %60 = vector.shape_cast %59 : vector<1x1x64xf32> to vector<1x64xf32>
    %61 = vector.broadcast %60 : vector<1x64xf32> to vector<512x64xf32>
    %62 = arith.addf %58, %61 : vector<512x64xf32>
    %cst_46 = arith.constant 0.000000e+00 : f32
    %63 = vector.broadcast %cst_46 : f32 to vector<512x64xf32>
    %64 = arith.maximumf %62, %63 : vector<512x64xf32>
    %65 = arith.truncf %64 : vector<512x64xf32> to vector<512x64xbf16>
    %c5_47 = arith.constant 5 : index
    %c0_48 = arith.constant 0 : index
    %c0_49 = arith.constant 0 : index
    %66 = vector.load %arg3[%c5_47, %c0_48, %c0_49] : memref<7x64x64xbf16, #tpu.memory_space<vmem>>, vector<1x64x64xbf16>
    %67 = vector.shape_cast %66 : vector<1x64x64xbf16> to vector<64x64xbf16>
    %cst_50 = arith.constant dense<0.000000e+00> : vector<512x64xf32>
    %68 = tpu.matmul %65, %67, %cst_50 {dimension_numbers = #tpu.dot_dimension_numbers<[1], [0], [0], [1], [0, 0, 1, 1], [], []>} : vector<512x64xbf16>, vector<64x64xbf16>, vector<512x64xf32> -> vector<512x64xf32>
    %c6 = arith.constant 6 : index
    %c0_51 = arith.constant 0 : index
    %c0_52 = arith.constant 0 : index
    %69 = vector.load %arg5[%c6, %c0_51, %c0_52] : memref<8x1x64xf32, #tpu.memory_space<vmem>>, vector<1x1x64xf32>
    %70 = vector.shape_cast %69 : vector<1x1x64xf32> to vector<1x64xf32>
    %71 = vector.broadcast %70 : vector<1x64xf32> to vector<512x64xf32>
    %72 = arith.addf %68, %71 : vector<512x64xf32>
    %cst_53 = arith.constant 0.000000e+00 : f32
    %73 = vector.broadcast %cst_53 : f32 to vector<512x64xf32>
    %74 = arith.maximumf %72, %73 : vector<512x64xf32>
    %75 = arith.truncf %74 : vector<512x64xf32> to vector<512x64xbf16>
    %c6_54 = arith.constant 6 : index
    %c0_55 = arith.constant 0 : index
    %c0_56 = arith.constant 0 : index
    %76 = vector.load %arg3[%c6_54, %c0_55, %c0_56] : memref<7x64x64xbf16, #tpu.memory_space<vmem>>, vector<1x64x64xbf16>
    %77 = vector.shape_cast %76 : vector<1x64x64xbf16> to vector<64x64xbf16>
    %cst_57 = arith.constant dense<0.000000e+00> : vector<512x64xf32>
    %78 = tpu.matmul %75, %77, %cst_57 {dimension_numbers = #tpu.dot_dimension_numbers<[1], [0], [0], [1], [0, 0, 1, 1], [], []>} : vector<512x64xbf16>, vector<64x64xbf16>, vector<512x64xf32> -> vector<512x64xf32>
    %c7 = arith.constant 7 : index
    %c0_58 = arith.constant 0 : index
    %c0_59 = arith.constant 0 : index
    %79 = vector.load %arg5[%c7, %c0_58, %c0_59] : memref<8x1x64xf32, #tpu.memory_space<vmem>>, vector<1x1x64xf32>
    %80 = vector.shape_cast %79 : vector<1x1x64xf32> to vector<1x64xf32>
    %81 = vector.broadcast %80 : vector<1x64xf32> to vector<512x64xf32>
    %82 = arith.addf %78, %81 : vector<512x64xf32>
    %cst_60 = arith.constant 0.000000e+00 : f32
    %83 = vector.broadcast %cst_60 : f32 to vector<512x64xf32>
    %84 = arith.maximumf %82, %83 : vector<512x64xf32>
    %85 = arith.truncf %84 : vector<512x64xf32> to vector<512x64xbf16>
    %c0_61 = arith.constant 0 : index
    %c0_62 = arith.constant 0 : index
    %86 = vector.load %arg4[%c0_61, %c0_62] : memref<64x3xbf16, #tpu.memory_space<vmem>>, vector<64x3xbf16>
    %cst_63 = arith.constant dense<0.000000e+00> : vector<512x3xf32>
    %87 = tpu.matmul %85, %86, %cst_63 {dimension_numbers = #tpu.dot_dimension_numbers<[1], [0], [0], [1], [0, 0, 1, 1], [], []>} : vector<512x64xbf16>, vector<64x3xbf16>, vector<512x3xf32> -> vector<512x3xf32>
    %c0_64 = arith.constant 0 : index
    %c0_65 = arith.constant 0 : index
    %88 = vector.load %arg6[%c0_64, %c0_65] : memref<1x3xf32, #tpu.memory_space<vmem>>, vector<1x3xf32>
    %89 = vector.broadcast %88 : vector<1x3xf32> to vector<512x3xf32>
    %90 = arith.addf %87, %89 : vector<512x3xf32>
    %91 = arith.negf %90 : vector<512x3xf32>
    %92 = math.exp %91 : vector<512x3xf32>
    %cst_66 = arith.constant 1.000000e+00 : f32
    %93 = vector.broadcast %cst_66 : f32 to vector<512x3xf32>
    %94 = arith.addf %93, %92 : vector<512x3xf32>
    %95 = arith.divf %93, %94 : vector<512x3xf32>
    %cst_67 = arith.constant 0.000000e+00 : f32
    %96 = vector.broadcast %cst_67 : f32 to vector<512x3xf32>
    %97 = arith.subf %95, %96 : vector<512x3xf32>
    %c0_68 = arith.constant 0 : index
    %c0_69 = arith.constant 0 : index
    %98 = vector.load %arg7[%c0_68, %c0_69] : memref<512x3xf32, #tpu.memory_space<vmem>>, vector<512x3xf32>
    tpu.vector_store %arg7[%c0_68, %c0_69], %97 {strides = array<i32>} : memref<512x3xf32, #tpu.memory_space<vmem>>, vector<512x3xf32>,
    return
  }
  func.func @transform_0(%arg0: i32) -> (i32, i32) {
    %c0_i32 = arith.constant 0 : i32
    %c0_i32_0 = arith.constant 0 : i32
    return %arg0, %c0_i32 : i32, i32
  }
  func.func @transform_1(%arg0: i32) -> (i32, i32, i32) {
    %c0_i32 = arith.constant 0 : i32
    %c0_i32_0 = arith.constant 0 : i32
    %c0_i32_1 = arith.constant 0 : i32
    %c0_i32_2 = arith.constant 0 : i32
    return %c0_i32, %c0_i32_0, %c0_i32_1 : i32, i32, i32
  }
  func.func @transform_2(%arg0: i32) -> (i32, i32, i32) {
    %c0_i32 = arith.constant 0 : i32
    %c0_i32_0 = arith.constant 0 : i32
    %c0_i32_1 = arith.constant 0 : i32
    %c0_i32_2 = arith.constant 0 : i32
    return %c0_i32, %c0_i32_0, %c0_i32_1 : i32, i32, i32
  }
  func.func @transform_3(%arg0: i32) -> (i32, i32) {
    %c0_i32 = arith.constant 0 : i32
    %c0_i32_0 = arith.constant 0 : i32
    %c0_i32_1 = arith.constant 0 : i32
    return %c0_i32, %c0_i32_0 : i32, i32
  }
  func.func @transform_4(%arg0: i32) -> (i32, i32, i32) {
    %c0_i32 = arith.constant 0 : i32
    %c0_i32_0 = arith.constant 0 : i32
    %c0_i32_1 = arith.constant 0 : i32
    %c0_i32_2 = arith.constant 0 : i32
    return %c0_i32, %c0_i32_0, %c0_i32_1 : i32, i32, i32
  }
  func.func @transform_5(%arg0: i32) -> (i32, i32) {
    %c0_i32 = arith.constant 0 : i32
    %c0_i32_0 = arith.constant 0 : i32
    %c0_i32_1 = arith.constant 0 : i32
    return %c0_i32, %c0_i32_0 : i32, i32
  }
  func.func @transform_6(%arg0: i32) -> (i32, i32) {
    %c0_i32 = arith.constant 0 : i32
    %c0_i32_0 = arith.constant 0 : i32
    return %arg0, %c0_i32 : i32, i32
  }
}

</mosaic_0001>

<llo_original>
// kernel: tpu_custom_call.1
$region0: #{tpu_custom_call.1}
  #allocation0 [shape = 'u32[]', space=smem, size = 0x4, offset = 0x4, fixed_abs, tag = 'smem constant byte address 0x4 - core index']
  #allocation1 [shape = 'u32[144,128]{1,0:T(1,128)}', space=vmem, size = 0x12000, scoped, tag = 'internal scratch']
  %s0 = inlined_call_operand.vmem [shape: f32[1000,34], index: 0, kind: input, shape index: {}]
  %s1 = inlined_call_operand.vmem [shape: bf16[2,34,64], index: 1, kind: input, shape index: {}]
  %s2 = inlined_call_operand.vmem [shape: bf16[7,64,64], index: 2, kind: input, shape index: {}]
  %s3 = inlined_call_operand.vmem [shape: bf16[64,3], index: 3, kind: input, shape index: {}]
  %s4 = inlined_call_operand.vmem [shape: f32[8,1,64], index: 4, kind: input, shape index: {}]
  %s5 = inlined_call_operand.vmem [shape: f32[1,3], index: 5, kind: input, shape index: {}]
  %s6 = inlined_call_operand.vmem [shape: f32[1000,3], index: 6, kind: output, shape index: {}]
  %s7 = sld [smem:[#allocation0]]
  $region105: #{tpu_custom_call.1} parent=0
    _
  %s9 = ssub.s32 1, %s7
  %s10 = scalar_select 0, %s9, %s7
  $region1: #{tpu_custom_call.1} parent=0
    #allocation2 [shape = 'u8[524288]{0}', space=vmem, size = 0x80000, scoped, tag = 'output window, operand 0']
    loop: start=0, step=1, limit=4
    $region2: #{tpu_custom_call.1} parent=1 // loop_pre_header
      _
    $region3: #{tpu_custom_call.1} parent=1 // loop_header
      %s12 = sphi 0, %s16
      %p13 = scmp.ge.s32.totalorder %s12, 4
      %s22 = sphi 0, %s24
      %s25 = sphi 0, %s22
      %s26 = sphi 0, %s25
      %s42 = sphi 0, %s26
      %s46 = sphi 0, %s46
      %s48 = sphi 0, %s46
      %s49 = sphi 0, %s48
      %s63 = sphi 0, %s49
      %s67 = sphi 0, %s67
      %s69 = sphi 0, %s67
      %s70 = sphi 0, %s69
      %s84 = sphi 0, %s70
      %s88 = sphi 0, %s88
      %s90 = sphi 0, %s88
      %s91 = sphi 0, %s90
      %s105 = sphi 0, %s91
      %s109 = sphi 0, %s109
      %s111 = sphi 0, %s109
      %s112 = sphi 0, %s111
      %s126 = sphi 0, %s112
      %s130 = sphi 0, %s130
      %s132 = sphi 0, %s130
      %s133 = sphi 0, %s132
      %s147 = sphi 0, %s133
      %s153 = sphi 0, %s155
      %s156 = sphi 0, %s153
      %s157 = sphi 0, %s156
      %s173 = sphi 0, %s157
    $region4: #{tpu_custom_call.1} parent=1 // loop_header_branch
      %15 = sbr.rel (%p13) target = $region8
    $region5: #{tpu_custom_call.1} parent=1 // loop_body
      %s17 = ssub.s32 %s12, 1
      %s18 = ssub.s32 %s12, 2
      %s19 = sadd.s32 %s12, 1
      %s20 = ssub.s32 %s12, %s19
      %p21 = scmp.eq.s32.totalorder %s20, 0
      %s23 = sadd.s32 %s22, 1
      %s24 = scalar_select %p21, %s22, %s23
      %p27 = pneg %p21
      %p28 = scmp.eq.s32.totalorder %s12, 1
      %p29 = por %p27, %p28
      %p30 = scmp.ne.s32.totalorder %s22, %s25
      %p31 = scmp.eq.s32.totalorder %s12, 0
      %p32 = por %p30, %p31
      %p33 = scmp.ne.s32.totalorder %s22, %s25
      %p34 = scmp.eq.s32.totalorder %s17, 1
      %p35 = por %p33, %p34
      %p36 = scmp.ne.s32.totalorder %s25, %s26
      %p37 = scmp.eq.s32.totalorder %s17, 0
      %p38 = por %p36, %p37
      %p39 = scmp.ne.s32.totalorder %s25, %s26
      %p40 = scmp.eq.s32.totalorder %s18, 1
      %p41 = por %p39, %p40
      %p43 = scmp.ne.s32.totalorder %s26, %s42
      %p44 = scmp.eq.s32.totalorder %s18, 0
      %p45 = por %p43, %p44
      %s47 = sadd.s32 %s46, 1
      %p50 = scmp.eq.s32.totalorder %s12, 1
      %p51 = scmp.ne.s32.totalorder %s46, %s48
      %p52 = scmp.eq.s32.totalorder %s12, 0
      %p53 = por %p51, %p52
      %p54 = scmp.ne.s32.totalorder %s46, %s48
      %p55 = scmp.eq.s32.totalorder %s17, 1
      %p56 = por %p54, %p55
      %p57 = scmp.ne.s32.totalorder %s48, %s49
      %p58 = scmp.eq.s32.totalorder %s17, 0
      %p59 = por %p57, %p58
      %p60 = scmp.ne.s32.totalorder %s48, %s49
      %p61 = scmp.eq.s32.totalorder %s18, 1
      %p62 = por %p60, %p61
      %p64 = scmp.ne.s32.totalorder %s49, %s63
      %p65 = scmp.eq.s32.totalorder %s18, 0
      %p66 = por %p64, %p65
      %s68 = sadd.s32 %s67, 1
      %p71 = scmp.eq.s32.totalorder %s12, 1
      %p72 = scmp.ne.s32.totalorder %s67, %s69
      %p73 = scmp.eq.s32.totalorder %s12, 0
      %p74 = por %p72, %p73
      %p75 = scmp.ne.s32.totalorder %s67, %s69
      %p76 = scmp.eq.s32.totalorder %s17, 1
      %p77 = por %p75, %p76
      %p78 = scmp.ne.s32.totalorder %s69, %s70
      %p79 = scmp.eq.s32.totalorder %s17, 0
      %p80 = por %p78, %p79
      %p81 = scmp.ne.s32.totalorder %s69, %s70
      %p82 = scmp.eq.s32.totalorder %s18, 1
      %p83 = por %p81, %p82
      %p85 = scmp.ne.s32.totalorder %s70, %s84
      %p86 = scmp.eq.s32.totalorder %s18, 0
      %p87 = por %p85, %p86
      %s89 = sadd.s32 %s88, 1
      %p92 = scmp.eq.s32.totalorder %s12, 1
      %p93 = scmp.ne.s32.totalorder %s88, %s90
      %p94 = scmp.eq.s32.totalorder %s12, 0
      %p95 = por %p93, %p94
      %p96 = scmp.ne.s32.totalorder %s88, %s90
      %p97 = scmp.eq.s32.totalorder %s17, 1
      %p98 = por %p96, %p97
      %p99 = scmp.ne.s32.totalorder %s90, %s91
      %p100 = scmp.eq.s32.totalorder %s17, 0
      %p101 = por %p99, %p100
      %p102 = scmp.ne.s32.totalorder %s90, %s91
      %p103 = scmp.eq.s32.totalorder %s18, 1
      %p104 = por %p102, %p103
      %p106 = scmp.ne.s32.totalorder %s91, %s105
      %p107 = scmp.eq.s32.totalorder %s18, 0
      %p108 = por %p106, %p107
      %s110 = sadd.s32 %s109, 1
      %p113 = scmp.eq.s32.totalorder %s12, 1
      %p114 = scmp.ne.s32.totalorder %s109, %s111
      %p115 = scmp.eq.s32.totalorder %s12, 0
      %p116 = por %p114, %p115
      %p117 = scmp.ne.s32.totalorder %s109, %s111
      %p118 = scmp.eq.s32.totalorder %s17, 1
      %p119 = por %p117, %p118
      %p120 = scmp.ne.s32.totalorder %s111, %s112
      %p121 = scmp.eq.s32.totalorder %s17, 0
      %p122 = por %p120, %p121
      %p123 = scmp.ne.s32.totalorder %s111, %s112
      %p124 = scmp.eq.s32.totalorder %s18, 1
      %p125 = por %p123, %p124
      %p127 = scmp.ne.s32.totalorder %s112, %s126
      %p128 = scmp.eq.s32.totalorder %s18, 0
      %p129 = por %p127, %p128
      %s131 = sadd.s32 %s130, 1
      %p134 = scmp.eq.s32.totalorder %s12, 1
      %p135 = scmp.ne.s32.totalorder %s130, %s132
      %p136 = scmp.eq.s32.totalorder %s12, 0
      %p137 = por %p135, %p136
      %p138 = scmp.ne.s32.totalorder %s130, %s132
      %p139 = scmp.eq.s32.totalorder %s17, 1
      %p140 = por %p138, %p139
      %p141 = scmp.ne.s32.totalorder %s132, %s133
      %p142 = scmp.eq.s32.totalorder %s17, 0
      %p143 = por %p141, %p142
      %p144 = scmp.ne.s32.totalorder %s132, %s133
      %p145 = scmp.eq.s32.totalorder %s18, 1
      %p146 = por %p144, %p145
      %p148 = scmp.ne.s32.totalorder %s133, %s147
      %p149 = scmp.eq.s32.totalorder %s18, 0
      %p150 = por %p148, %p149
      %s151 = ssub.s32 %s12, %s19
      %p152 = scmp.eq.s32.totalorder %s151, 0
      %s154 = sadd.s32 %s153, 1
      %s155 = scalar_select %p152, %s153, %s154
      %p158 = pneg %p152
      %p159 = scmp.eq.s32.totalorder %s12, 1
      %p160 = por %p158, %p159
      %p161 = scmp.ne.s32.totalorder %s153, %s156
      %p162 = scmp.eq.s32.totalorder %s12, 0
      %p163 = por %p161, %p162
      %p164 = scmp.ne.s32.totalorder %s153, %s156
      %p165 = scmp.eq.s32.totalorder %s17, 1
      %p166 = por %p164, %p165
      %p167 = scmp.ne.s32.totalorder %s156, %s157
      %p168 = scmp.eq.s32.totalorder %s17, 0
      %p169 = por %p167, %p168
      %p170 = scmp.ne.s32.totalorder %s156, %s157
      %p171 = scmp.eq.s32.totalorder %s18, 1
      %p172 = por %p170, %p171
      %p174 = scmp.ne.s32.totalorder %s157, %s173
      %p175 = scmp.eq.s32.totalorder %s18, 0
      %p176 = por %p174, %p175
      %p177 = scmp.le.s32.totalorder 1, %s12
      %p178 = scmp.lt.s32.totalorder %s12, 3
      %p179 = pnand %p177, %p178
      %p180 = pneg %p179
      // Predicated region
      $region9: #{tpu_custom_call.1} parent=5 // pred_check
        _
      $region10: #{tpu_custom_call.1} parent=5 // pred_check_branch
        %182 = sbr.rel (%p179) target = $region12
      $region11: #{tpu_custom_call.1} parent=5 // pred_region
        %s183 = ssub.s32 %s12, 1
        // Predicated region
        $region13: #{tpu_custom_call.1} parent=11 // pred_check
          %p184 = pneg %p59
        $region14: #{tpu_custom_call.1} parent=11 // pred_check_branch
          %186 = sbr.rel (%p184) target = $region16
        $region15: #{tpu_custom_call.1} parent=11 // pred_region
          _
        $region16: #{tpu_custom_call.1} parent=11 // pred_fallthru
          _
        // Predicated region
        $region17: #{tpu_custom_call.1} parent=11 // pred_check
          %p187 = pneg %p80
        $region18: #{tpu_custom_call.1} parent=11 // pred_check_branch
          %189 = sbr.rel (%p187) target = $region20
        $region19: #{tpu_custom_call.1} parent=11 // pred_region
          _
        $region20: #{tpu_custom_call.1} parent=11 // pred_fallthru
          _
        // Predicated region
        $region21: #{tpu_custom_call.1} parent=11 // pred_check
          %p190 = pneg %p101
        $region22: #{tpu_custom_call.1} parent=11 // pred_check_branch
          %192 = sbr.rel (%p190) target = $region24
        $region23: #{tpu_custom_call.1} parent=11 // pred_region
          _
        $region24: #{tpu_custom_call.1} parent=11 // pred_fallthru
          _
        // Predicated region
        $region25: #{tpu_custom_call.1} parent=11 // pred_check
          %p193 = pneg %p122
        $region26: #{tpu_custom_call.1} parent=11 // pred_check_branch
          %195 = sbr.rel (%p193) target = $region28
        $region27: #{tpu_custom_call.1} parent=11 // pred_region
          _
        $region28: #{tpu_custom_call.1} parent=11 // pred_fallthru
          _
        // Predicated region
        $region29: #{tpu_custom_call.1} parent=11 // pred_check
          %p196 = pneg %p143
        $region30: #{tpu_custom_call.1} parent=11 // pred_check_branch
          %198 = sbr.rel (%p196) target = $region32
        $region31: #{tpu_custom_call.1} parent=11 // pred_region
          _
        $region32: #{tpu_custom_call.1} parent=11 // pred_fallthru
          _
      $region12: #{tpu_custom_call.1} parent=5 // pred_fallthru
        _
      %p199 = scmp.lt.s32.totalorder %s12, 2
      // Predicated region
      $region33: #{tpu_custom_call.1} parent=5 // pred_check
        %p200 = pneg %p199
      $region34: #{tpu_custom_call.1} parent=5 // pred_check_branch
        %202 = sbr.rel (%p200) target = $region36
      $region35: #{tpu_custom_call.1} parent=5 // pred_region
        // Predicated region
        $region37: #{tpu_custom_call.1} parent=35 // pred_check
          %p203 = pneg %p32
        $region38: #{tpu_custom_call.1} parent=35 // pred_check_branch
          %205 = sbr.rel (%p203) target = $region40
        $region39: #{tpu_custom_call.1} parent=35 // pred_region
          %s206 = smul.u32 64, %s12
          %s207 = ssub.s32 125, %s206
          %p208 = scmp.lt.s32.totalorder %s207, 64
          %s209 = scalar_select %p208, %s207, 64
          %s210 = smul.u32 128, %s209
          %p211 = scmp.lt.s32.totalorder %s206, 124
          %s212 = scalar_select %p211, %s206, 124
          %s213 = smul.addr %s212, 8
          %s214 = scalar_lea.vmem %s0, %s213
          %s215 = smul.u32 64, %s12
          %s216 = ssub.s32 125, %s215
          %p217 = scmp.lt.s32.totalorder %s216, 64
          %s218 = scalar_select %p217, %s216, 64
          %s219 = smul.u32 128, %s218
        $region40: #{tpu_custom_call.1} parent=35 // pred_fallthru
          _
      $region36: #{tpu_custom_call.1} parent=5 // pred_fallthru
        _
      %p220 = scmp.le.s32.totalorder 1, %s12
      %p221 = scmp.lt.s32.totalorder %s12, 3
      %p222 = pnand %p220, %p221
      %p223 = pneg %p222
      // Predicated region
      $region41: #{tpu_custom_call.1} parent=5 // pred_check
        _
      $region42: #{tpu_custom_call.1} parent=5 // pred_check_branch
        %225 = sbr.rel (%p222) target = $region44
      $region43: #{tpu_custom_call.1} parent=5 // pred_region
        %s226 = ssub.s32 %s12, 1
        %s227 = smul.u32 64, %s17
        %s228 = ssub.s32 125, %s227
        %p229 = scmp.lt.s32.totalorder %s228, 64
        %s230 = scalar_select %p229, %s228, 64
        %s231 = smul.u32 128, %s230
        %p232 = scmp.lt.s32.totalorder %s227, 124
        %s233 = scalar_select %p232, %s227, 124
        %s234 = smul.addr %s233, 8
        %s235 = scalar_lea.vmem %s0, %s234
        %p236 = pneg %p38
        %p237 = pneg %p35
        %p238 = pneg %p59
        %p239 = pneg %p56
        %p240 = pneg %p80
        %p241 = pneg %p77
        %p242 = pneg %p101
        %p243 = pneg %p98
        %p244 = pneg %p122
        %p245 = pneg %p119
        %p246 = pneg %p143
        %p247 = pneg %p140
        %p248 = pneg %p169
        %p249 = pneg %p166
        %s250 = sand.u32 %s156, 1
        %s251 = sand.u32 %s156, 1
        %s252 = smul.addr %s251, 512
        %s253 = scalar_lea.vmem [#allocation2], %s252
        %s254 = smul.u32 64, %s17
        %s255 = ssub.s32 125, %s254
        %p256 = scmp.lt.s32.totalorder %s255, 64
        %s257 = scalar_select %p256, %s255, 64
        %s258 = smul.u32 128, %s257
        %p259 = scmp.lt.s32.totalorder %s254, 124
        %s260 = scalar_select %p259, %s254, 124
        %s261 = smul.addr %s260, 8
        %s262 = scalar_lea.vmem %s0, %s261
        %s263 = smul.u32 64, %s17
        %s264 = ssub.s32 125, %s263
        %p265 = scmp.lt.s32.totalorder %s264, 64
        %s266 = scalar_select %p265, %s264, 64
        %s267 = smul.u32 128, %s266
        %s268 = smul.u32 64, %s17
        %s269 = ssub.s32 125, %s268
        %p270 = scmp.lt.s32.totalorder %s269, 64
        %s271 = scalar_select %p270, %s269, 64
        %s272 = smul.u32 128, %s271
        %v274 = vld [vmem:[%s262] sm:$0xff]
        %v275 = vld [vmem:[%s262 + $0x8] sm:$0xff]
        %v276 = vld [vmem:[%s262 + $0x10] sm:$0xff]
        %v277 = vld [vmem:[%s262 + $0x18] sm:$0xff]
        %v278 = vld [vmem:[%s262 + $0x20] sm:$0xff]
        %v279 = vld [vmem:[%s262 + $0x28] sm:$0xff]
        %v280 = vld [vmem:[%s262 + $0x30] sm:$0xff]
        %v281 = vld [vmem:[%s262 + $0x38] sm:$0xff]
        %v282 = vld [vmem:[%s262 + $0x40] sm:$0xff]
        %v283 = vld [vmem:[%s262 + $0x48] sm:$0xff]
        %v284 = vld [vmem:[%s262 + $0x50] sm:$0xff]
        %v285 = vld [vmem:[%s262 + $0x58] sm:$0xff]
        %v286 = vld [vmem:[%s262 + $0x60] sm:$0xff]
        %v287 = vld [vmem:[%s262 + $0x68] sm:$0xff]
        %v288 = vld [vmem:[%s262 + $0x70] sm:$0xff]
        %v289 = vld [vmem:[%s262 + $0x78] sm:$0xff]
        %v290 = vld [vmem:[%s262 + $0x80] sm:$0xff]
        %v291 = vld [vmem:[%s262 + $0x88] sm:$0xff]
        %v292 = vld [vmem:[%s262 + $0x90] sm:$0xff]
        %v293 = vld [vmem:[%s262 + $0x98] sm:$0xff]
        %v294 = vld [vmem:[%s262 + $0xa0] sm:$0xff]
        %v295 = vld [vmem:[%s262 + $0xa8] sm:$0xff]
        %v296 = vld [vmem:[%s262 + $0xb0] sm:$0xff]
        %v297 = vld [vmem:[%s262 + $0xb8] sm:$0xff]
        %v298 = vld [vmem:[%s262 + $0xc0] sm:$0xff]
        %v299 = vld [vmem:[%s262 + $0xc8] sm:$0xff]
        %v300 = vld [vmem:[%s262 + $0xd0] sm:$0xff]
        %v301 = vld [vmem:[%s262 + $0xd8] sm:$0xff]
        %v302 = vld [vmem:[%s262 + $0xe0] sm:$0xff]
        %v303 = vld [vmem:[%s262 + $0xe8] sm:$0xff]
        %v304 = vld [vmem:[%s262 + $0xf0] sm:$0xff]
        %v305 = vld [vmem:[%s262 + $0xf8] sm:$0xff]
        %v306 = vld [vmem:[%s262 + $0x100] sm:$0xff]
        %v307 = vld [vmem:[%s262 + $0x108] sm:$0xff]
        %v308 = vld [vmem:[%s262 + $0x110] sm:$0xff]
        %v309 = vld [vmem:[%s262 + $0x118] sm:$0xff]
        %v310 = vld [vmem:[%s262 + $0x120] sm:$0xff]
        %v311 = vld [vmem:[%s262 + $0x128] sm:$0xff]
        %v312 = vld [vmem:[%s262 + $0x130] sm:$0xff]
        %v313 = vld [vmem:[%s262 + $0x138] sm:$0xff]
        %v314 = vld [vmem:[%s262 + $0x140] sm:$0xff]
        %v315 = vld [vmem:[%s262 + $0x148] sm:$0xff]
        %v316 = vld [vmem:[%s262 + $0x150] sm:$0xff]
        %v317 = vld [vmem:[%s262 + $0x158] sm:$0xff]
        %v318 = vld [vmem:[%s262 + $0x160] sm:$0xff]
        %v319 = vld [vmem:[%s262 + $0x168] sm:$0xff]
        %v320 = vld [vmem:[%s262 + $0x170] sm:$0xff]
        %v321 = vld [vmem:[%s262 + $0x178] sm:$0xff]
        %v322 = vld [vmem:[%s262 + $0x180] sm:$0xff]
        %v323 = vld [vmem:[%s262 + $0x188] sm:$0xff]
        %v324 = vld [vmem:[%s262 + $0x190] sm:$0xff]
        %v325 = vld [vmem:[%s262 + $0x198] sm:$0xff]
        %v326 = vld [vmem:[%s262 + $0x1a0] sm:$0xff]
        %v327 = vld [vmem:[%s262 + $0x1a8] sm:$0xff]
        %v328 = vld [vmem:[%s262 + $0x1b0] sm:$0xff]
        %v329 = vld [vmem:[%s262 + $0x1b8] sm:$0xff]
        %v330 = vld [vmem:[%s262 + $0x1c0] sm:$0xff]
        %v331 = vld [vmem:[%s262 + $0x1c8] sm:$0xff]
        %v332 = vld [vmem:[%s262 + $0x1d0] sm:$0xff]
        %v333 = vld [vmem:[%s262 + $0x1d8] sm:$0xff]
        %v334 = vld [vmem:[%s262 + $0x1e0] sm:$0xff]
        %v335 = vld [vmem:[%s262 + $0x1e8] sm:$0xff]
        %v336 = vld [vmem:[%s262 + $0x1f0] sm:$0xff]
        %v337 = vld [vmem:[%s262 + $0x1f8] sm:$0xff]
        %v338 = vpack.c.bf16 %v275, %v274
        %v339 = vpack.c.bf16 %v277, %v276
        %v340 = vpack.c.bf16 %v279, %v278
        %v341 = vpack.c.bf16 %v281, %v280
        %v342 = vpack.c.bf16 %v283, %v282
        %v343 = vpack.c.bf16 %v285, %v284
        %v344 = vpack.c.bf16 %v287, %v286
        %v345 = vpack.c.bf16 %v289, %v288
        %v346 = vpack.c.bf16 %v291, %v290
        %v347 = vpack.c.bf16 %v293, %v292
        %v348 = vpack.c.bf16 %v295, %v294
        %v349 = vpack.c.bf16 %v297, %v296
        %v350 = vpack.c.bf16 %v299, %v298
        %v351 = vpack.c.bf16 %v301, %v300
        %v352 = vpack.c.bf16 %v303, %v302
        %v353 = vpack.c.bf16 %v305, %v304
        %v354 = vpack.c.bf16 %v307, %v306
        %v355 = vpack.c.bf16 %v309, %v308
        %v356 = vpack.c.bf16 %v311, %v310
        %v357 = vpack.c.bf16 %v313, %v312
        %v358 = vpack.c.bf16 %v315, %v314
        %v359 = vpack.c.bf16 %v317, %v316
        %v360 = vpack.c.bf16 %v319, %v318
        %v361 = vpack.c.bf16 %v321, %v320
        %v362 = vpack.c.bf16 %v323, %v322
        %v363 = vpack.c.bf16 %v325, %v324
        %v364 = vpack.c.bf16 %v327, %v326
        %v365 = vpack.c.bf16 %v329, %v328
        %v366 = vpack.c.bf16 %v331, %v330
        %v367 = vpack.c.bf16 %v333, %v332
        %v368 = vpack.c.bf16 %v335, %v334
        %v369 = vpack.c.bf16 %v337, %v336
        %v370 = vld [vmem:[%s1] sm:$0xf]
        %v371 = vld [vmem:[%s1 + $0x4] sm:$0xf]
        %v372 = vld [vmem:[%s1 + $0x8] sm:$0xf]
        %v373 = vld [vmem:[%s1 + $0xc] sm:$0xf]
        %v374 = vld [vmem:[%s1 + $0x10] sm:$0x1]
        %v375 = vld [vmem:[%s4] sm:$0x1]
        %v377 = vlaneseq
        %v378 = vshrl.u32 %v377, 7
        %v379 = vsub.s32 0, %v378
        %v380 = vrot.slane %v375, %v379
        %v387 = vunpack.c.l.b16 %v370
        %v388 = vunpack.c.l.b16 %v371
        %v389 = vunpack.c.l.b16 %v372
        %v390 = vunpack.c.l.b16 %v373
        %v391 = vunpack.c.l.b16 %v374
        %v392 = vpack.c.b16 %v388, %v387
        %v393 = vpack.c.b16 %v390, %v389
        %v394 = vpack.c.b16 %v391, %v391
        %vm397 = vcmask 277504
        %v399 = vsel %vm397, %v338, 0
        %v402 = vsel %vm397, %v339, 0
        %v405 = vsel %vm397, %v340, 0
        %v408 = vsel %vm397, %v341, 0
        %v411 = vsel %vm397, %v342, 0
        %v414 = vsel %vm397, %v343, 0
        %v417 = vsel %vm397, %v344, 0
        %v420 = vsel %vm397, %v345, 0
        %v423 = vsel %vm397, %v346, 0
        %v426 = vsel %vm397, %v347, 0
        %v429 = vsel %vm397, %v348, 0
        %v432 = vsel %vm397, %v349, 0
        %v435 = vsel %vm397, %v350, 0
        %v438 = vsel %vm397, %v351, 0
        %v441 = vsel %vm397, %v352, 0
        %v444 = vsel %vm397, %v353, 0
        %v447 = vsel %vm397, %v354, 0
        %v450 = vsel %vm397, %v355, 0
        %v453 = vsel %vm397, %v356, 0
        %v456 = vsel %vm397, %v357, 0
        %v459 = vsel %vm397, %v358, 0
        %v462 = vsel %vm397, %v359, 0
        %v465 = vsel %vm397, %v360, 0
        %v468 = vsel %vm397, %v361, 0
        %v471 = vsel %vm397, %v362, 0
        %v474 = vsel %vm397, %v363, 0
        %v477 = vsel %vm397, %v364, 0
        %v480 = vsel %vm397, %v365, 0
        %v483 = vsel %vm397, %v366, 0
        %v486 = vsel %vm397, %v367, 0
        %v489 = vsel %vm397, %v368, 0
        %v492 = vsel %vm397, %v369, 0
        %vm494 = vcmask 1040384
        %v496 = vsel %vm494, %v394, 0
        %498 = vmatprep.subr.bf16.mxu0 0
        %499 = vmatpush1.bf16.msra.mxu0 %v392
        %500 = vmatprep.subr.bf16.mxu0 0
        %501 = vmatpush1.bf16.msra.mxu0 %v393
        %502 = vmatprep.subr.bf16.mxu0 0
        %503 = vmatpush1.bf16.msra.mxu0 %v496
        %504 = vmatprep.subr.bf16.mxu0 0
        %505 = vmatpush1.bf16.msra.mxu0 0
        %506 = vmatprep.subr.bf16.mxu0 0
        %507 = vmatpush1.bf16.msra.mxu0 0
        %508 = vmatprep.subr.bf16.mxu0 0
        %509 = vmatpush1.bf16.msra.mxu0 0
        %510 = vmatprep.subr.bf16.mxu0 0
        %511 = vmatpush1.bf16.msra.mxu0 0
        %512 = vmatprep.subr.bf16.mxu0 0
        %513 = vmatpush1.bf16.msra.mxu0 0
        %514 = vmatprep.subr.bf16.mxu0 0
        %515 = vmatpush1.bf16.msra.mxu0 0
        %516 = vmatprep.subr.bf16.mxu0 0
        %517 = vmatpush1.bf16.msra.mxu0 0
        %518 = vmatprep.subr.bf16.mxu0 0
        %519 = vmatpush1.bf16.msra.mxu0 0
        %520 = vmatprep.subr.bf16.mxu0 0
        %521 = vmatpush1.bf16.msra.mxu0 0
        %522 = vmatprep.subr.bf16.mxu0 0
        %523 = vmatpush1.bf16.msra.mxu0 0
        %524 = vmatprep.subr.bf16.mxu0 0
        %525 = vmatpush1.bf16.msra.mxu0 0
        %526 = vmatprep.subr.bf16.mxu0 0
        %527 = vmatpush1.bf16.msra.mxu0 0
        %528 = vmatprep.subr.bf16.mxu0 0
        %529 = vmatpush1.bf16.msra.mxu0 0
        %530 = vmatprep.mubr.bf16.mxu0 0
        %531 = vmatmul.mubr.bf16.gmra.mrb[0].mxu0 %v399
        %v532 = vpop.f32.mrb[0].mxu0
        %v533 = vadd.f32 %v380, %v532
        %v534 = vpop.f32.mrb[0].mxu0
        %v535 = vpop.f32.mrb[0].mxu0
        %v536 = vadd.f32 %v380, %v535
        %v537 = vpop.f32.mrb[0].mxu0
        %538 = vmatprep.mubr.bf16.mxu0 0
        %539 = vmatmul.mubr.bf16.gmra.mrb[0].mxu0 %v402
        %v540 = vpop.f32.mrb[0].mxu0
        %v541 = vadd.f32 %v380, %v540
        %v542 = vpop.f32.mrb[0].mxu0
        %v543 = vpop.f32.mrb[0].mxu0
        %v544 = vadd.f32 %v380, %v543
        %v545 = vpop.f32.mrb[0].mxu0
        %546 = vmatprep.mubr.bf16.mxu0 0
        %547 = vmatmul.mubr.bf16.gmra.mrb[0].mxu0 %v405
        %v548 = vpop.f32.mrb[0].mxu0
        %v549 = vadd.f32 %v380, %v548
        %v550 = vpop.f32.mrb[0].mxu0
        %v551 = vpop.f32.mrb[0].mxu0
        %v552 = vadd.f32 %v380, %v551
        %v553 = vpop.f32.mrb[0].mxu0
        %554 = vmatprep.mubr.bf16.mxu0 0
        %555 = vmatmul.mubr.bf16.gmra.mrb[0].mxu0 %v408
        %v556 = vpop.f32.mrb[0].mxu0
        %v557 = vadd.f32 %v380, %v556
        %v558 = vpop.f32.mrb[0].mxu0
        %v559 = vpop.f32.mrb[0].mxu0
        %v560 = vadd.f32 %v380, %v559
        %v561 = vpop.f32.mrb[0].mxu0
        %562 = vmatprep.mubr.bf16.mxu0 0
        %563 = vmatmul.mubr.bf16.gmra.mrb[0].mxu0 %v411
        %v564 = vpop.f32.mrb[0].mxu0
        %v565 = vadd.f32 %v380, %v564
        %v566 = vpop.f32.mrb[0].mxu0
        %v567 = vpop.f32.mrb[0].mxu0
        %v568 = vadd.f32 %v380, %v567
        %v569 = vpop.f32.mrb[0].mxu0
        %570 = vmatprep.mubr.bf16.mxu0 0
        %571 = vmatmul.mubr.bf16.gmra.mrb[0].mxu0 %v414
        %v572 = vpop.f32.mrb[0].mxu0
        %v573 = vadd.f32 %v380, %v572
        %v574 = vpop.f32.mrb[0].mxu0
        %v575 = vpop.f32.mrb[0].mxu0
        %v576 = vadd.f32 %v380, %v575
        %v577 = vpop.f32.mrb[0].mxu0
        %578 = vmatprep.mubr.bf16.mxu0 0
        %579 = vmatmul.mubr.bf16.gmra.mrb[0].mxu0 %v417
        %v580 = vpop.f32.mrb[0].mxu0
        %v581 = vadd.f32 %v380, %v580
        %v582 = vpop.f32.mrb[0].mxu0
        %v583 = vpop.f32.mrb[0].mxu0
        %v584 = vadd.f32 %v380, %v583
        %v585 = vpop.f32.mrb[0].mxu0
        %586 = vmatprep.mubr.bf16.mxu0 0
        %587 = vmatmul.mubr.bf16.gmra.mrb[0].mxu0 %v420
        %v588 = vpop.f32.mrb[0].mxu0
        %v589 = vadd.f32 %v380, %v588
        %v590 = vpop.f32.mrb[0].mxu0
        %v591 = vpop.f32.mrb[0].mxu0
        %v592 = vadd.f32 %v380, %v591
        %v593 = vpop.f32.mrb[0].mxu0
        %594 = vmatprep.mubr.bf16.mxu0 0
        %595 = vmatmul.mubr.bf16.gmra.mrb[0].mxu0 %v423
        %v596 = vpop.f32.mrb[0].mxu0
        %v597 = vadd.f32 %v380, %v596
        %v598 = vpop.f32.mrb[0].mxu0
        %v599 = vpop.f32.mrb[0].mxu0
        %v600 = vadd.f32 %v380, %v599
        %v601 = vpop.f32.mrb[0].mxu0
        %602 = vmatprep.mubr.bf16.mxu0 0
        %603 = vmatmul.mubr.bf16.gmra.mrb[0].mxu0 %v426
        %v604 = vpop.f32.mrb[0].mxu0
        %v605 = vadd.f32 %v380, %v604
        %v606 = vpop.f32.mrb[0].mxu0
        %v607 = vpop.f32.mrb[0].mxu0
        %v608 = vadd.f32 %v380, %v607
        %v609 = vpop.f32.mrb[0].mxu0
        %610 = vmatprep.mubr.bf16.mxu0 0
        %611 = vmatmul.mubr.bf16.gmra.mrb[0].mxu0 %v429
        %v612 = vpop.f32.mrb[0].mxu0
        %v613 = vadd.f32 %v380, %v612
        %v614 = vpop.f32.mrb[0].mxu0
        %v615 = vpop.f32.mrb[0].mxu0
        %v616 = vadd.f32 %v380, %v615
        %v617 = vpop.f32.mrb[0].mxu0
        %618 = vmatprep.mubr.bf16.mxu0 0
        %619 = vmatmul.mubr.bf16.gmra.mrb[0].mxu0 %v432
        %v620 = vpop.f32.mrb[0].mxu0
        %v621 = vadd.f32 %v380, %v620
        %v622 = vpop.f32.mrb[0].mxu0
        %v623 = vpop.f32.mrb[0].mxu0
        %v624 = vadd.f32 %v380, %v623
        %v625 = vpop.f32.mrb[0].mxu0
        %626 = vmatprep.mubr.bf16.mxu0 0
        %627 = vmatmul.mubr.bf16.gmra.mrb[0].mxu0 %v435
        %v628 = vpop.f32.mrb[0].mxu0
        %v629 = vadd.f32 %v380, %v628
        %v630 = vpop.f32.mrb[0].mxu0
        %v631 = vpop.f32.mrb[0].mxu0
        %v632 = vadd.f32 %v380, %v631
        %v633 = vpop.f32.mrb[0].mxu0
        %634 = vmatprep.mubr.bf16.mxu0 0
        %635 = vmatmul.mubr.bf16.gmra.mrb[0].mxu0 %v438
        %v636 = vpop.f32.mrb[0].mxu0
        %v637 = vadd.f32 %v380, %v636
        %v638 = vpop.f32.mrb[0].mxu0
        %v639 = vpop.f32.mrb[0].mxu0
        %v640 = vadd.f32 %v380, %v639
        %v641 = vpop.f32.mrb[0].mxu0
        %642 = vmatprep.mubr.bf16.mxu0 0
        %643 = vmatmul.mubr.bf16.gmra.mrb[0].mxu0 %v441
        %v644 = vpop.f32.mrb[0].mxu0
        %v645 = vadd.f32 %v380, %v644
        %v646 = vpop.f32.mrb[0].mxu0
        %v647 = vpop.f32.mrb[0].mxu0
        %v648 = vadd.f32 %v380, %v647
        %v649 = vpop.f32.mrb[0].mxu0
        %650 = vmatprep.mubr.bf16.mxu0 0
        %651 = vmatmul.mubr.bf16.gmra.mrb[0].mxu0 %v444
        %v652 = vpop.f32.mrb[0].mxu0
        %v653 = vadd.f32 %v380, %v652
        %v654 = vpop.f32.mrb[0].mxu0
        %v655 = vpop.f32.mrb[0].mxu0
        %v656 = vadd.f32 %v380, %v655
        %v657 = vpop.f32.mrb[0].mxu0
        %658 = vmatprep.mubr.bf16.mxu0 0
        %659 = vmatmul.mubr.bf16.gmra.mrb[0].mxu0 %v447
        %v660 = vpop.f32.mrb[0].mxu0
        %v661 = vadd.f32 %v380, %v660
        %v662 = vpop.f32.mrb[0].mxu0
        %v663 = vpop.f32.mrb[0].mxu0
        %v664 = vadd.f32 %v380, %v663
        %v665 = vpop.f32.mrb[0].mxu0
        %666 = vmatprep.mubr.bf16.mxu0 0
        %667 = vmatmul.mubr.bf16.gmra.mrb[0].mxu0 %v450
        %v668 = vpop.f32.mrb[0].mxu0
        %v669 = vadd.f32 %v380, %v668
        %v670 = vpop.f32.mrb[0].mxu0
        %v671 = vpop.f32.mrb[0].mxu0
        %v672 = vadd.f32 %v380, %v671
        %v673 = vpop.f32.mrb[0].mxu0
        %674 = vmatprep.mubr.bf16.mxu0 0
        %675 = vmatmul.mubr.bf16.gmra.mrb[0].mxu0 %v453
        %v676 = vpop.f32.mrb[0].mxu0
        %v677 = vadd.f32 %v380, %v676
        %v678 = vpop.f32.mrb[0].mxu0
        %v679 = vpop.f32.mrb[0].mxu0
        %v680 = vadd.f32 %v380, %v679
        %v681 = vpop.f32.mrb[0].mxu0
        %682 = vmatprep.mubr.bf16.mxu0 0
        %683 = vmatmul.mubr.bf16.gmra.mrb[0].mxu0 %v456
        %v684 = vpop.f32.mrb[0].mxu0
        %v685 = vadd.f32 %v380, %v684
        %v686 = vpop.f32.mrb[0].mxu0
        %v687 = vpop.f32.mrb[0].mxu0
        %v688 = vadd.f32 %v380, %v687
        %v689 = vpop.f32.mrb[0].mxu0
        %690 = vmatprep.mubr.bf16.mxu0 0
        %691 = vmatmul.mubr.bf16.gmra.mrb[0].mxu0 %v459
        %v692 = vpop.f32.mrb[0].mxu0
        %v693 = vadd.f32 %v380, %v692
        %v694 = vpop.f32.mrb[0].mxu0
        %v695 = vpop.f32.mrb[0].mxu0
        %v696 = vadd.f32 %v380, %v695
        %v697 = vpop.f32.mrb[0].mxu0
        %698 = vmatprep.mubr.bf16.mxu0 0
        %699 = vmatmul.mubr.bf16.gmra.mrb[0].mxu0 %v462
        %v700 = vpop.f32.mrb[0].mxu0
        %v701 = vadd.f32 %v380, %v700
        %v702 = vpop.f32.mrb[0].mxu0
        %v703 = vpop.f32.mrb[0].mxu0
        %v704 = vadd.f32 %v380, %v703
        %v705 = vpop.f32.mrb[0].mxu0
        %706 = vmatprep.mubr.bf16.mxu0 0
        %707 = vmatmul.mubr.bf16.gmra.mrb[0].mxu0 %v465
        %v708 = vpop.f32.mrb[0].mxu0
        %v709 = vadd.f32 %v380, %v708
        %v710 = vpop.f32.mrb[0].mxu0
        %v711 = vpop.f32.mrb[0].mxu0
        %v712 = vadd.f32 %v380, %v711
        %v713 = vpop.f32.mrb[0].mxu0
        %714 = vmatprep.mubr.bf16.mxu0 0
        %715 = vmatmul.mubr.bf16.gmra.mrb[0].mxu0 %v468
        %v716 = vpop.f32.mrb[0].mxu0
        %v717 = vadd.f32 %v380, %v716
        %v718 = vpop.f32.mrb[0].mxu0
        %v719 = vpop.f32.mrb[0].mxu0
        %v720 = vadd.f32 %v380, %v719
        %v721 = vpop.f32.mrb[0].mxu0
        %722 = vmatprep.mubr.bf16.mxu0 0
        %723 = vmatmul.mubr.bf16.gmra.mrb[0].mxu0 %v471
        %v724 = vpop.f32.mrb[0].mxu0
        %v725 = vadd.f32 %v380, %v724
        %v726 = vpop.f32.mrb[0].mxu0
        %v727 = vpop.f32.mrb[0].mxu0
        %v728 = vadd.f32 %v380, %v727
        %v729 = vpop.f32.mrb[0].mxu0
        %730 = vmatprep.mubr.bf16.mxu0 0
        %731 = vmatmul.mubr.bf16.gmra.mrb[0].mxu0 %v474
        %v732 = vpop.f32.mrb[0].mxu0
        %v733 = vadd.f32 %v380, %v732
        %v734 = vpop.f32.mrb[0].mxu0
        %v735 = vpop.f32.mrb[0].mxu0
        %v736 = vadd.f32 %v380, %v735
        %v737 = vpop.f32.mrb[0].mxu0
        %738 = vmatprep.mubr.bf16.mxu0 0
        %739 = vmatmul.mubr.bf16.gmra.mrb[0].mxu0 %v477
        %v740 = vpop.f32.mrb[0].mxu0
        %v741 = vadd.f32 %v380, %v740
        %v742 = vpop.f32.mrb[0].mxu0
        %v743 = vpop.f32.mrb[0].mxu0
        %v744 = vadd.f32 %v380, %v743
        %v745 = vpop.f32.mrb[0].mxu0
        %746 = vmatprep.mubr.bf16.mxu0 0
        %747 = vmatmul.mubr.bf16.gmra.mrb[0].mxu0 %v480
        %v748 = vpop.f32.mrb[0].mxu0
        %v749 = vadd.f32 %v380, %v748
        %v750 = vpop.f32.mrb[0].mxu0
        %v751 = vpop.f32.mrb[0].mxu0
        %v752 = vadd.f32 %v380, %v751
        %v753 = vpop.f32.mrb[0].mxu0
        %754 = vmatprep.mubr.bf16.mxu0 0
        %755 = vmatmul.mubr.bf16.gmra.mrb[0].mxu0 %v483
        %v756 = vpop.f32.mrb[0].mxu0
        %v757 = vadd.f32 %v380, %v756
        %v758 = vpop.f32.mrb[0].mxu0
        %v759 = vpop.f32.mrb[0].mxu0
        %v760 = vadd.f32 %v380, %v759
        %v761 = vpop.f32.mrb[0].mxu0
        %762 = vmatprep.mubr.bf16.mxu0 0
        %763 = vmatmul.mubr.bf16.gmra.mrb[0].mxu0 %v486
        %v764 = vpop.f32.mrb[0].mxu0
        %v765 = vadd.f32 %v380, %v764
        %v766 = vpop.f32.mrb[0].mxu0
        %v767 = vpop.f32.mrb[0].mxu0
        %v768 = vadd.f32 %v380, %v767
        %v769 = vpop.f32.mrb[0].mxu0
        %770 = vmatprep.mubr.bf16.mxu0 0
        %771 = vmatmul.mubr.bf16.gmra.mrb[0].mxu0 %v489
        %v772 = vpop.f32.mrb[0].mxu0
        %v773 = vadd.f32 %v380, %v772
        %v774 = vpop.f32.mrb[0].mxu0
        %v775 = vpop.f32.mrb[0].mxu0
        %v776 = vadd.f32 %v380, %v775
        %v777 = vpop.f32.mrb[0].mxu0
        %778 = vmatprep.mubr.bf16.mxu0 0
        %779 = vmatmul.mubr.bf16.gmra.mrb[0].mxu0 %v492
        %v780 = vpop.f32.mrb[0].mxu0
        %v781 = vadd.f32 %v380, %v780
        %v782 = vpop.f32.mrb[0].mxu0
        %v783 = vpop.f32.mrb[0].mxu0
        %v784 = vadd.f32 %v380, %v783
        %v785 = vpop.f32.mrb[0].mxu0
        %786 = vdwg.mxu0
        %v787 = vmax.f32 %v533, 0.0
        %v788 = vmax.f32 %v536, 0.0
        %v789 = vmax.f32 %v541, 0.0
        %v790 = vmax.f32 %v544, 0.0
        %v791 = vmax.f32 %v549, 0.0
        %v792 = vmax.f32 %v552, 0.0
        %v793 = vmax.f32 %v557, 0.0
        %v794 = vmax.f32 %v560, 0.0
        %v795 = vmax.f32 %v565, 0.0
        %v796 = vmax.f32 %v568, 0.0
        %v797 = vmax.f32 %v573, 0.0
        %v798 = vmax.f32 %v576, 0.0
        %v799 = vmax.f32 %v581, 0.0
        %v800 = vmax.f32 %v584, 0.0
        %v801 = vmax.f32 %v589, 0.0
        %v802 = vmax.f32 %v592, 0.0
        %v803 = vmax.f32 %v597, 0.0
        %v804 = vmax.f32 %v600, 0.0
        %v805 = vmax.f32 %v605, 0.0
        %v806 = vmax.f32 %v608, 0.0
        %v807 = vmax.f32 %v613, 0.0
        %v808 = vmax.f32 %v616, 0.0
        %v809 = vmax.f32 %v621, 0.0
        %v810 = vmax.f32 %v624, 0.0
        %v811 = vmax.f32 %v629, 0.0
        %v812 = vmax.f32 %v632, 0.0
        %v813 = vmax.f32 %v637, 0.0
        %v814 = vmax.f32 %v640, 0.0
        %v815 = vmax.f32 %v645, 0.0
        %v816 = vmax.f32 %v648, 0.0
        %v817 = vmax.f32 %v653, 0.0
        %v818 = vmax.f32 %v656, 0.0
        %v819 = vmax.f32 %v661, 0.0
        %v820 = vmax.f32 %v664, 0.0
        %v821 = vmax.f32 %v669, 0.0
        %v822 = vmax.f32 %v672, 0.0
        %v823 = vmax.f32 %v677, 0.0
        %v824 = vmax.f32 %v680, 0.0
        %v825 = vmax.f32 %v685, 0.0
        %v826 = vmax.f32 %v688, 0.0
        %v827 = vmax.f32 %v693, 0.0
        %v828 = vmax.f32 %v696, 0.0
        %v829 = vmax.f32 %v701, 0.0
        %v830 = vmax.f32 %v704, 0.0
        %v831 = vmax.f32 %v709, 0.0
        %v832 = vmax.f32 %v712, 0.0
        %v833 = vmax.f32 %v717, 0.0
        %v834 = vmax.f32 %v720, 0.0
        %v835 = vmax.f32 %v725, 0.0
        %v836 = vmax.f32 %v728, 0.0
        %v837 = vmax.f32 %v733, 0.0
        %v838 = vmax.f32 %v736, 0.0
        %v839 = vmax.f32 %v741, 0.0
        %v840 = vmax.f32 %v744, 0.0
        %v841 = vmax.f32 %v749, 0.0
        %v842 = vmax.f32 %v752, 0.0
        %v843 = vmax.f32 %v757, 0.0
        %v844 = vmax.f32 %v760, 0.0
        %v845 = vmax.f32 %v765, 0.0
        %v846 = vmax.f32 %v768, 0.0
        %v847 = vmax.f32 %v773, 0.0
        %v848 = vmax.f32 %v776, 0.0
        %v849 = vmax.f32 %v781, 0.0
        %v850 = vmax.f32 %v784, 0.0
        %v851 = vpack.c.bf16 %v788, %v787
        %v852 = vpack.c.bf16 %v790, %v789
        %v853 = vpack.c.bf16 %v792, %v791
        %v854 = vpack.c.bf16 %v794, %v793
        %v855 = vpack.c.bf16 %v796, %v795
        %v856 = vpack.c.bf16 %v798, %v797
        %v857 = vpack.c.bf16 %v800, %v799
        %v858 = vpack.c.bf16 %v802, %v801
        %v859 = vpack.c.bf16 %v804, %v803
        %v860 = vpack.c.bf16 %v806, %v805
        %v861 = vpack.c.bf16 %v808, %v807
        %v862 = vpack.c.bf16 %v810, %v809
        %v863 = vpack.c.bf16 %v812, %v811
        %v864 = vpack.c.bf16 %v814, %v813
        %v865 = vpack.c.bf16 %v816, %v815
        %v866 = vpack.c.bf16 %v818, %v817
        %v867 = vpack.c.bf16 %v820, %v819
        %v868 = vpack.c.bf16 %v822, %v821
        %v869 = vpack.c.bf16 %v824, %v823
        %v870 = vpack.c.bf16 %v826, %v825
        %v871 = vpack.c.bf16 %v828, %v827
        %v872 = vpack.c.bf16 %v830, %v829
        %v873 = vpack.c.bf16 %v832, %v831
        %v874 = vpack.c.bf16 %v834, %v833
        %v875 = vpack.c.bf16 %v836, %v835
        %v876 = vpack.c.bf16 %v838, %v837
        %v877 = vpack.c.bf16 %v840, %v839
        %v878 = vpack.c.bf16 %v842, %v841
        %v879 = vpack.c.bf16 %v844, %v843
        %v880 = vpack.c.bf16 %v846, %v845
        %v881 = vpack.c.bf16 %v848, %v847
        %v882 = vpack.c.bf16 %v850, %v849
        %v883 = vld [vmem:[%s2] sm:$0xf]
        %v884 = vld [vmem:[%s2 + $0x4] sm:$0xf]
        %v885 = vld [vmem:[%s2 + $0x8] sm:$0xf]
        %v886 = vld [vmem:[%s2 + $0xc] sm:$0xf]
        %v887 = vld [vmem:[%s2 + $0x10] sm:$0xf]
        %v888 = vld [vmem:[%s2 + $0x14] sm:$0xf]
        %v889 = vld [vmem:[%s2 + $0x18] sm:$0xf]
        %v890 = vld [vmem:[%s2 + $0x1c] sm:$0xf]
        %s891 = scalar_lea.vmem %s4, 1
        %v892 = vld [vmem:[%s891] sm:$0x1]
        %v894 = vlaneseq
        %v895 = vshrl.u32 %v894, 7
        %v896 = vsub.s32 0, %v895
        %v897 = vrot.slane %v892, %v896
        %v907 = vunpack.c.l.b16 %v883
        %v908 = vunpack.c.l.b16 %v884
        %v909 = vunpack.c.l.b16 %v885
        %v910 = vunpack.c.l.b16 %v886
        %v911 = vunpack.c.l.b16 %v887
        %v912 = vunpack.c.l.b16 %v888
        %v913 = vunpack.c.l.b16 %v889
        %v914 = vunpack.c.l.b16 %v890
        %v915 = vpack.c.b16 %v908, %v907
        %v916 = vpack.c.b16 %v910, %v909
        %v917 = vpack.c.b16 %v912, %v911
        %v918 = vpack.c.b16 %v914, %v913
        %vm923 = vcmask 523264
        %v925 = vsel %vm923, %v851, 0
        %v928 = vsel %vm923, %v852, 0
        %v931 = vsel %vm923, %v853, 0
        %v934 = vsel %vm923, %v854, 0
        %v937 = vsel %vm923, %v855, 0
        %v940 = vsel %vm923, %v856, 0
        %v943 = vsel %vm923, %v857, 0
        %v946 = vsel %vm923, %v858, 0
        %v949 = vsel %vm923, %v859, 0
        %v952 = vsel %vm923, %v860, 0
        %v955 = vsel %vm923, %v861, 0
        %v958 = vsel %vm923, %v862, 0
        %v961 = vsel %vm923, %v863, 0
        %v964 = vsel %vm923, %v864, 0
        %v967 = vsel %vm923, %v865, 0
        %v970 = vsel %vm923, %v866, 0
        %v973 = vsel %vm923, %v867, 0
        %v976 = vsel %vm923, %v868, 0
        %v979 = vsel %vm923, %v869, 0
        %v982 = vsel %vm923, %v870, 0
        %v985 = vsel %vm923, %v871, 0
        %v988 = vsel %vm923, %v872, 0
        %v991 = vsel %vm923, %v873, 0
        %v994 = vsel %vm923, %v874, 0
        %v997 = vsel %vm923, %v875, 0
        %v1000 = vsel %vm923, %v876, 0
        %v1003 = vsel %vm923, %v877, 0
        %v1006 = vsel %vm923, %v878, 0
        %v1009 = vsel %vm923, %v879, 0
        %v1012 = vsel %vm923, %v880, 0
        %v1015 = vsel %vm923, %v881, 0
        %v1018 = vsel %vm923, %v882, 0
        %1020 = vmatprep.subr.bf16.mxu0 0
        %1021 = vmatpush1.bf16.msra.mxu0 %v915
        %1022 = vmatprep.subr.bf16.mxu0 0
        %1023 = vmatpush1.bf16.msra.mxu0 %v916
        %1024 = vmatprep.subr.bf16.mxu0 0
        %1025 = vmatpush1.bf16.msra.mxu0 %v917
        %1026 = vmatprep.subr.bf16.mxu0 0
        %1027 = vmatpush1.bf16.msra.mxu0 %v918
        %1028 = vmatprep.subr.bf16.mxu0 0
        %1029 = vmatpush1.bf16.msra.mxu0 0
        %1030 = vmatprep.subr.bf16.mxu0 0
        %1031 = vmatpush1.bf16.msra.mxu0 0
        %1032 = vmatprep.subr.bf16.mxu0 0
        %1033 = vmatpush1.bf16.msra.mxu0 0
        %1034 = vmatprep.subr.bf16.mxu0 0
        %1035 = vmatpush1.bf16.msra.mxu0 0
        %1036 = vmatprep.subr.bf16.mxu0 0
        %1037 = vmatpush1.bf16.msra.mxu0 0
        %1038 = vmatprep.subr.bf16.mxu0 0
        %1039 = vmatpush1.bf16.msra.mxu0 0
        %1040 = vmatprep.subr.bf16.mxu0 0
        %1041 = vmatpush1.bf16.msra.mxu0 0
        %1042 = vmatprep.subr.bf16.mxu0 0
        %1043 = vmatpush1.bf16.msra.mxu0 0
        %1044 = vmatprep.subr.bf16.mxu0 0
        %1045 = vmatpush1.bf16.msra.mxu0 0
        %1046 = vmatprep.subr.bf16.mxu0 0
        %1047 = vmatpush1.bf16.msra.mxu0 0
        %1048 = vmatprep.subr.bf16.mxu0 0
        %1049 = vmatpush1.bf16.msra.mxu0 0
        %1050 = vmatprep.subr.bf16.mxu0 0
        %1051 = vmatpush1.bf16.msra.mxu0 0
        %1052 = vmatprep.mubr.bf16.mxu0 0
        %1053 = vmatmul.mubr.bf16.gmra.mrb[0].mxu0 %v925
        %v1054 = vpop.f32.mrb[0].mxu0
        %v1055 = vadd.f32 %v897, %v1054
        %v1056 = vpop.f32.mrb[0].mxu0
        %v1057 = vpop.f32.mrb[0].mxu0
        %v1058 = vadd.f32 %v897, %v1057
        %v1059 = vpop.f32.mrb[0].mxu0
        %1060 = vmatprep.mubr.bf16.mxu0 0
        %1061 = vmatmul.mubr.bf16.gmra.mrb[0].mxu0 %v928
        %v1062 = vpop.f32.mrb[0].mxu0
        %v1063 = vadd.f32 %v897, %v1062
        %v1064 = vpop.f32.mrb[0].mxu0
        %v1065 = vpop.f32.mrb[0].mxu0
        %v1066 = vadd.f32 %v897, %v1065
        %v1067 = vpop.f32.mrb[0].mxu0
        %1068 = vmatprep.mubr.bf16.mxu0 0
        %1069 = vmatmul.mubr.bf16.gmra.mrb[0].mxu0 %v931
        %v1070 = vpop.f32.mrb[0].mxu0
        %v1071 = vadd.f32 %v897, %v1070
        %v1072 = vpop.f32.mrb[0].mxu0
        %v1073 = vpop.f32.mrb[0].mxu0
        %v1074 = vadd.f32 %v897, %v1073
        %v1075 = vpop.f32.mrb[0].mxu0
        %1076 = vmatprep.mubr.bf16.mxu0 0
        %1077 = vmatmul.mubr.bf16.gmra.mrb[0].mxu0 %v934
        %v1078 = vpop.f32.mrb[0].mxu0
        %v1079 = vadd.f32 %v897, %v1078
        %v1080 = vpop.f32.mrb[0].mxu0
        %v1081 = vpop.f32.mrb[0].mxu0
        %v1082 = vadd.f32 %v897, %v1081
        %v1083 = vpop.f32.mrb[0].mxu0
        %1084 = vmatprep.mubr.bf16.mxu0 0
        %1085 = vmatmul.mubr.bf16.gmra.mrb[0].mxu0 %v937
        %v1086 = vpop.f32.mrb[0].mxu0
        %v1087 = vadd.f32 %v897, %v1086
        %v1088 = vpop.f32.mrb[0].mxu0
        %v1089 = vpop.f32.mrb[0].mxu0
        %v1090 = vadd.f32 %v897, %v1089
        %v1091 = vpop.f32.mrb[0].mxu0
        %1092 = vmatprep.mubr.bf16.mxu0 0
        %1093 = vmatmul.mubr.bf16.gmra.mrb[0].mxu0 %v940
        %v1094 = vpop.f32.mrb[0].mxu0
        %v1095 = vadd.f32 %v897, %v1094
        %v1096 = vpop.f32.mrb[0].mxu0
        %v1097 = vpop.f32.mrb[0].mxu0
        %v1098 = vadd.f32 %v897, %v1097
        %v1099 = vpop.f32.mrb[0].mxu0
        %1100 = vmatprep.mubr.bf16.mxu0 0
        %1101 = vmatmul.mubr.bf16.gmra.mrb[0].mxu0 %v943
        %v1102 = vpop.f32.mrb[0].mxu0
        %v1103 = vadd.f32 %v897, %v1102
        %v1104 = vpop.f32.mrb[0].mxu0
        %v1105 = vpop.f32.mrb[0].mxu0
        %v1106 = vadd.f32 %v897, %v1105
        %v1107 = vpop.f32.mrb[0].mxu0
        %1108 = vmatprep.mubr.bf16.mxu0 0
        %1109 = vmatmul.mubr.bf16.gmra.mrb[0].mxu0 %v946
        %v1110 = vpop.f32.mrb[0].mxu0
        %v1111 = vadd.f32 %v897, %v1110
        %v1112 = vpop.f32.mrb[0].mxu0
        %v1113 = vpop.f32.mrb[0].mxu0
        %v1114 = vadd.f32 %v897, %v1113
        %v1115 = vpop.f32.mrb[0].mxu0
        %1116 = vmatprep.mubr.bf16.mxu0 0
        %1117 = vmatmul.mubr.bf16.gmra.mrb[0].mxu0 %v949
        %v1118 = vpop.f32.mrb[0].mxu0
        %v1119 = vadd.f32 %v897, %v1118
        %v1120 = vpop.f32.mrb[0].mxu0
        %v1121 = vpop.f32.mrb[0].mxu0
        %v1122 = vadd.f32 %v897, %v1121
        %v1123 = vpop.f32.mrb[0].mxu0
        %1124 = vmatprep.mubr.bf16.mxu0 0
        %1125 = vmatmul.mubr.bf16.gmra.mrb[0].mxu0 %v952
        %v1126 = vpop.f32.mrb[0].mxu0
        %v1127 = vadd.f32 %v897, %v1126
        %v1128 = vpop.f32.mrb[0].mxu0
        %v1129 = vpop.f32.mrb[0].mxu0
        %v1130 = vadd.f32 %v897, %v1129
        %v1131 = vpop.f32.mrb[0].mxu0
        %1132 = vmatprep.mubr.bf16.mxu0 0
        %1133 = vmatmul.mubr.bf16.gmra.mrb[0].mxu0 %v955
        %v1134 = vpop.f32.mrb[0].mxu0
        %v1135 = vadd.f32 %v897, %v1134
        %v1136 = vpop.f32.mrb[0].mxu0
        %v1137 = vpop.f32.mrb[0].mxu0
        %v1138 = vadd.f32 %v897, %v1137
        %v1139 = vpop.f32.mrb[0].mxu0
        %1140 = vmatprep.mubr.bf16.mxu0 0
        %1141 = vmatmul.mubr.bf16.gmra.mrb[0].mxu0 %v958
        %v1142 = vpop.f32.mrb[0].mxu0
        %v1143 = vadd.f32 %v897, %v1142
        %v1144 = vpop.f32.mrb[0].mxu0
        %v1145 = vpop.f32.mrb[0].mxu0
        %v1146 = vadd.f32 %v897, %v1145
        %v1147 = vpop.f32.mrb[0].mxu0
        %1148 = vmatprep.mubr.bf16.mxu0 0
        %1149 = vmatmul.mubr.bf16.gmra.mrb[0].mxu0 %v961
        %v1150 = vpop.f32.mrb[0].mxu0
        %v1151 = vadd.f32 %v897, %v1150
        %v1152 = vpop.f32.mrb[0].mxu0
        %v1153 = vpop.f32.mrb[0].mxu0
        %v1154 = vadd.f32 %v897, %v1153
        %v1155 = vpop.f32.mrb[0].mxu0
        %1156 = vmatprep.mubr.bf16.mxu0 0
        %1157 = vmatmul.mubr.bf16.gmra.mrb[0].mxu0 %v964
        %v1158 = vpop.f32.mrb[0].mxu0
        %v1159 = vadd.f32 %v897, %v1158
        %v1160 = vpop.f32.mrb[0].mxu0
        %v1161 = vpop.f32.mrb[0].mxu0
        %v1162 = vadd.f32 %v897, %v1161
        %v1163 = vpop.f32.mrb[0].mxu0
        %1164 = vmatprep.mubr.bf16.mxu0 0
        %1165 = vmatmul.mubr.bf16.gmra.mrb[0].mxu0 %v967
        %v1166 = vpop.f32.mrb[0].mxu0
        %v1167 = vadd.f32 %v897, %v1166
        %v1168 = vpop.f32.mrb[0].mxu0
        %v1169 = vpop.f32.mrb[0].mxu0
        %v1170 = vadd.f32 %v897, %v1169
        %v1171 = vpop.f32.mrb[0].mxu0
        %1172 = vmatprep.mubr.bf16.mxu0 0
        %1173 = vmatmul.mubr.bf16.gmra.mrb[0].mxu0 %v970
        %v1174 = vpop.f32.mrb[0].mxu0
        %v1175 = vadd.f32 %v897, %v1174
        %v1176 = vpop.f32.mrb[0].mxu0
        %v1177 = vpop.f32.mrb[0].mxu0
        %v1178 = vadd.f32 %v897, %v1177
        %v1179 = vpop.f32.mrb[0].mxu0
        %1180 = vmatprep.mubr.bf16.mxu0 0
        %1181 = vmatmul.mubr.bf16.gmra.mrb[0].mxu0 %v973
        %v1182 = vpop.f32.mrb[0].mxu0
        %v1183 = vadd.f32 %v897, %v1182
        %v1184 = vpop.f32.mrb[0].mxu0
        %v1185 = vpop.f32.mrb[0].mxu0
        %v1186 = vadd.f32 %v897, %v1185
        %v1187 = vpop.f32.mrb[0].mxu0
        %1188 = vmatprep.mubr.bf16.mxu0 0
        %1189 = vmatmul.mubr.bf16.gmra.mrb[0].mxu0 %v976
        %v1190 = vpop.f32.mrb[0].mxu0
        %v1191 = vadd.f32 %v897, %v1190
        %v1192 = vpop.f32.mrb[0].mxu0
        %v1193 = vpop.f32.mrb[0].mxu0
        %v1194 = vadd.f32 %v897, %v1193
        %v1195 = vpop.f32.mrb[0].mxu0
        %1196 = vmatprep.mubr.bf16.mxu0 0
        %1197 = vmatmul.mubr.bf16.gmra.mrb[0].mxu0 %v979
        %v1198 = vpop.f32.mrb[0].mxu0
        %v1199 = vadd.f32 %v897, %v1198
        %v1200 = vpop.f32.mrb[0].mxu0
        %v1201 = vpop.f32.mrb[0].mxu0
        %v1202 = vadd.f32 %v897, %v1201
        %v1203 = vpop.f32.mrb[0].mxu0
        %1204 = vmatprep.mubr.bf16.mxu0 0
        %1205 = vmatmul.mubr.bf16.gmra.mrb[0].mxu0 %v982
        %v1206 = vpop.f32.mrb[0].mxu0
        %v1207 = vadd.f32 %v897, %v1206
        %v1208 = vpop.f32.mrb[0].mxu0
        %v1209 = vpop.f32.mrb[0].mxu0
        %v1210 = vadd.f32 %v897, %v1209
        %v1211 = vpop.f32.mrb[0].mxu0
        %1212 = vmatprep.mubr.bf16.mxu0 0
        %1213 = vmatmul.mubr.bf16.gmra.mrb[0].mxu0 %v985
        %v1214 = vpop.f32.mrb[0].mxu0
        %v1215 = vadd.f32 %v897, %v1214
        %v1216 = vpop.f32.mrb[0].mxu0
        %v1217 = vpop.f32.mrb[0].mxu0
        %v1218 = vadd.f32 %v897, %v1217
        %v1219 = vpop.f32.mrb[0].mxu0
        %1220 = vmatprep.mubr.bf16.mxu0 0
        %1221 = vmatmul.mubr.bf16.gmra.mrb[0].mxu0 %v988
        %v1222 = vpop.f32.mrb[0].mxu0
        %v1223 = vadd.f32 %v897, %v1222
        %v1224 = vpop.f32.mrb[0].mxu0
        %v1225 = vpop.f32.mrb[0].mxu0
        %v1226 = vadd.f32 %v897, %v1225
        %v1227 = vpop.f32.mrb[0].mxu0
        %1228 = vmatprep.mubr.bf16.mxu0 0
        %1229 = vmatmul.mubr.bf16.gmra.mrb[0].mxu0 %v991
        %v1230 = vpop.f32.mrb[0].mxu0
        %v1231 = vadd.f32 %v897, %v1230
        %v1232 = vpop.f32.mrb[0].mxu0
        %v1233 = vpop.f32.mrb[0].mxu0
        %v1234 = vadd.f32 %v897, %v1233
        %v1235 = vpop.f32.mrb[0].mxu0
        %1236 = vmatprep.mubr.bf16.mxu0 0
        %1237 = vmatmul.mubr.bf16.gmra.mrb[0].mxu0 %v994
        %v1238 = vpop.f32.mrb[0].mxu0
        %v1239 = vadd.f32 %v897, %v1238
        %v1240 = vpop.f32.mrb[0].mxu0
        %v1241 = vpop.f32.mrb[0].mxu0
        %v1242 = vadd.f32 %v897, %v1241
        %v1243 = vpop.f32.mrb[0].mxu0
        %1244 = vmatprep.mubr.bf16.mxu0 0
        %1245 = vmatmul.mubr.bf16.gmra.mrb[0].mxu0 %v997
        %v1246 = vpop.f32.mrb[0].mxu0
        %v1247 = vadd.f32 %v897, %v1246
        %v1248 = vpop.f32.mrb[0].mxu0
        %v1249 = vpop.f32.mrb[0].mxu0
        %v1250 = vadd.f32 %v897, %v1249
        %v1251 = vpop.f32.mrb[0].mxu0
        %1252 = vmatprep.mubr.bf16.mxu0 0
        %1253 = vmatmul.mubr.bf16.gmra.mrb[0].mxu0 %v1000
        %v1254 = vpop.f32.mrb[0].mxu0
        %v1255 = vadd.f32 %v897, %v1254
        %v1256 = vpop.f32.mrb[0].mxu0
        %v1257 = vpop.f32.mrb[0].mxu0
        %v1258 = vadd.f32 %v897, %v1257
        %v1259 = vpop.f32.mrb[0].mxu0
        %1260 = vmatprep.mubr.bf16.mxu0 0
        %1261 = vmatmul.mubr.bf16.gmra.mrb[0].mxu0 %v1003
        %v1262 = vpop.f32.mrb[0].mxu0
        %v1263 = vadd.f32 %v897, %v1262
        %v1264 = vpop.f32.mrb[0].mxu0
        %v1265 = vpop.f32.mrb[0].mxu0
        %v1266 = vadd.f32 %v897, %v1265
        %v1267 = vpop.f32.mrb[0].mxu0
        %1268 = vmatprep.mubr.bf16.mxu0 0
        %1269 = vmatmul.mubr.bf16.gmra.mrb[0].mxu0 %v1006
        %v1270 = vpop.f32.mrb[0].mxu0
        %v1271 = vadd.f32 %v897, %v1270
        %v1272 = vpop.f32.mrb[0].mxu0
        %v1273 = vpop.f32.mrb[0].mxu0
        %v1274 = vadd.f32 %v897, %v1273
        %v1275 = vpop.f32.mrb[0].mxu0
        %1276 = vmatprep.mubr.bf16.mxu0 0
        %1277 = vmatmul.mubr.bf16.gmra.mrb[0].mxu0 %v1009
        %v1278 = vpop.f32.mrb[0].mxu0
        %v1279 = vadd.f32 %v897, %v1278
        %v1280 = vpop.f32.mrb[0].mxu0
        %v1281 = vpop.f32.mrb[0].mxu0
        %v1282 = vadd.f32 %v897, %v1281
        %v1283 = vpop.f32.mrb[0].mxu0
        %1284 = vmatprep.mubr.bf16.mxu0 0
        %1285 = vmatmul.mubr.bf16.gmra.mrb[0].mxu0 %v1012
        %v1286 = vpop.f32.mrb[0].mxu0
        %v1287 = vadd.f32 %v897, %v1286
        %v1288 = vpop.f32.mrb[0].mxu0
        %v1289 = vpop.f32.mrb[0].mxu0
        %v1290 = vadd.f32 %v897, %v1289
        %v1291 = vpop.f32.mrb[0].mxu0
        %1292 = vmatprep.mubr.bf16.mxu0 0
        %1293 = vmatmul.mubr.bf16.gmra.mrb[0].mxu0 %v1015
        %v1294 = vpop.f32.mrb[0].mxu0
        %v1295 = vadd.f32 %v897, %v1294
        %v1296 = vpop.f32.mrb[0].mxu0
        %v1297 = vpop.f32.mrb[0].mxu0
        %v1298 = vadd.f32 %v897, %v1297
        %v1299 = vpop.f32.mrb[0].mxu0
        %1300 = vmatprep.mubr.bf16.mxu0 0
        %1301 = vmatmul.mubr.bf16.gmra.mrb[0].mxu0 %v1018
        %v1302 = vpop.f32.mrb[0].mxu0
        %v1303 = vadd.f32 %v897, %v1302
        %v1304 = vpop.f32.mrb[0].mxu0
        %v1305 = vpop.f32.mrb[0].mxu0
        %v1306 = vadd.f32 %v897, %v1305
        %v1307 = vpop.f32.mrb[0].mxu0
        %1308 = vdwg.mxu0
        %v1309 = vmax.f32 %v1055, 0.0
        %v1310 = vmax.f32 %v1058, 0.0
        %v1311 = vmax.f32 %v1063, 0.0
        %v1312 = vmax.f32 %v1066, 0.0
        %v1313 = vmax.f32 %v1071, 0.0
        %v1314 = vmax.f32 %v1074, 0.0
        %v1315 = vmax.f32 %v1079, 0.0
        %v1316 = vmax.f32 %v1082, 0.0
        %v1317 = vmax.f32 %v1087, 0.0
        %v1318 = vmax.f32 %v1090, 0.0
        %v1319 = vmax.f32 %v1095, 0.0
        %v1320 = vmax.f32 %v1098, 0.0
        %v1321 = vmax.f32 %v1103, 0.0
        %v1322 = vmax.f32 %v1106, 0.0
        %v1323 = vmax.f32 %v1111, 0.0
        %v1324 = vmax.f32 %v1114, 0.0
        %v1325 = vmax.f32 %v1119, 0.0
        %v1326 = vmax.f32 %v1122, 0.0
        %v1327 = vmax.f32 %v1127, 0.0
        %v1328 = vmax.f32 %v1130, 0.0
        %v1329 = vmax.f32 %v1135, 0.0
        %v1330 = vmax.f32 %v1138, 0.0
        %v1331 = vmax.f32 %v1143, 0.0
        %v1332 = vmax.f32 %v1146, 0.0
        %v1333 = vmax.f32 %v1151, 0.0
        %v1334 = vmax.f32 %v1154, 0.0
        %v1335 = vmax.f32 %v1159, 0.0
        %v1336 = vmax.f32 %v1162, 0.0
        %v1337 = vmax.f32 %v1167, 0.0
        %v1338 = vmax.f32 %v1170, 0.0
        %v1339 = vmax.f32 %v1175, 0.0
        %v1340 = vmax.f32 %v1178, 0.0
        %v1341 = vmax.f32 %v1183, 0.0
        %v1342 = vmax.f32 %v1186, 0.0
        %v1343 = vmax.f32 %v1191, 0.0
        %v1344 = vmax.f32 %v1194, 0.0
        %v1345 = vmax.f32 %v1199, 0.0
        %v1346 = vmax.f32 %v1202, 0.0
        %v1347 = vmax.f32 %v1207, 0.0
        %v1348 = vmax.f32 %v1210, 0.0
        %v1349 = vmax.f32 %v1215, 0.0
        %v1350 = vmax.f32 %v1218, 0.0
        %v1351 = vmax.f32 %v1223, 0.0
        %v1352 = vmax.f32 %v1226, 0.0
        %v1353 = vmax.f32 %v1231, 0.0
        %v1354 = vmax.f32 %v1234, 0.0
        %v1355 = vmax.f32 %v1239, 0.0
        %v1356 = vmax.f32 %v1242, 0.0
        %v1357 = vmax.f32 %v1247, 0.0
        %v1358 = vmax.f32 %v1250, 0.0
        %v1359 = vmax.f32 %v1255, 0.0
        %v1360 = vmax.f32 %v1258, 0.0
        %v1361 = vmax.f32 %v1263, 0.0
        %v1362 = vmax.f32 %v1266, 0.0
        %v1363 = vmax.f32 %v1271, 0.0
        %v1364 = vmax.f32 %v1274, 0.0
        %v1365 = vmax.f32 %v1279, 0.0
        %v1366 = vmax.f32 %v1282, 0.0
        %v1367 = vmax.f32 %v1287, 0.0
        %v1368 = vmax.f32 %v1290, 0.0
        %v1369 = vmax.f32 %v1295, 0.0
        %v1370 = vmax.f32 %v1298, 0.0
        %v1371 = vmax.f32 %v1303, 0.0
        %v1372 = vmax.f32 %v1306, 0.0
        %v1373 = vpack.c.bf16 %v1310, %v1309
        %v1374 = vpack.c.bf16 %v1312, %v1311
        %v1375 = vpack.c.bf16 %v1314, %v1313
        %v1376 = vpack.c.bf16 %v1316, %v1315
        %v1377 = vpack.c.bf16 %v1318, %v1317
        %v1378 = vpack.c.bf16 %v1320, %v1319
        %v1379 = vpack.c.bf16 %v1322, %v1321
        %v1380 = vpack.c.bf16 %v1324, %v1323
        %v1381 = vpack.c.bf16 %v1326, %v1325
        %v1382 = vpack.c.bf16 %v1328, %v1327
        %v1383 = vpack.c.bf16 %v1330, %v1329
        %v1384 = vpack.c.bf16 %v1332, %v1331
        %v1385 = vpack.c.bf16 %v1334, %v1333
        %v1386 = vpack.c.bf16 %v1336, %v1335
        %v1387 = vpack.c.bf16 %v1338, %v1337
        %v1388 = vpack.c.bf16 %v1340, %v1339
        %v1389 = vpack.c.bf16 %v1342, %v1341
        %v1390 = vpack.c.bf16 %v1344, %v1343
        %v1391 = vpack.c.bf16 %v1346, %v1345
        %v1392 = vpack.c.bf16 %v1348, %v1347
        %v1393 = vpack.c.bf16 %v1350, %v1349
        %v1394 = vpack.c.bf16 %v1352, %v1351
        %v1395 = vpack.c.bf16 %v1354, %v1353
        %v1396 = vpack.c.bf16 %v1356, %v1355
        %v1397 = vpack.c.bf16 %v1358, %v1357
        %v1398 = vpack.c.bf16 %v1360, %v1359
        %v1399 = vpack.c.bf16 %v1362, %v1361
        %v1400 = vpack.c.bf16 %v1364, %v1363
        %v1401 = vpack.c.bf16 %v1366, %v1365
        %v1402 = vpack.c.bf16 %v1368, %v1367
        %v1403 = vpack.c.bf16 %v1370, %v1369
        %v1404 = vpack.c.bf16 %v1372, %v1371
        %s1405 = scalar_lea.vmem %s2, 32
        %v1406 = vld [vmem:[%s1405] sm:$0xf]
        %v1407 = vld [vmem:[%s1405 + $0x4] sm:$0xf]
        %v1408 = vld [vmem:[%s1405 + $0x8] sm:$0xf]
        %v1409 = vld [vmem:[%s1405 + $0xc] sm:$0xf]
        %v1410 = vld [vmem:[%s1405 + $0x10] sm:$0xf]
        %v1411 = vld [vmem:[%s1405 + $0x14] sm:$0xf]
        %v1412 = vld [vmem:[%s1405 + $0x18] sm:$0xf]
        %v1413 = vld [vmem:[%s1405 + $0x1c] sm:$0xf]
        %s1414 = scalar_lea.vmem %s4, 2
        %v1415 = vld [vmem:[%s1414] sm:$0x1]
        %v1417 = vlaneseq
        %v1418 = vshrl.u32 %v1417, 7
        %v1419 = vsub.s32 0, %v1418
        %v1420 = vrot.slane %v1415, %v1419
        %v1430 = vunpack.c.l.b16 %v1406
        %v1431 = vunpack.c.l.b16 %v1407
        %v1432 = vunpack.c.l.b16 %v1408
        %v1433 = vunpack.c.l.b16 %v1409
        %v1434 = vunpack.c.l.b16 %v1410
        %v1435 = vunpack.c.l.b16 %v1411
        %v1436 = vunpack.c.l.b16 %v1412
        %v1437 = vunpack.c.l.b16 %v1413
        %v1438 = vpack.c.b16 %v1431, %v1430
        %v1439 = vpack.c.b16 %v1433, %v1432
        %v1440 = vpack.c.b16 %v1435, %v1434
        %v1441 = vpack.c.b16 %v1437, %v1436
        %v1447 = vsel %vm923, %v1373, 0
        %v1450 = vsel %vm923, %v1374, 0
        %v1453 = vsel %vm923, %v1375, 0
        %v1456 = vsel %vm923, %v1376, 0
        %v1459 = vsel %vm923, %v1377, 0
        %v1462 = vsel %vm923, %v1378, 0
        %v1465 = vsel %vm923, %v1379, 0
        %v1468 = vsel %vm923, %v1380, 0
        %v1471 = vsel %vm923, %v1381, 0
        %v1474 = vsel %vm923, %v1382, 0
        %v1477 = vsel %vm923, %v1383, 0
        %v1480 = vsel %vm923, %v1384, 0
        %v1483 = vsel %vm923, %v1385, 0
        %v1486 = vsel %vm923, %v1386, 0
        %v1489 = vsel %vm923, %v1387, 0
        %v1492 = vsel %vm923, %v1388, 0
        %v1495 = vsel %vm923, %v1389, 0
        %v1498 = vsel %vm923, %v1390, 0
        %v1501 = vsel %vm923, %v1391, 0
        %v1504 = vsel %vm923, %v1392, 0
        %v1507 = vsel %vm923, %v1393, 0
        %v1510 = vsel %vm923, %v1394, 0
        %v1513 = vsel %vm923, %v1395, 0
        %v1516 = vsel %vm923, %v1396, 0
        %v1519 = vsel %vm923, %v1397, 0
        %v1522 = vsel %vm923, %v1398, 0
        %v1525 = vsel %vm923, %v1399, 0
        %v1528 = vsel %vm923, %v1400, 0
        %v1531 = vsel %vm923, %v1401, 0
        %v1534 = vsel %vm923, %v1402, 0
        %v1537 = vsel %vm923, %v1403, 0
        %v1540 = vsel %vm923, %v1404, 0
        %1542 = vmatprep.subr.bf16.mxu0 0
        %1543 = vmatpush1.bf16.msra.mxu0 %v1438
        %1544 = vmatprep.subr.bf16.mxu0 0
        %1545 = vmatpush1.bf16.msra.mxu0 %v1439
        %1546 = vmatprep.subr.bf16.mxu0 0
        %1547 = vmatpush1.bf16.msra.mxu0 %v1440
        %1548 = vmatprep.subr.bf16.mxu0 0
        %1549 = vmatpush1.bf16.msra.mxu0 %v1441
        %1550 = vmatprep.subr.bf16.mxu0 0
        %1551 = vmatpush1.bf16.msra.mxu0 0
        %1552 = vmatprep.subr.bf16.mxu0 0
        %1553 = vmatpush1.bf16.msra.mxu0 0
        %1554 = vmatprep.subr.bf16.mxu0 0
        %1555 = vmatpush1.bf16.msra.mxu0 0
        %1556 = vmatprep.subr.bf16.mxu0 0
        %1557 = vmatpush1.bf16.msra.mxu0 0
        %1558 = vmatprep.subr.bf16.mxu0 0
        %1559 = vmatpush1.bf16.msra.mxu0 0
        %1560 = vmatprep.subr.bf16.mxu0 0
        %1561 = vmatpush1.bf16.msra.mxu0 0
        %1562 = vmatprep.subr.bf16.mxu0 0
        %1563 = vmatpush1.bf16.msra.mxu0 0
        %1564 = vmatprep.subr.bf16.mxu0 0
        %1565 = vmatpush1.bf16.msra.mxu0 0
        %1566 = vmatprep.subr.bf16.mxu0 0
        %1567 = vmatpush1.bf16.msra.mxu0 0
        %1568 = vmatprep.subr.bf16.mxu0 0
        %1569 = vmatpush1.bf16.msra.mxu0 0
        %1570 = vmatprep.subr.bf16.mxu0 0
        %1571 = vmatpush1.bf16.msra.mxu0 0
        %1572 = vmatprep.subr.bf16.mxu0 0
        %1573 = vmatpush1.bf16.msra.mxu0 0
        %1574 = vmatprep.mubr.bf16.mxu0 0
        %1575 = vmatmul.mubr.bf16.gmra.mrb[0].mxu0 %v1447
        %v1576 = vpop.f32.mrb[0].mxu0
        %v1577 = vadd.f32 %v1420, %v1576
        %v1578 = vpop.f32.mrb[0].mxu0
        %v1579 = vpop.f32.mrb[0].mxu0
        %v1580 = vadd.f32 %v1420, %v1579
        %v1581 = vpop.f32.mrb[0].mxu0
        %1582 = vmatprep.mubr.bf16.mxu0 0
        %1583 = vmatmul.mubr.bf16.gmra.mrb[0].mxu0 %v1450
        %v1584 = vpop.f32.mrb[0].mxu0
        %v1585 = vadd.f32 %v1420, %v1584
        %v1586 = vpop.f32.mrb[0].mxu0
        %v1587 = vpop.f32.mrb[0].mxu0
        %v1588 = vadd.f32 %v1420, %v1587
        %v1589 = vpop.f32.mrb[0].mxu0
        %1590 = vmatprep.mubr.bf16.mxu0 0
        %1591 = vmatmul.mubr.bf16.gmra.mrb[0].mxu0 %v1453
        %v1592 = vpop.f32.mrb[0].mxu0
        %v1593 = vadd.f32 %v1420, %v1592
        %v1594 = vpop.f32.mrb[0].mxu0
        %v1595 = vpop.f32.mrb[0].mxu0
        %v1596 = vadd.f32 %v1420, %v1595
        %v1597 = vpop.f32.mrb[0].mxu0
        %1598 = vmatprep.mubr.bf16.mxu0 0
        %1599 = vmatmul.mubr.bf16.gmra.mrb[0].mxu0 %v1456
        %v1600 = vpop.f32.mrb[0].mxu0
        %v1601 = vadd.f32 %v1420, %v1600
        %v1602 = vpop.f32.mrb[0].mxu0
        %v1603 = vpop.f32.mrb[0].mxu0
        %v1604 = vadd.f32 %v1420, %v1603
        %v1605 = vpop.f32.mrb[0].mxu0
        %1606 = vmatprep.mubr.bf16.mxu0 0
        %1607 = vmatmul.mubr.bf16.gmra.mrb[0].mxu0 %v1459
        %v1608 = vpop.f32.mrb[0].mxu0
        %v1609 = vadd.f32 %v1420, %v1608
        %v1610 = vpop.f32.mrb[0].mxu0
        %v1611 = vpop.f32.mrb[0].mxu0
        %v1612 = vadd.f32 %v1420, %v1611
        %v1613 = vpop.f32.mrb[0].mxu0
        %1614 = vmatprep.mubr.bf16.mxu0 0
        %1615 = vmatmul.mubr.bf16.gmra.mrb[0].mxu0 %v1462
        %v1616 = vpop.f32.mrb[0].mxu0
        %v1617 = vadd.f32 %v1420, %v1616
        %v1618 = vpop.f32.mrb[0].mxu0
        %v1619 = vpop.f32.mrb[0].mxu0
        %v1620 = vadd.f32 %v1420, %v1619
        %v1621 = vpop.f32.mrb[0].mxu0
        %1622 = vmatprep.mubr.bf16.mxu0 0
        %1623 = vmatmul.mubr.bf16.gmra.mrb[0].mxu0 %v1465
        %v1624 = vpop.f32.mrb[0].mxu0
        %v1625 = vadd.f32 %v1420, %v1624
        %v1626 = vpop.f32.mrb[0].mxu0
        %v1627 = vpop.f32.mrb[0].mxu0
        %v1628 = vadd.f32 %v1420, %v1627
        %v1629 = vpop.f32.mrb[0].mxu0
        %1630 = vmatprep.mubr.bf16.mxu0 0
        %1631 = vmatmul.mubr.bf16.gmra.mrb[0].mxu0 %v1468
        %v1632 = vpop.f32.mrb[0].mxu0
        %v1633 = vadd.f32 %v1420, %v1632
        %v1634 = vpop.f32.mrb[0].mxu0
        %v1635 = vpop.f32.mrb[0].mxu0
        %v1636 = vadd.f32 %v1420, %v1635
        %v1637 = vpop.f32.mrb[0].mxu0
        %1638 = vmatprep.mubr.bf16.mxu0 0
        %1639 = vmatmul.mubr.bf16.gmra.mrb[0].mxu0 %v1471
        %v1640 = vpop.f32.mrb[0].mxu0
        %v1641 = vadd.f32 %v1420, %v1640
        %v1642 = vpop.f32.mrb[0].mxu0
        %v1643 = vpop.f32.mrb[0].mxu0
        %v1644 = vadd.f32 %v1420, %v1643
        %v1645 = vpop.f32.mrb[0].mxu0
        %1646 = vmatprep.mubr.bf16.mxu0 0
        %1647 = vmatmul.mubr.bf16.gmra.mrb[0].mxu0 %v1474
        %v1648 = vpop.f32.mrb[0].mxu0
        %v1649 = vadd.f32 %v1420, %v1648
        %v1650 = vpop.f32.mrb[0].mxu0
        %v1651 = vpop.f32.mrb[0].mxu0
        %v1652 = vadd.f32 %v1420, %v1651
        %v1653 = vpop.f32.mrb[0].mxu0
        %1654 = vmatprep.mubr.bf16.mxu0 0
        %1655 = vmatmul.mubr.bf16.gmra.mrb[0].mxu0 %v1477
        %v1656 = vpop.f32.mrb[0].mxu0
        %v1657 = vadd.f32 %v1420, %v1656
        %v1658 = vpop.f32.mrb[0].mxu0
        %v1659 = vpop.f32.mrb[0].mxu0
        %v1660 = vadd.f32 %v1420, %v1659
        %v1661 = vpop.f32.mrb[0].mxu0
        %1662 = vmatprep.mubr.bf16.mxu0 0
        %1663 = vmatmul.mubr.bf16.gmra.mrb[0].mxu0 %v1480
        %v1664 = vpop.f32.mrb[0].mxu0
        %v1665 = vadd.f32 %v1420, %v1664
        %v1666 = vpop.f32.mrb[0].mxu0
        %v1667 = vpop.f32.mrb[0].mxu0
        %v1668 = vadd.f32 %v1420, %v1667
        %v1669 = vpop.f32.mrb[0].mxu0
        %1670 = vmatprep.mubr.bf16.mxu0 0
        %1671 = vmatmul.mubr.bf16.gmra.mrb[0].mxu0 %v1483
        %v1672 = vpop.f32.mrb[0].mxu0
        %v1673 = vadd.f32 %v1420, %v1672
        %v1674 = vpop.f32.mrb[0].mxu0
        %v1675 = vpop.f32.mrb[0].mxu0
        %v1676 = vadd.f32 %v1420, %v1675
        %v1677 = vpop.f32.mrb[0].mxu0
        %1678 = vmatprep.mubr.bf16.mxu0 0
        %1679 = vmatmul.mubr.bf16.gmra.mrb[0].mxu0 %v1486
        %v1680 = vpop.f32.mrb[0].mxu0
        %v1681 = vadd.f32 %v1420, %v1680
        %v1682 = vpop.f32.mrb[0].mxu0
        %v1683 = vpop.f32.mrb[0].mxu0
        %v1684 = vadd.f32 %v1420, %v1683
        %v1685 = vpop.f32.mrb[0].mxu0
        %1686 = vmatprep.mubr.bf16.mxu0 0
        %1687 = vmatmul.mubr.bf16.gmra.mrb[0].mxu0 %v1489
        %v1688 = vpop.f32.mrb[0].mxu0
        %v1689 = vadd.f32 %v1420, %v1688
        %v1690 = vpop.f32.mrb[0].mxu0
        %v1691 = vpop.f32.mrb[0].mxu0
        %v1692 = vadd.f32 %v1420, %v1691
        %v1693 = vpop.f32.mrb[0].mxu0
        %1694 = vmatprep.mubr.bf16.mxu0 0
        %1695 = vmatmul.mubr.bf16.gmra.mrb[0].mxu0 %v1492
        %v1696 = vpop.f32.mrb[0].mxu0
        %v1697 = vadd.f32 %v1420, %v1696
        %v1698 = vpop.f32.mrb[0].mxu0
        %v1699 = vpop.f32.mrb[0].mxu0
        %v1700 = vadd.f32 %v1420, %v1699
        %v1701 = vpop.f32.mrb[0].mxu0
        %1702 = vmatprep.mubr.bf16.mxu0 0
        %1703 = vmatmul.mubr.bf16.gmra.mrb[0].mxu0 %v1495
        %v1704 = vpop.f32.mrb[0].mxu0
        %v1705 = vadd.f32 %v1420, %v1704
        %v1706 = vpop.f32.mrb[0].mxu0
        %v1707 = vpop.f32.mrb[0].mxu0
        %v1708 = vadd.f32 %v1420, %v1707
        %v1709 = vpop.f32.mrb[0].mxu0
        %1710 = vmatprep.mubr.bf16.mxu0 0
        %1711 = vmatmul.mubr.bf16.gmra.mrb[0].mxu0 %v1498
        %v1712 = vpop.f32.mrb[0].mxu0
        %v1713 = vadd.f32 %v1420, %v1712
        %v1714 = vpop.f32.mrb[0].mxu0
        %v1715 = vpop.f32.mrb[0].mxu0
        %v1716 = vadd.f32 %v1420, %v1715
        %v1717 = vpop.f32.mrb[0].mxu0
        %1718 = vmatprep.mubr.bf16.mxu0 0
        %1719 = vmatmul.mubr.bf16.gmra.mrb[0].mxu0 %v1501
        %v1720 = vpop.f32.mrb[0].mxu0
        %v1721 = vadd.f32 %v1420, %v1720
        %v1722 = vpop.f32.mrb[0].mxu0
        %v1723 = vpop.f32.mrb[0].mxu0
        %v1724 = vadd.f32 %v1420, %v1723
        %v1725 = vpop.f32.mrb[0].mxu0
        %1726 = vmatprep.mubr.bf16.mxu0 0
        %1727 = vmatmul.mubr.bf16.gmra.mrb[0].mxu0 %v1504
        %v1728 = vpop.f32.mrb[0].mxu0
        %v1729 = vadd.f32 %v1420, %v1728
        %v1730 = vpop.f32.mrb[0].mxu0
        %v1731 = vpop.f32.mrb[0].mxu0
        %v1732 = vadd.f32 %v1420, %v1731
        %v1733 = vpop.f32.mrb[0].mxu0
        %1734 = vmatprep.mubr.bf16.mxu0 0
        %1735 = vmatmul.mubr.bf16.gmra.mrb[0].mxu0 %v1507
        %v1736 = vpop.f32.mrb[0].mxu0
        %v1737 = vadd.f32 %v1420, %v1736
        %v1738 = vpop.f32.mrb[0].mxu0
        %v1739 = vpop.f32.mrb[0].mxu0
        %v1740 = vadd.f32 %v1420, %v1739
        %v1741 = vpop.f32.mrb[0].mxu0
        %1742 = vmatprep.mubr.bf16.mxu0 0
        %1743 = vmatmul.mubr.bf16.gmra.mrb[0].mxu0 %v1510
        %v1744 = vpop.f32.mrb[0].mxu0
        %v1745 = vadd.f32 %v1420, %v1744
        %v1746 = vpop.f32.mrb[0].mxu0
        %v1747 = vpop.f32.mrb[0].mxu0
        %v1748 = vadd.f32 %v1420, %v1747
        %v1749 = vpop.f32.mrb[0].mxu0
        %1750 = vmatprep.mubr.bf16.mxu0 0
        %1751 = vmatmul.mubr.bf16.gmra.mrb[0].mxu0 %v1513
        %v1752 = vpop.f32.mrb[0].mxu0
        %v1753 = vadd.f32 %v1420, %v1752
        %v1754 = vpop.f32.mrb[0].mxu0
        %v1755 = vpop.f32.mrb[0].mxu0
        %v1756 = vadd.f32 %v1420, %v1755
        %v1757 = vpop.f32.mrb[0].mxu0
        %1758 = vmatprep.mubr.bf16.mxu0 0
        %1759 = vmatmul.mubr.bf16.gmra.mrb[0].mxu0 %v1516
        %v1760 = vpop.f32.mrb[0].mxu0
        %v1761 = vadd.f32 %v1420, %v1760
        %v1762 = vpop.f32.mrb[0].mxu0
        %v1763 = vpop.f32.mrb[0].mxu0
        %v1764 = vadd.f32 %v1420, %v1763
        %v1765 = vpop.f32.mrb[0].mxu0
        %1766 = vmatprep.mubr.bf16.mxu0 0
        %1767 = vmatmul.mubr.bf16.gmra.mrb[0].mxu0 %v1519
        %v1768 = vpop.f32.mrb[0].mxu0
        %v1769 = vadd.f32 %v1420, %v1768
        %v1770 = vpop.f32.mrb[0].mxu0
        %v1771 = vpop.f32.mrb[0].mxu0
        %v1772 = vadd.f32 %v1420, %v1771
        %v1773 = vpop.f32.mrb[0].mxu0
        %1774 = vmatprep.mubr.bf16.mxu0 0
        %1775 = vmatmul.mubr.bf16.gmra.mrb[0].mxu0 %v1522
        %v1776 = vpop.f32.mrb[0].mxu0
        %v1777 = vadd.f32 %v1420, %v1776
        %v1778 = vpop.f32.mrb[0].mxu0
        %v1779 = vpop.f32.mrb[0].mxu0
        %v1780 = vadd.f32 %v1420, %v1779
        %v1781 = vpop.f32.mrb[0].mxu0
        %1782 = vmatprep.mubr.bf16.mxu0 0
        %1783 = vmatmul.mubr.bf16.gmra.mrb[0].mxu0 %v1525
        %v1784 = vpop.f32.mrb[0].mxu0
        %v1785 = vadd.f32 %v1420, %v1784
        %v1786 = vpop.f32.mrb[0].mxu0
        %v1787 = vpop.f32.mrb[0].mxu0
        %v1788 = vadd.f32 %v1420, %v1787
        %v1789 = vpop.f32.mrb[0].mxu0
        %1790 = vmatprep.mubr.bf16.mxu0 0
        %1791 = vmatmul.mubr.bf16.gmra.mrb[0].mxu0 %v1528
        %v1792 = vpop.f32.mrb[0].mxu0
        %v1793 = vadd.f32 %v1420, %v1792
        %v1794 = vpop.f32.mrb[0].mxu0
        %v1795 = vpop.f32.mrb[0].mxu0
        %v1796 = vadd.f32 %v1420, %v1795
        %v1797 = vpop.f32.mrb[0].mxu0
        %1798 = vmatprep.mubr.bf16.mxu0 0
        %1799 = vmatmul.mubr.bf16.gmra.mrb[0].mxu0 %v1531
        %v1800 = vpop.f32.mrb[0].mxu0
        %v1801 = vadd.f32 %v1420, %v1800
        %v1802 = vpop.f32.mrb[0].mxu0
        %v1803 = vpop.f32.mrb[0].mxu0
        %v1804 = vadd.f32 %v1420, %v1803
        %v1805 = vpop.f32.mrb[0].mxu0
        %1806 = vmatprep.mubr.bf16.mxu0 0
        %1807 = vmatmul.mubr.bf16.gmra.mrb[0].mxu0 %v1534
        %v1808 = vpop.f32.mrb[0].mxu0
        %v1809 = vadd.f32 %v1420, %v1808
        %v1810 = vpop.f32.mrb[0].mxu0
        %v1811 = vpop.f32.mrb[0].mxu0
        %v1812 = vadd.f32 %v1420, %v1811
        %v1813 = vpop.f32.mrb[0].mxu0
        %1814 = vmatprep.mubr.bf16.mxu0 0
        %1815 = vmatmul.mubr.bf16.gmra.mrb[0].mxu0 %v1537
        %v1816 = vpop.f32.mrb[0].mxu0
        %v1817 = vadd.f32 %v1420, %v1816
        %v1818 = vpop.f32.mrb[0].mxu0
        %v1819 = vpop.f32.mrb[0].mxu0
        %v1820 = vadd.f32 %v1420, %v1819
        %v1821 = vpop.f32.mrb[0].mxu0
        %1822 = vmatprep.mubr.bf16.mxu0 0
        %1823 = vmatmul.mubr.bf16.gmra.mrb[0].mxu0 %v1540
        %v1824 = vpop.f32.mrb[0].mxu0
        %v1825 = vadd.f32 %v1420, %v1824
        %v1826 = vpop.f32.mrb[0].mxu0
        %v1827 = vpop.f32.mrb[0].mxu0
        %v1828 = vadd.f32 %v1420, %v1827
        %v1829 = vpop.f32.mrb[0].mxu0
        %1830 = vdwg.mxu0
        %v1831 = vmax.f32 %v1577, 0.0
        %v1832 = vmax.f32 %v1580, 0.0
        %v1833 = vmax.f32 %v1585, 0.0
        %v1834 = vmax.f32 %v1588, 0.0
        %v1835 = vmax.f32 %v1593, 0.0
        %v1836 = vmax.f32 %v1596, 0.0
        %v1837 = vmax.f32 %v1601, 0.0
        %v1838 = vmax.f32 %v1604, 0.0
        %v1839 = vmax.f32 %v1609, 0.0
        %v1840 = vmax.f32 %v1612, 0.0
        %v1841 = vmax.f32 %v1617, 0.0
        %v1842 = vmax.f32 %v1620, 0.0
        %v1843 = vmax.f32 %v1625, 0.0
        %v1844 = vmax.f32 %v1628, 0.0
        %v1845 = vmax.f32 %v1633, 0.0
        %v1846 = vmax.f32 %v1636, 0.0
        %v1847 = vmax.f32 %v1641, 0.0
        %v1848 = vmax.f32 %v1644, 0.0
        %v1849 = vmax.f32 %v1649, 0.0
        %v1850 = vmax.f32 %v1652, 0.0
        %v1851 = vmax.f32 %v1657, 0.0
        %v1852 = vmax.f32 %v1660, 0.0
        %v1853 = vmax.f32 %v1665, 0.0
        %v1854 = vmax.f32 %v1668, 0.0
        %v1855 = vmax.f32 %v1673, 0.0
        %v1856 = vmax.f32 %v1676, 0.0
        %v1857 = vmax.f32 %v1681, 0.0
        %v1858 = vmax.f32 %v1684, 0.0
        %v1859 = vmax.f32 %v1689, 0.0
        %v1860 = vmax.f32 %v1692, 0.0
        %v1861 = vmax.f32 %v1697, 0.0
        %v1862 = vmax.f32 %v1700, 0.0
        %v1863 = vmax.f32 %v1705, 0.0
        %v1864 = vmax.f32 %v1708, 0.0
        %v1865 = vmax.f32 %v1713, 0.0
        %v1866 = vmax.f32 %v1716, 0.0
        %v1867 = vmax.f32 %v1721, 0.0
        %v1868 = vmax.f32 %v1724, 0.0
        %v1869 = vmax.f32 %v1729, 0.0
        %v1870 = vmax.f32 %v1732, 0.0
        %v1871 = vmax.f32 %v1737, 0.0
        %v1872 = vmax.f32 %v1740, 0.0
        %v1873 = vmax.f32 %v1745, 0.0
        %v1874 = vmax.f32 %v1748, 0.0
        %v1875 = vmax.f32 %v1753, 0.0
        %v1876 = vmax.f32 %v1756, 0.0
        %v1877 = vmax.f32 %v1761, 0.0
        %v1878 = vmax.f32 %v1764, 0.0
        %v1879 = vmax.f32 %v1769, 0.0
        %v1880 = vmax.f32 %v1772, 0.0
        %v1881 = vmax.f32 %v1777, 0.0
        %v1882 = vmax.f32 %v1780, 0.0
        %v1883 = vmax.f32 %v1785, 0.0
        %v1884 = vmax.f32 %v1788, 0.0
        %v1885 = vmax.f32 %v1793, 0.0
        %v1886 = vmax.f32 %v1796, 0.0
        %v1887 = vmax.f32 %v1801, 0.0
        %v1888 = vmax.f32 %v1804, 0.0
        %v1889 = vmax.f32 %v1809, 0.0
        %v1890 = vmax.f32 %v1812, 0.0
        %v1891 = vmax.f32 %v1817, 0.0
        %v1892 = vmax.f32 %v1820, 0.0
        %v1893 = vmax.f32 %v1825, 0.0
        %v1894 = vmax.f32 %v1828, 0.0
        %v1895 = vpack.c.bf16 %v1832, %v1831
        %v1896 = vpack.c.bf16 %v1834, %v1833
        %v1897 = vpack.c.bf16 %v1836, %v1835
        %v1898 = vpack.c.bf16 %v1838, %v1837
        %v1899 = vpack.c.bf16 %v1840, %v1839
        %v1900 = vpack.c.bf16 %v1842, %v1841
        %v1901 = vpack.c.bf16 %v1844, %v1843
        %v1902 = vpack.c.bf16 %v1846, %v1845
        %v1903 = vpack.c.bf16 %v1848, %v1847
        %v1904 = vpack.c.bf16 %v1850, %v1849
        %v1905 = vpack.c.bf16 %v1852, %v1851
        %v1906 = vpack.c.bf16 %v1854, %v1853
        %v1907 = vpack.c.bf16 %v1856, %v1855
        %v1908 = vpack.c.bf16 %v1858, %v1857
        %v1909 = vpack.c.bf16 %v1860, %v1859
        %v1910 = vpack.c.bf16 %v1862, %v1861
        %v1911 = vpack.c.bf16 %v1864, %v1863
        %v1912 = vpack.c.bf16 %v1866, %v1865
        %v1913 = vpack.c.bf16 %v1868, %v1867
        %v1914 = vpack.c.bf16 %v1870, %v1869
        %v1915 = vpack.c.bf16 %v1872, %v1871
        %v1916 = vpack.c.bf16 %v1874, %v1873
        %v1917 = vpack.c.bf16 %v1876, %v1875
        %v1918 = vpack.c.bf16 %v1878, %v1877
        %v1919 = vpack.c.bf16 %v1880, %v1879
        %v1920 = vpack.c.bf16 %v1882, %v1881
        %v1921 = vpack.c.bf16 %v1884, %v1883
        %v1922 = vpack.c.bf16 %v1886, %v1885
        %v1923 = vpack.c.bf16 %v1888, %v1887
        %v1924 = vpack.c.bf16 %v1890, %v1889
        %v1925 = vpack.c.bf16 %v1892, %v1891
        %v1926 = vpack.c.bf16 %v1894, %v1893
        %s1927 = scalar_lea.vmem %s2, 64
        %v1928 = vld [vmem:[%s1927] sm:$0xf]
        %v1929 = vld [vmem:[%s1927 + $0x4] sm:$0xf]
        %v1930 = vld [vmem:[%s1927 + $0x8] sm:$0xf]
        %v1931 = vld [vmem:[%s1927 + $0xc] sm:$0xf]
        %v1932 = vld [vmem:[%s1927 + $0x10] sm:$0xf]
        %v1933 = vld [vmem:[%s1927 + $0x14] sm:$0xf]
        %v1934 = vld [vmem:[%s1927 + $0x18] sm:$0xf]
        %v1935 = vld [vmem:[%s1927 + $0x1c] sm:$0xf]
        %s1936 = scalar_lea.vmem %s4, 3
        %v1937 = vld [vmem:[%s1936] sm:$0x1]
        %v1939 = vlaneseq
        %v1940 = vshrl.u32 %v1939, 7
        %v1941 = vsub.s32 0, %v1940
        %v1942 = vrot.slane %v1937, %v1941
        %v1952 = vunpack.c.l.b16 %v1928
        %v1953 = vunpack.c.l.b16 %v1929
        %v1954 = vunpack.c.l.b16 %v1930
        %v1955 = vunpack.c.l.b16 %v1931
        %v1956 = vunpack.c.l.b16 %v1932
        %v1957 = vunpack.c.l.b16 %v1933
        %v1958 = vunpack.c.l.b16 %v1934
        %v1959 = vunpack.c.l.b16 %v1935
        %v1960 = vpack.c.b16 %v1953, %v1952
        %v1961 = vpack.c.b16 %v1955, %v1954
        %v1962 = vpack.c.b16 %v1957, %v1956
        %v1963 = vpack.c.b16 %v1959, %v1958
        %v1969 = vsel %vm923, %v1895, 0
        %v1972 = vsel %vm923, %v1896, 0
        %v1975 = vsel %vm923, %v1897, 0
        %v1978 = vsel %vm923, %v1898, 0
        %v1981 = vsel %vm923, %v1899, 0
        %v1984 = vsel %vm923, %v1900, 0
        %v1987 = vsel %vm923, %v1901, 0
        %v1990 = vsel %vm923, %v1902, 0
        %v1993 = vsel %vm923, %v1903, 0
        %v1996 = vsel %vm923, %v1904, 0
        %v1999 = vsel %vm923, %v1905, 0
        %v2002 = vsel %vm923, %v1906, 0
        %v2005 = vsel %vm923, %v1907, 0
        %v2008 = vsel %vm923, %v1908, 0
        %v2011 = vsel %vm923, %v1909, 0
        %v2014 = vsel %vm923, %v1910, 0
        %v2017 = vsel %vm923, %v1911, 0
        %v2020 = vsel %vm923, %v1912, 0
        %v2023 = vsel %vm923, %v1913, 0
        %v2026 = vsel %vm923, %v1914, 0
        %v2029 = vsel %vm923, %v1915, 0
        %v2032 = vsel %vm923, %v1916, 0
        %v2035 = vsel %vm923, %v1917, 0
        %v2038 = vsel %vm923, %v1918, 0
        %v2041 = vsel %vm923, %v1919, 0
        %v2044 = vsel %vm923, %v1920, 0
        %v2047 = vsel %vm923, %v1921, 0
        %v2050 = vsel %vm923, %v1922, 0
        %v2053 = vsel %vm923, %v1923, 0
        %v2056 = vsel %vm923, %v1924, 0
        %v2059 = vsel %vm923, %v1925, 0
        %v2062 = vsel %vm923, %v1926, 0
        %2064 = vmatprep.subr.bf16.mxu0 0
        %2065 = vmatpush1.bf16.msra.mxu0 %v1960
        %2066 = vmatprep.subr.bf16.mxu0 0
        %2067 = vmatpush1.bf16.msra.mxu0 %v1961
        %2068 = vmatprep.subr.bf16.mxu0 0
        %2069 = vmatpush1.bf16.msra.mxu0 %v1962
        %2070 = vmatprep.subr.bf16.mxu0 0
        %2071 = vmatpush1.bf16.msra.mxu0 %v1963
        %2072 = vmatprep.subr.bf16.mxu0 0
        %2073 = vmatpush1.bf16.msra.mxu0 0
        %2074 = vmatprep.subr.bf16.mxu0 0
        %2075 = vmatpush1.bf16.msra.mxu0 0
        %2076 = vmatprep.subr.bf16.mxu0 0
        %2077 = vmatpush1.bf16.msra.mxu0 0
        %2078 = vmatprep.subr.bf16.mxu0 0
        %2079 = vmatpush1.bf16.msra.mxu0 0
        %2080 = vmatprep.subr.bf16.mxu0 0
        %2081 = vmatpush1.bf16.msra.mxu0 0
        %2082 = vmatprep.subr.bf16.mxu0 0
        %2083 = vmatpush1.bf16.msra.mxu0 0
        %2084 = vmatprep.subr.bf16.mxu0 0
        %2085 = vmatpush1.bf16.msra.mxu0 0
        %2086 = vmatprep.subr.bf16.mxu0 0
        %2087 = vmatpush1.bf16.msra.mxu0 0
        %2088 = vmatprep.subr.bf16.mxu0 0
        %2089 = vmatpush1.bf16.msra.mxu0 0
        %2090 = vmatprep.subr.bf16.mxu0 0
        %2091 = vmatpush1.bf16.msra.mxu0 0
        %2092 = vmatprep.subr.bf16.mxu0 0
        %2093 = vmatpush1.bf16.msra.mxu0 0
        %2094 = vmatprep.subr.bf16.mxu0 0
        %2095 = vmatpush1.bf16.msra.mxu0 0
        %2096 = vmatprep.mubr.bf16.mxu0 0
        %2097 = vmatmul.mubr.bf16.gmra.mrb[0].mxu0 %v1969
        %v2098 = vpop.f32.mrb[0].mxu0
        %v2099 = vadd.f32 %v1942, %v2098
        %v2100 = vpop.f32.mrb[0].mxu0
        %v2101 = vpop.f32.mrb[0].mxu0
        %v2102 = vadd.f32 %v1942, %v2101
        %v2103 = vpop.f32.mrb[0].mxu0
        %2104 = vmatprep.mubr.bf16.mxu0 0
        %2105 = vmatmul.mubr.bf16.gmra.mrb[0].mxu0 %v1972
        %v2106 = vpop.f32.mrb[0].mxu0
        %v2107 = vadd.f32 %v1942, %v2106
        %v2108 = vpop.f32.mrb[0].mxu0
        %v2109 = vpop.f32.mrb[0].mxu0
        %v2110 = vadd.f32 %v1942, %v2109
        %v2111 = vpop.f32.mrb[0].mxu0
        %2112 = vmatprep.mubr.bf16.mxu0 0
        %2113 = vmatmul.mubr.bf16.gmra.mrb[0].mxu0 %v1975
        %v2114 = vpop.f32.mrb[0].mxu0
        %v2115 = vadd.f32 %v1942, %v2114
        %v2116 = vpop.f32.mrb[0].mxu0
        %v2117 = vpop.f32.mrb[0].mxu0
        %v2118 = vadd.f32 %v1942, %v2117
        %v2119 = vpop.f32.mrb[0].mxu0
        %2120 = vmatprep.mubr.bf16.mxu0 0
        %2121 = vmatmul.mubr.bf16.gmra.mrb[0].mxu0 %v1978
        %v2122 = vpop.f32.mrb[0].mxu0
        %v2123 = vadd.f32 %v1942, %v2122
        %v2124 = vpop.f32.mrb[0].mxu0
        %v2125 = vpop.f32.mrb[0].mxu0
        %v2126 = vadd.f32 %v1942, %v2125
        %v2127 = vpop.f32.mrb[0].mxu0
        %2128 = vmatprep.mubr.bf16.mxu0 0
        %2129 = vmatmul.mubr.bf16.gmra.mrb[0].mxu0 %v1981
        %v2130 = vpop.f32.mrb[0].mxu0
        %v2131 = vadd.f32 %v1942, %v2130
        %v2132 = vpop.f32.mrb[0].mxu0
        %v2133 = vpop.f32.mrb[0].mxu0
        %v2134 = vadd.f32 %v1942, %v2133
        %v2135 = vpop.f32.mrb[0].mxu0
        %2136 = vmatprep.mubr.bf16.mxu0 0
        %2137 = vmatmul.mubr.bf16.gmra.mrb[0].mxu0 %v1984
        %v2138 = vpop.f32.mrb[0].mxu0
        %v2139 = vadd.f32 %v1942, %v2138
        %v2140 = vpop.f32.mrb[0].mxu0
        %v2141 = vpop.f32.mrb[0].mxu0
        %v2142 = vadd.f32 %v1942, %v2141
        %v2143 = vpop.f32.mrb[0].mxu0
        %2144 = vmatprep.mubr.bf16.mxu0 0
        %2145 = vmatmul.mubr.bf16.gmra.mrb[0].mxu0 %v1987
        %v2146 = vpop.f32.mrb[0].mxu0
        %v2147 = vadd.f32 %v1942, %v2146
        %v2148 = vpop.f32.mrb[0].mxu0
        %v2149 = vpop.f32.mrb[0].mxu0
        %v2150 = vadd.f32 %v1942, %v2149
        %v2151 = vpop.f32.mrb[0].mxu0
        %2152 = vmatprep.mubr.bf16.mxu0 0
        %2153 = vmatmul.mubr.bf16.gmra.mrb[0].mxu0 %v1990
        %v2154 = vpop.f32.mrb[0].mxu0
        %v2155 = vadd.f32 %v1942, %v2154
        %v2156 = vpop.f32.mrb[0].mxu0
        %v2157 = vpop.f32.mrb[0].mxu0
        %v2158 = vadd.f32 %v1942, %v2157
        %v2159 = vpop.f32.mrb[0].mxu0
        %2160 = vmatprep.mubr.bf16.mxu0 0
        %2161 = vmatmul.mubr.bf16.gmra.mrb[0].mxu0 %v1993
        %v2162 = vpop.f32.mrb[0].mxu0
        %v2163 = vadd.f32 %v1942, %v2162
        %v2164 = vpop.f32.mrb[0].mxu0
        %v2165 = vpop.f32.mrb[0].mxu0
        %v2166 = vadd.f32 %v1942, %v2165
        %v2167 = vpop.f32.mrb[0].mxu0
        %2168 = vmatprep.mubr.bf16.mxu0 0
        %2169 = vmatmul.mubr.bf16.gmra.mrb[0].mxu0 %v1996
        %v2170 = vpop.f32.mrb[0].mxu0
        %v2171 = vadd.f32 %v1942, %v2170
        %v2172 = vpop.f32.mrb[0].mxu0
        %v2173 = vpop.f32.mrb[0].mxu0
        %v2174 = vadd.f32 %v1942, %v2173
        %v2175 = vpop.f32.mrb[0].mxu0
        %2176 = vmatprep.mubr.bf16.mxu0 0
        %2177 = vmatmul.mubr.bf16.gmra.mrb[0].mxu0 %v1999
        %v2178 = vpop.f32.mrb[0].mxu0
        %v2179 = vadd.f32 %v1942, %v2178
        %v2180 = vpop.f32.mrb[0].mxu0
        %v2181 = vpop.f32.mrb[0].mxu0
        %v2182 = vadd.f32 %v1942, %v2181
        %v2183 = vpop.f32.mrb[0].mxu0
        %2184 = vmatprep.mubr.bf16.mxu0 0
        %2185 = vmatmul.mubr.bf16.gmra.mrb[0].mxu0 %v2002
        %v2186 = vpop.f32.mrb[0].mxu0
        %v2187 = vadd.f32 %v1942, %v2186
        %v2188 = vpop.f32.mrb[0].mxu0
        %v2189 = vpop.f32.mrb[0].mxu0
        %v2190 = vadd.f32 %v1942, %v2189
        %v2191 = vpop.f32.mrb[0].mxu0
        %2192 = vmatprep.mubr.bf16.mxu0 0
        %2193 = vmatmul.mubr.bf16.gmra.mrb[0].mxu0 %v2005
        %v2194 = vpop.f32.mrb[0].mxu0
        %v2195 = vadd.f32 %v1942, %v2194
        %v2196 = vpop.f32.mrb[0].mxu0
        %v2197 = vpop.f32.mrb[0].mxu0
        %v2198 = vadd.f32 %v1942, %v2197
        %v2199 = vpop.f32.mrb[0].mxu0
        %2200 = vmatprep.mubr.bf16.mxu0 0
        %2201 = vmatmul.mubr.bf16.gmra.mrb[0].mxu0 %v2008
        %v2202 = vpop.f32.mrb[0].mxu0
        %v2203 = vadd.f32 %v1942, %v2202
        %v2204 = vpop.f32.mrb[0].mxu0
        %v2205 = vpop.f32.mrb[0].mxu0
        %v2206 = vadd.f32 %v1942, %v2205
        %v2207 = vpop.f32.mrb[0].mxu0
        %2208 = vmatprep.mubr.bf16.mxu0 0
        %2209 = vmatmul.mubr.bf16.gmra.mrb[0].mxu0 %v2011
        %v2210 = vpop.f32.mrb[0].mxu0
        %v2211 = vadd.f32 %v1942, %v2210
        %v2212 = vpop.f32.mrb[0].mxu0
        %v2213 = vpop.f32.mrb[0].mxu0
        %v2214 = vadd.f32 %v1942, %v2213
        %v2215 = vpop.f32.mrb[0].mxu0
        %2216 = vmatprep.mubr.bf16.mxu0 0
        %2217 = vmatmul.mubr.bf16.gmra.mrb[0].mxu0 %v2014
        %v2218 = vpop.f32.mrb[0].mxu0
        %v2219 = vadd.f32 %v1942, %v2218
        %v2220 = vpop.f32.mrb[0].mxu0
        %v2221 = vpop.f32.mrb[0].mxu0
        %v2222 = vadd.f32 %v1942, %v2221
        %v2223 = vpop.f32.mrb[0].mxu0
        %2224 = vmatprep.mubr.bf16.mxu0 0
        %2225 = vmatmul.mubr.bf16.gmra.mrb[0].mxu0 %v2017
        %v2226 = vpop.f32.mrb[0].mxu0
        %v2227 = vadd.f32 %v1942, %v2226
        %v2228 = vpop.f32.mrb[0].mxu0
        %v2229 = vpop.f32.mrb[0].mxu0
        %v2230 = vadd.f32 %v1942, %v2229
        %v2231 = vpop.f32.mrb[0].mxu0
        %2232 = vmatprep.mubr.bf16.mxu0 0
        %2233 = vmatmul.mubr.bf16.gmra.mrb[0].mxu0 %v2020
        %v2234 = vpop.f32.mrb[0].mxu0
        %v2235 = vadd.f32 %v1942, %v2234
        %v2236 = vpop.f32.mrb[0].mxu0
        %v2237 = vpop.f32.mrb[0].mxu0
        %v2238 = vadd.f32 %v1942, %v2237
        %v2239 = vpop.f32.mrb[0].mxu0
        %2240 = vmatprep.mubr.bf16.mxu0 0
        %2241 = vmatmul.mubr.bf16.gmra.mrb[0].mxu0 %v2023
        %v2242 = vpop.f32.mrb[0].mxu0
        %v2243 = vadd.f32 %v1942, %v2242
        %v2244 = vpop.f32.mrb[0].mxu0
        %v2245 = vpop.f32.mrb[0].mxu0
        %v2246 = vadd.f32 %v1942, %v2245
        %v2247 = vpop.f32.mrb[0].mxu0
        %2248 = vmatprep.mubr.bf16.mxu0 0
        %2249 = vmatmul.mubr.bf16.gmra.mrb[0].mxu0 %v2026
        %v2250 = vpop.f32.mrb[0].mxu0
        %v2251 = vadd.f32 %v1942, %v2250
        %v2252 = vpop.f32.mrb[0].mxu0
        %v2253 = vpop.f32.mrb[0].mxu0
        %v2254 = vadd.f32 %v1942, %v2253
        %v2255 = vpop.f32.mrb[0].mxu0
        %2256 = vmatprep.mubr.bf16.mxu0 0
        %2257 = vmatmul.mubr.bf16.gmra.mrb[0].mxu0 %v2029
        %v2258 = vpop.f32.mrb[0].mxu0
        %v2259 = vadd.f32 %v1942, %v2258
        %v2260 = vpop.f32.mrb[0].mxu0
        %v2261 = vpop.f32.mrb[0].mxu0
        %v2262 = vadd.f32 %v1942, %v2261
        %v2263 = vpop.f32.mrb[0].mxu0
        %2264 = vmatprep.mubr.bf16.mxu0 0
        %2265 = vmatmul.mubr.bf16.gmra.mrb[0].mxu0 %v2032
        %v2266 = vpop.f32.mrb[0].mxu0
        %v2267 = vadd.f32 %v1942, %v2266
        %v2268 = vpop.f32.mrb[0].mxu0
        %v2269 = vpop.f32.mrb[0].mxu0
        %v2270 = vadd.f32 %v1942, %v2269
        %v2271 = vpop.f32.mrb[0].mxu0
        %2272 = vmatprep.mubr.bf16.mxu0 0
        %2273 = vmatmul.mubr.bf16.gmra.mrb[0].mxu0 %v2035
        %v2274 = vpop.f32.mrb[0].mxu0
        %v2275 = vadd.f32 %v1942, %v2274
        %v2276 = vpop.f32.mrb[0].mxu0
        %v2277 = vpop.f32.mrb[0].mxu0
        %v2278 = vadd.f32 %v1942, %v2277
        %v2279 = vpop.f32.mrb[0].mxu0
        %2280 = vmatprep.mubr.bf16.mxu0 0
        %2281 = vmatmul.mubr.bf16.gmra.mrb[0].mxu0 %v2038
        %v2282 = vpop.f32.mrb[0].mxu0
        %v2283 = vadd.f32 %v1942, %v2282
        %v2284 = vpop.f32.mrb[0].mxu0
        %v2285 = vpop.f32.mrb[0].mxu0
        %v2286 = vadd.f32 %v1942, %v2285
        %v2287 = vpop.f32.mrb[0].mxu0
        %2288 = vmatprep.mubr.bf16.mxu0 0
        %2289 = vmatmul.mubr.bf16.gmra.mrb[0].mxu0 %v2041
        %v2290 = vpop.f32.mrb[0].mxu0
        %v2291 = vadd.f32 %v1942, %v2290
        %v2292 = vpop.f32.mrb[0].mxu0
        %v2293 = vpop.f32.mrb[0].mxu0
        %v2294 = vadd.f32 %v1942, %v2293
        %v2295 = vpop.f32.mrb[0].mxu0
        %2296 = vmatprep.mubr.bf16.mxu0 0
        %2297 = vmatmul.mubr.bf16.gmra.mrb[0].mxu0 %v2044
        %v2298 = vpop.f32.mrb[0].mxu0
        %v2299 = vadd.f32 %v1942, %v2298
        %v2300 = vpop.f32.mrb[0].mxu0
        %v2301 = vpop.f32.mrb[0].mxu0
        %v2302 = vadd.f32 %v1942, %v2301
        %v2303 = vpop.f32.mrb[0].mxu0
        %2304 = vmatprep.mubr.bf16.mxu0 0
        %2305 = vmatmul.mubr.bf16.gmra.mrb[0].mxu0 %v2047
        %v2306 = vpop.f32.mrb[0].mxu0
        %v2307 = vadd.f32 %v1942, %v2306
        %v2308 = vpop.f32.mrb[0].mxu0
        %v2309 = vpop.f32.mrb[0].mxu0
        %v2310 = vadd.f32 %v1942, %v2309
        %v2311 = vpop.f32.mrb[0].mxu0
        %2312 = vmatprep.mubr.bf16.mxu0 0
        %2313 = vmatmul.mubr.bf16.gmra.mrb[0].mxu0 %v2050
        %v2314 = vpop.f32.mrb[0].mxu0
        %v2315 = vadd.f32 %v1942, %v2314
        %v2316 = vpop.f32.mrb[0].mxu0
        %v2317 = vpop.f32.mrb[0].mxu0
        %v2318 = vadd.f32 %v1942, %v2317
        %v2319 = vpop.f32.mrb[0].mxu0
        %2320 = vmatprep.mubr.bf16.mxu0 0
        %2321 = vmatmul.mubr.bf16.gmra.mrb[0].mxu0 %v2053
        %v2322 = vpop.f32.mrb[0].mxu0
        %v2323 = vadd.f32 %v1942, %v2322
        %v2324 = vpop.f32.mrb[0].mxu0
        %v2325 = vpop.f32.mrb[0].mxu0
        %v2326 = vadd.f32 %v1942, %v2325
        %v2327 = vpop.f32.mrb[0].mxu0
        %2328 = vmatprep.mubr.bf16.mxu0 0
        %2329 = vmatmul.mubr.bf16.gmra.mrb[0].mxu0 %v2056
        %v2330 = vpop.f32.mrb[0].mxu0
        %v2331 = vadd.f32 %v1942, %v2330
        %v2332 = vpop.f32.mrb[0].mxu0
        %v2333 = vpop.f32.mrb[0].mxu0
        %v2334 = vadd.f32 %v1942, %v2333
        %v2335 = vpop.f32.mrb[0].mxu0
        %2336 = vmatprep.mubr.bf16.mxu0 0
        %2337 = vmatmul.mubr.bf16.gmra.mrb[0].mxu0 %v2059
        %v2338 = vpop.f32.mrb[0].mxu0
        %v2339 = vadd.f32 %v1942, %v2338
        %v2340 = vpop.f32.mrb[0].mxu0
        %v2341 = vpop.f32.mrb[0].mxu0
        %v2342 = vadd.f32 %v1942, %v2341
        %v2343 = vpop.f32.mrb[0].mxu0
        %2344 = vmatprep.mubr.bf16.mxu0 0
        %2345 = vmatmul.mubr.bf16.gmra.mrb[0].mxu0 %v2062
        %v2346 = vpop.f32.mrb[0].mxu0
        %v2347 = vadd.f32 %v1942, %v2346
        %v2348 = vpop.f32.mrb[0].mxu0
        %v2349 = vpop.f32.mrb[0].mxu0
        %v2350 = vadd.f32 %v1942, %v2349
        %v2351 = vpop.f32.mrb[0].mxu0
        %2352 = vdwg.mxu0
        %v2353 = vmax.f32 %v2099, 0.0
        %v2354 = vmax.f32 %v2102, 0.0
        %v2355 = vmax.f32 %v2107, 0.0
        %v2356 = vmax.f32 %v2110, 0.0
        %v2357 = vmax.f32 %v2115, 0.0
        %v2358 = vmax.f32 %v2118, 0.0
        %v2359 = vmax.f32 %v2123, 0.0
        %v2360 = vmax.f32 %v2126, 0.0
        %v2361 = vmax.f32 %v2131, 0.0
        %v2362 = vmax.f32 %v2134, 0.0
        %v2363 = vmax.f32 %v2139, 0.0
        %v2364 = vmax.f32 %v2142, 0.0
        %v2365 = vmax.f32 %v2147, 0.0
        %v2366 = vmax.f32 %v2150, 0.0
        %v2367 = vmax.f32 %v2155, 0.0
        %v2368 = vmax.f32 %v2158, 0.0
        %v2369 = vmax.f32 %v2163, 0.0
        %v2370 = vmax.f32 %v2166, 0.0
        %v2371 = vmax.f32 %v2171, 0.0
        %v2372 = vmax.f32 %v2174, 0.0
        %v2373 = vmax.f32 %v2179, 0.0
        %v2374 = vmax.f32 %v2182, 0.0
        %v2375 = vmax.f32 %v2187, 0.0
        %v2376 = vmax.f32 %v2190, 0.0
        %v2377 = vmax.f32 %v2195, 0.0
        %v2378 = vmax.f32 %v2198, 0.0
        %v2379 = vmax.f32 %v2203, 0.0
        %v2380 = vmax.f32 %v2206, 0.0
        %v2381 = vmax.f32 %v2211, 0.0
        %v2382 = vmax.f32 %v2214, 0.0
        %v2383 = vmax.f32 %v2219, 0.0
        %v2384 = vmax.f32 %v2222, 0.0
        %v2385 = vmax.f32 %v2227, 0.0
        %v2386 = vmax.f32 %v2230, 0.0
        %v2387 = vmax.f32 %v2235, 0.0
        %v2388 = vmax.f32 %v2238, 0.0
        %v2389 = vmax.f32 %v2243, 0.0
        %v2390 = vmax.f32 %v2246, 0.0
        %v2391 = vmax.f32 %v2251, 0.0
        %v2392 = vmax.f32 %v2254, 0.0
        %v2393 = vmax.f32 %v2259, 0.0
        %v2394 = vmax.f32 %v2262, 0.0
        %v2395 = vmax.f32 %v2267, 0.0
        %v2396 = vmax.f32 %v2270, 0.0
        %v2397 = vmax.f32 %v2275, 0.0
        %v2398 = vmax.f32 %v2278, 0.0
        %v2399 = vmax.f32 %v2283, 0.0
        %v2400 = vmax.f32 %v2286, 0.0
        %v2401 = vmax.f32 %v2291, 0.0
        %v2402 = vmax.f32 %v2294, 0.0
        %v2403 = vmax.f32 %v2299, 0.0
        %v2404 = vmax.f32 %v2302, 0.0
        %v2405 = vmax.f32 %v2307, 0.0
        %v2406 = vmax.f32 %v2310, 0.0
        %v2407 = vmax.f32 %v2315, 0.0
        %v2408 = vmax.f32 %v2318, 0.0
        %v2409 = vmax.f32 %v2323, 0.0
        %v2410 = vmax.f32 %v2326, 0.0
        %v2411 = vmax.f32 %v2331, 0.0
        %v2412 = vmax.f32 %v2334, 0.0
        %v2413 = vmax.f32 %v2339, 0.0
        %v2414 = vmax.f32 %v2342, 0.0
        %v2415 = vmax.f32 %v2347, 0.0
        %v2416 = vmax.f32 %v2350, 0.0
        %v2417 = vpack.c.bf16 %v2354, %v2353
        %v2418 = vpack.c.bf16 %v2356, %v2355
        %v2419 = vpack.c.bf16 %v2358, %v2357
        %v2420 = vpack.c.bf16 %v2360, %v2359
        %v2421 = vpack.c.bf16 %v2362, %v2361
        %v2422 = vpack.c.bf16 %v2364, %v2363
        %v2423 = vpack.c.bf16 %v2366, %v2365
        %v2424 = vpack.c.bf16 %v2368, %v2367
        %v2425 = vpack.c.bf16 %v2370, %v2369
        %v2426 = vpack.c.bf16 %v2372, %v2371
        %v2427 = vpack.c.bf16 %v2374, %v2373
        %v2428 = vpack.c.bf16 %v2376, %v2375
        %v2429 = vpack.c.bf16 %v2378, %v2377
        %v2430 = vpack.c.bf16 %v2380, %v2379
        %v2431 = vpack.c.bf16 %v2382, %v2381
        %v2432 = vpack.c.bf16 %v2384, %v2383
        %v2433 = vpack.c.bf16 %v2386, %v2385
        %v2434 = vpack.c.bf16 %v2388, %v2387
        %v2435 = vpack.c.bf16 %v2390, %v2389
        %v2436 = vpack.c.bf16 %v2392, %v2391
        %v2437 = vpack.c.bf16 %v2394, %v2393
        %v2438 = vpack.c.bf16 %v2396, %v2395
        %v2439 = vpack.c.bf16 %v2398, %v2397
        %v2440 = vpack.c.bf16 %v2400, %v2399
        %v2441 = vpack.c.bf16 %v2402, %v2401
        %v2442 = vpack.c.bf16 %v2404, %v2403
        %v2443 = vpack.c.bf16 %v2406, %v2405
        %v2444 = vpack.c.bf16 %v2408, %v2407
        %v2445 = vpack.c.bf16 %v2410, %v2409
        %v2446 = vpack.c.bf16 %v2412, %v2411
        %v2447 = vpack.c.bf16 %v2414, %v2413
        %v2448 = vpack.c.bf16 %v2416, %v2415
        %s2449 = scalar_lea.vmem %s2, 96
        %v2450 = vld [vmem:[%s2449] sm:$0xf]
        %v2451 = vld [vmem:[%s2449 + $0x4] sm:$0xf]
        %v2452 = vld [vmem:[%s2449 + $0x8] sm:$0xf]
        %v2453 = vld [vmem:[%s2449 + $0xc] sm:$0xf]
        %v2454 = vld [vmem:[%s2449 + $0x10] sm:$0xf]
        %v2455 = vld [vmem:[%s2449 + $0x14] sm:$0xf]
        %v2456 = vld [vmem:[%s2449 + $0x18] sm:$0xf]
        %v2457 = vld [vmem:[%s2449 + $0x1c] sm:$0xf]
        %s2458 = scalar_lea.vmem %s1, 20
        %v2459 = vld [vmem:[%s2458] sm:$0xf]
        %v2460 = vld [vmem:[%s2458 + $0x4] sm:$0xf]
        %v2461 = vld [vmem:[%s2458 + $0x8] sm:$0xf]
        %v2462 = vld [vmem:[%s2458 + $0xc] sm:$0xf]
        %v2463 = vld [vmem:[%s2458 + $0x10] sm:$0x1]
        %v2469 = vunpack.c.l.b16 %v2459
        %v2470 = vunpack.c.l.b16 %v2460
        %v2471 = vunpack.c.l.b16 %v2461
        %v2472 = vunpack.c.l.b16 %v2462
        %v2473 = vunpack.c.l.b16 %v2463
        %v2474 = vpack.c.b16 %v2470, %v2469
        %v2475 = vpack.c.b16 %v2472, %v2471
        %v2476 = vpack.c.b16 %v2473, %v2473
        %v2480 = vsel %vm494, %v2476, 0
        %2482 = vmatprep.subr.bf16.mxu0 0
        %2483 = vmatpush1.bf16.msra.mxu0 %v2474
        %2484 = vmatprep.subr.bf16.mxu0 0
        %2485 = vmatpush1.bf16.msra.mxu0 %v2475
        %2486 = vmatprep.subr.bf16.mxu0 0
        %2487 = vmatpush1.bf16.msra.mxu0 %v2480
        %2488 = vmatprep.subr.bf16.mxu0 0
        %2489 = vmatpush1.bf16.msra.mxu0 0
        %2490 = vmatprep.subr.bf16.mxu0 0
        %2491 = vmatpush1.bf16.msra.mxu0 0
        %2492 = vmatprep.subr.bf16.mxu0 0
        %2493 = vmatpush1.bf16.msra.mxu0 0
        %2494 = vmatprep.subr.bf16.mxu0 0
        %2495 = vmatpush1.bf16.msra.mxu0 0
        %2496 = vmatprep.subr.bf16.mxu0 0
        %2497 = vmatpush1.bf16.msra.mxu0 0
        %2498 = vmatprep.subr.bf16.mxu0 0
        %2499 = vmatpush1.bf16.msra.mxu0 0
        %2500 = vmatprep.subr.bf16.mxu0 0
        %2501 = vmatpush1.bf16.msra.mxu0 0
        %2502 = vmatprep.subr.bf16.mxu0 0
        %2503 = vmatpush1.bf16.msra.mxu0 0
        %2504 = vmatprep.subr.bf16.mxu0 0
        %2505 = vmatpush1.bf16.msra.mxu0 0
        %2506 = vmatprep.subr.bf16.mxu0 0
        %2507 = vmatpush1.bf16.msra.mxu0 0
        %2508 = vmatprep.subr.bf16.mxu0 0
        %2509 = vmatpush1.bf16.msra.mxu0 0
        %2510 = vmatprep.subr.bf16.mxu0 0
        %2511 = vmatpush1.bf16.msra.mxu0 0
        %2512 = vmatprep.subr.bf16.mxu0 0
        %2513 = vmatpush1.bf16.msra.mxu0 0
        %2514 = vmatprep.mubr.bf16.mxu0 0
        %2515 = vmatmul.mubr.bf16.gmra.mrb[0].mxu0 %v399
        %v2516 = vpop.f32.mrb[0].mxu0
        %v2517 = vadd.f32 0.0, %v2516
        %v2518 = vpop.f32.mrb[0].mxu0
        %v2519 = vpop.f32.mrb[0].mxu0
        %v2520 = vadd.f32 0.0, %v2519
        %v2521 = vpop.f32.mrb[0].mxu0
        %2522 = vmatprep.mubr.bf16.mxu0 0
        %2523 = vmatmul.mubr.bf16.gmra.mrb[0].mxu0 %v402
        %v2524 = vpop.f32.mrb[0].mxu0
        %v2525 = vadd.f32 0.0, %v2524
        %v2526 = vpop.f32.mrb[0].mxu0
        %v2527 = vpop.f32.mrb[0].mxu0
        %v2528 = vadd.f32 0.0, %v2527
        %v2529 = vpop.f32.mrb[0].mxu0
        %2530 = vmatprep.mubr.bf16.mxu0 0
        %2531 = vmatmul.mubr.bf16.gmra.mrb[0].mxu0 %v405
        %v2532 = vpop.f32.mrb[0].mxu0
        %v2533 = vadd.f32 0.0, %v2532
        %v2534 = vpop.f32.mrb[0].mxu0
        %v2535 = vpop.f32.mrb[0].mxu0
        %v2536 = vadd.f32 0.0, %v2535
        %v2537 = vpop.f32.mrb[0].mxu0
        %2538 = vmatprep.mubr.bf16.mxu0 0
        %2539 = vmatmul.mubr.bf16.gmra.mrb[0].mxu0 %v408
        %v2540 = vpop.f32.mrb[0].mxu0
        %v2541 = vadd.f32 0.0, %v2540
        %v2542 = vpop.f32.mrb[0].mxu0
        %v2543 = vpop.f32.mrb[0].mxu0
        %v2544 = vadd.f32 0.0, %v2543
        %v2545 = vpop.f32.mrb[0].mxu0
        %2546 = vmatprep.mubr.bf16.mxu0 0
        %2547 = vmatmul.mubr.bf16.gmra.mrb[0].mxu0 %v411
        %v2548 = vpop.f32.mrb[0].mxu0
        %v2549 = vadd.f32 0.0, %v2548
        %v2550 = vpop.f32.mrb[0].mxu0
        %v2551 = vpop.f32.mrb[0].mxu0
        %v2552 = vadd.f32 0.0, %v2551
        %v2553 = vpop.f32.mrb[0].mxu0
        %2554 = vmatprep.mubr.bf16.mxu0 0
        %2555 = vmatmul.mubr.bf16.gmra.mrb[0].mxu0 %v414
        %v2556 = vpop.f32.mrb[0].mxu0
        %v2557 = vadd.f32 0.0, %v2556
        %v2558 = vpop.f32.mrb[0].mxu0
        %v2559 = vpop.f32.mrb[0].mxu0
        %v2560 = vadd.f32 0.0, %v2559
        %v2561 = vpop.f32.mrb[0].mxu0
        %2562 = vmatprep.mubr.bf16.mxu0 0
        %2563 = vmatmul.mubr.bf16.gmra.mrb[0].mxu0 %v417
        %v2564 = vpop.f32.mrb[0].mxu0
        %v2565 = vadd.f32 0.0, %v2564
        %v2566 = vpop.f32.mrb[0].mxu0
        %v2567 = vpop.f32.mrb[0].mxu0
        %v2568 = vadd.f32 0.0, %v2567
        %v2569 = vpop.f32.mrb[0].mxu0
        %2570 = vmatprep.mubr.bf16.mxu0 0
        %2571 = vmatmul.mubr.bf16.gmra.mrb[0].mxu0 %v420
        %v2572 = vpop.f32.mrb[0].mxu0
        %v2573 = vadd.f32 0.0, %v2572
        %v2574 = vpop.f32.mrb[0].mxu0
        %v2575 = vpop.f32.mrb[0].mxu0
        %v2576 = vadd.f32 0.0, %v2575
        %v2577 = vpop.f32.mrb[0].mxu0
        %2578 = vmatprep.mubr.bf16.mxu0 0
        %2579 = vmatmul.mubr.bf16.gmra.mrb[0].mxu0 %v423
        %v2580 = vpop.f32.mrb[0].mxu0
        %v2581 = vadd.f32 0.0, %v2580
        %v2582 = vpop.f32.mrb[0].mxu0
        %v2583 = vpop.f32.mrb[0].mxu0
        %v2584 = vadd.f32 0.0, %v2583
        %v2585 = vpop.f32.mrb[0].mxu0
        %2586 = vmatprep.mubr.bf16.mxu0 0
        %2587 = vmatmul.mubr.bf16.gmra.mrb[0].mxu0 %v426
        %v2588 = vpop.f32.mrb[0].mxu0
        %v2589 = vadd.f32 0.0, %v2588
        %v2590 = vpop.f32.mrb[0].mxu0
        %v2591 = vpop.f32.mrb[0].mxu0
        %v2592 = vadd.f32 0.0, %v2591
        %v2593 = vpop.f32.mrb[0].mxu0
        %2594 = vmatprep.mubr.bf16.mxu0 0
        %2595 = vmatmul.mubr.bf16.gmra.mrb[0].mxu0 %v429
        %v2596 = vpop.f32.mrb[0].mxu0
        %v2597 = vadd.f32 0.0, %v2596
        %v2598 = vpop.f32.mrb[0].mxu0
        %v2599 = vpop.f32.mrb[0].mxu0
        %v2600 = vadd.f32 0.0, %v2599
        %v2601 = vpop.f32.mrb[0].mxu0
        %2602 = vmatprep.mubr.bf16.mxu0 0
        %2603 = vmatmul.mubr.bf16.gmra.mrb[0].mxu0 %v432
        %v2604 = vpop.f32.mrb[0].mxu0
        %v2605 = vadd.f32 0.0, %v2604
        %v2606 = vpop.f32.mrb[0].mxu0
        %v2607 = vpop.f32.mrb[0].mxu0
        %v2608 = vadd.f32 0.0, %v2607
        %v2609 = vpop.f32.mrb[0].mxu0
        %2610 = vmatprep.mubr.bf16.mxu0 0
        %2611 = vmatmul.mubr.bf16.gmra.mrb[0].mxu0 %v435
        %v2612 = vpop.f32.mrb[0].mxu0
        %v2613 = vadd.f32 0.0, %v2612
        %v2614 = vpop.f32.mrb[0].mxu0
        %v2615 = vpop.f32.mrb[0].mxu0
        %v2616 = vadd.f32 0.0, %v2615
        %v2617 = vpop.f32.mrb[0].mxu0
        %2618 = vmatprep.mubr.bf16.mxu0 0
        %2619 = vmatmul.mubr.bf16.gmra.mrb[0].mxu0 %v438
        %v2620 = vpop.f32.mrb[0].mxu0
        %v2621 = vadd.f32 0.0, %v2620
        %v2622 = vpop.f32.mrb[0].mxu0
        %v2623 = vpop.f32.mrb[0].mxu0
        %v2624 = vadd.f32 0.0, %v2623
        %v2625 = vpop.f32.mrb[0].mxu0
        %2626 = vmatprep.mubr.bf16.mxu0 0
        %2627 = vmatmul.mubr.bf16.gmra.mrb[0].mxu0 %v441
        %v2628 = vpop.f32.mrb[0].mxu0
        %v2629 = vadd.f32 0.0, %v2628
        %v2630 = vpop.f32.mrb[0].mxu0
        %v2631 = vpop.f32.mrb[0].mxu0
        %v2632 = vadd.f32 0.0, %v2631
        %v2633 = vpop.f32.mrb[0].mxu0
        %2634 = vmatprep.mubr.bf16.mxu0 0
        %2635 = vmatmul.mubr.bf16.gmra.mrb[0].mxu0 %v444
        %v2636 = vpop.f32.mrb[0].mxu0
        %v2637 = vadd.f32 0.0, %v2636
        %v2638 = vpop.f32.mrb[0].mxu0
        %v2639 = vpop.f32.mrb[0].mxu0
        %v2640 = vadd.f32 0.0, %v2639
        %v2641 = vpop.f32.mrb[0].mxu0
        %2642 = vmatprep.mubr.bf16.mxu0 0
        %2643 = vmatmul.mubr.bf16.gmra.mrb[0].mxu0 %v447
        %v2644 = vpop.f32.mrb[0].mxu0
        %v2645 = vadd.f32 0.0, %v2644
        %v2646 = vpop.f32.mrb[0].mxu0
        %v2647 = vpop.f32.mrb[0].mxu0
        %v2648 = vadd.f32 0.0, %v2647
        %v2649 = vpop.f32.mrb[0].mxu0
        %2650 = vmatprep.mubr.bf16.mxu0 0
        %2651 = vmatmul.mubr.bf16.gmra.mrb[0].mxu0 %v450
        %v2652 = vpop.f32.mrb[0].mxu0
        %v2653 = vadd.f32 0.0, %v2652
        %v2654 = vpop.f32.mrb[0].mxu0
        %v2655 = vpop.f32.mrb[0].mxu0
        %v2656 = vadd.f32 0.0, %v2655
        %v2657 = vpop.f32.mrb[0].mxu0
        %2658 = vmatprep.mubr.bf16.mxu0 0
        %2659 = vmatmul.mubr.bf16.gmra.mrb[0].mxu0 %v453
        %v2660 = vpop.f32.mrb[0].mxu0
        %v2661 = vadd.f32 0.0, %v2660
        %v2662 = vpop.f32.mrb[0].mxu0
        %v2663 = vpop.f32.mrb[0].mxu0
        %v2664 = vadd.f32 0.0, %v2663
        %v2665 = vpop.f32.mrb[0].mxu0
        %2666 = vmatprep.mubr.bf16.mxu0 0
        %2667 = vmatmul.mubr.bf16.gmra.mrb[0].mxu0 %v456
        %v2668 = vpop.f32.mrb[0].mxu0
        %v2669 = vadd.f32 0.0, %v2668
        %v2670 = vpop.f32.mrb[0].mxu0
        %v2671 = vpop.f32.mrb[0].mxu0
        %v2672 = vadd.f32 0.0, %v2671
        %v2673 = vpop.f32.mrb[0].mxu0
        %2674 = vmatprep.mubr.bf16.mxu0 0
        %2675 = vmatmul.mubr.bf16.gmra.mrb[0].mxu0 %v459
        %v2676 = vpop.f32.mrb[0].mxu0
        %v2677 = vadd.f32 0.0, %v2676
        %v2678 = vpop.f32.mrb[0].mxu0
        %v2679 = vpop.f32.mrb[0].mxu0
        %v2680 = vadd.f32 0.0, %v2679
        %v2681 = vpop.f32.mrb[0].mxu0
        %2682 = vmatprep.mubr.bf16.mxu0 0
        %2683 = vmatmul.mubr.bf16.gmra.mrb[0].mxu0 %v462
        %v2684 = vpop.f32.mrb[0].mxu0
        %v2685 = vadd.f32 0.0, %v2684
        %v2686 = vpop.f32.mrb[0].mxu0
        %v2687 = vpop.f32.mrb[0].mxu0
        %v2688 = vadd.f32 0.0, %v2687
        %v2689 = vpop.f32.mrb[0].mxu0
        %2690 = vmatprep.mubr.bf16.mxu0 0
        %2691 = vmatmul.mubr.bf16.gmra.mrb[0].mxu0 %v465
        %v2692 = vpop.f32.mrb[0].mxu0
        %v2693 = vadd.f32 0.0, %v2692
        %v2694 = vpop.f32.mrb[0].mxu0
        %v2695 = vpop.f32.mrb[0].mxu0
        %v2696 = vadd.f32 0.0, %v2695
        %v2697 = vpop.f32.mrb[0].mxu0
        %2698 = vmatprep.mubr.bf16.mxu0 0
        %2699 = vmatmul.mubr.bf16.gmra.mrb[0].mxu0 %v468
        %v2700 = vpop.f32.mrb[0].mxu0
        %v2701 = vadd.f32 0.0, %v2700
        %v2702 = vpop.f32.mrb[0].mxu0
        %v2703 = vpop.f32.mrb[0].mxu0
        %v2704 = vadd.f32 0.0, %v2703
        %v2705 = vpop.f32.mrb[0].mxu0
        %2706 = vmatprep.mubr.bf16.mxu0 0
        %2707 = vmatmul.mubr.bf16.gmra.mrb[0].mxu0 %v471
        %v2708 = vpop.f32.mrb[0].mxu0
        %v2709 = vadd.f32 0.0, %v2708
        %v2710 = vpop.f32.mrb[0].mxu0
        %v2711 = vpop.f32.mrb[0].mxu0
        %v2712 = vadd.f32 0.0, %v2711
        %v2713 = vpop.f32.mrb[0].mxu0
        %2714 = vmatprep.mubr.bf16.mxu0 0
        %2715 = vmatmul.mubr.bf16.gmra.mrb[0].mxu0 %v474
        %v2716 = vpop.f32.mrb[0].mxu0
        %v2717 = vadd.f32 0.0, %v2716
        %v2718 = vpop.f32.mrb[0].mxu0
        %v2719 = vpop.f32.mrb[0].mxu0
        %v2720 = vadd.f32 0.0, %v2719
        %v2721 = vpop.f32.mrb[0].mxu0
        %2722 = vmatprep.mubr.bf16.mxu0 0
        %2723 = vmatmul.mubr.bf16.gmra.mrb[0].mxu0 %v477
        %v2724 = vpop.f32.mrb[0].mxu0
        %v2725 = vadd.f32 0.0, %v2724
        %v2726 = vpop.f32.mrb[0].mxu0
        %v2727 = vpop.f32.mrb[0].mxu0
        %v2728 = vadd.f32 0.0, %v2727
        %v2729 = vpop.f32.mrb[0].mxu0
        %2730 = vmatprep.mubr.bf16.mxu0 0
        %2731 = vmatmul.mubr.bf16.gmra.mrb[0].mxu0 %v480
        %v2732 = vpop.f32.mrb[0].mxu0
        %v2733 = vadd.f32 0.0, %v2732
        %v2734 = vpop.f32.mrb[0].mxu0
        %v2735 = vpop.f32.mrb[0].mxu0
        %v2736 = vadd.f32 0.0, %v2735
        %v2737 = vpop.f32.mrb[0].mxu0
        %2738 = vmatprep.mubr.bf16.mxu0 0
        %2739 = vmatmul.mubr.bf16.gmra.mrb[0].mxu0 %v483
        %v2740 = vpop.f32.mrb[0].mxu0
        %v2741 = vadd.f32 0.0, %v2740
        %v2742 = vpop.f32.mrb[0].mxu0
        %v2743 = vpop.f32.mrb[0].mxu0
        %v2744 = vadd.f32 0.0, %v2743
        %v2745 = vpop.f32.mrb[0].mxu0
        %2746 = vmatprep.mubr.bf16.mxu0 0
        %2747 = vmatmul.mubr.bf16.gmra.mrb[0].mxu0 %v486
        %v2748 = vpop.f32.mrb[0].mxu0
        %v2749 = vadd.f32 0.0, %v2748
        %v2750 = vpop.f32.mrb[0].mxu0
        %v2751 = vpop.f32.mrb[0].mxu0
        %v2752 = vadd.f32 0.0, %v2751
        %v2753 = vpop.f32.mrb[0].mxu0
        %2754 = vmatprep.mubr.bf16.mxu0 0
        %2755 = vmatmul.mubr.bf16.gmra.mrb[0].mxu0 %v489
        %v2756 = vpop.f32.mrb[0].mxu0
        %v2757 = vadd.f32 0.0, %v2756
        %v2758 = vpop.f32.mrb[0].mxu0
        %v2759 = vpop.f32.mrb[0].mxu0
        %v2760 = vadd.f32 0.0, %v2759
        %v2761 = vpop.f32.mrb[0].mxu0
        %2762 = vmatprep.mubr.bf16.mxu0 0
        %2763 = vmatmul.mubr.bf16.gmra.mrb[0].mxu0 %v492
        %v2764 = vpop.f32.mrb[0].mxu0
        %v2765 = vadd.f32 0.0, %v2764
        %v2766 = vpop.f32.mrb[0].mxu0
        %v2767 = vpop.f32.mrb[0].mxu0
        %v2768 = vadd.f32 0.0, %v2767
        %v2769 = vpop.f32.mrb[0].mxu0
        %2770 = vdwg.mxu0
        %v2779 = vunpack.c.l.b16 %v2450
        %v2780 = vunpack.c.l.b16 %v2451
        %v2781 = vunpack.c.l.b16 %v2452
        %v2782 = vunpack.c.l.b16 %v2453
        %v2783 = vunpack.c.l.b16 %v2454
        %v2784 = vunpack.c.l.b16 %v2455
        %v2785 = vunpack.c.l.b16 %v2456
        %v2786 = vunpack.c.l.b16 %v2457
        %v2787 = vpack.c.b16 %v2780, %v2779
        %v2788 = vpack.c.b16 %v2782, %v2781
        %v2789 = vpack.c.b16 %v2784, %v2783
        %v2790 = vpack.c.b16 %v2786, %v2785
        %v2796 = vsel %vm923, %v2417, 0
        %v2799 = vsel %vm923, %v2418, 0
        %v2802 = vsel %vm923, %v2419, 0
        %v2805 = vsel %vm923, %v2420, 0
        %v2808 = vsel %vm923, %v2421, 0
        %v2811 = vsel %vm923, %v2422, 0
        %v2814 = vsel %vm923, %v2423, 0
        %v2817 = vsel %vm923, %v2424, 0
        %v2820 = vsel %vm923, %v2425, 0
        %v2823 = vsel %vm923, %v2426, 0
        %v2826 = vsel %vm923, %v2427, 0
        %v2829 = vsel %vm923, %v2428, 0
        %v2832 = vsel %vm923, %v2429, 0
        %v2835 = vsel %vm923, %v2430, 0
        %v2838 = vsel %vm923, %v2431, 0
        %v2841 = vsel %vm923, %v2432, 0
        %v2844 = vsel %vm923, %v2433, 0
        %v2847 = vsel %vm923, %v2434, 0
        %v2850 = vsel %vm923, %v2435, 0
        %v2853 = vsel %vm923, %v2436, 0
        %v2856 = vsel %vm923, %v2437, 0
        %v2859 = vsel %vm923, %v2438, 0
        %v2862 = vsel %vm923, %v2439, 0
        %v2865 = vsel %vm923, %v2440, 0
        %v2868 = vsel %vm923, %v2441, 0
        %v2871 = vsel %vm923, %v2442, 0
        %v2874 = vsel %vm923, %v2443, 0
        %v2877 = vsel %vm923, %v2444, 0
        %v2880 = vsel %vm923, %v2445, 0
        %v2883 = vsel %vm923, %v2446, 0
        %v2886 = vsel %vm923, %v2447, 0
        %v2889 = vsel %vm923, %v2448, 0
        %2891 = vmatprep.subr.bf16.mxu0 0
        %2892 = vmatpush1.bf16.msra.mxu0 %v2787
        %2893 = vmatprep.subr.bf16.mxu0 0
        %2894 = vmatpush1.bf16.msra.mxu0 %v2788
        %2895 = vmatprep.subr.bf16.mxu0 0
        %2896 = vmatpush1.bf16.msra.mxu0 %v2789
        %2897 = vmatprep.subr.bf16.mxu0 0
        %2898 = vmatpush1.bf16.msra.mxu0 %v2790
        %2899 = vmatprep.subr.bf16.mxu0 0
        %2900 = vmatpush1.bf16.msra.mxu0 0
        %2901 = vmatprep.subr.bf16.mxu0 0
        %2902 = vmatpush1.bf16.msra.mxu0 0
        %2903 = vmatprep.subr.bf16.mxu0 0
        %2904 = vmatpush1.bf16.msra.mxu0 0
        %2905 = vmatprep.subr.bf16.mxu0 0
        %2906 = vmatpush1.bf16.msra.mxu0 0
        %2907 = vmatprep.subr.bf16.mxu0 0
        %2908 = vmatpush1.bf16.msra.mxu0 0
        %2909 = vmatprep.subr.bf16.mxu0 0
        %2910 = vmatpush1.bf16.msra.mxu0 0
        %2911 = vmatprep.subr.bf16.mxu0 0
        %2912 = vmatpush1.bf16.msra.mxu0 0
        %2913 = vmatprep.subr.bf16.mxu0 0
        %2914 = vmatpush1.bf16.msra.mxu0 0
        %2915 = vmatprep.subr.bf16.mxu0 0
        %2916 = vmatpush1.bf16.msra.mxu0 0
        %2917 = vmatprep.subr.bf16.mxu0 0
        %2918 = vmatpush1.bf16.msra.mxu0 0
        %2919 = vmatprep.subr.bf16.mxu0 0
        %2920 = vmatpush1.bf16.msra.mxu0 0
        %2921 = vmatprep.subr.bf16.mxu0 0
        %2922 = vmatpush1.bf16.msra.mxu0 0
        %2923 = vmatprep.mubr.bf16.mxu0 0
        %2924 = vmatmul.mubr.bf16.gmra.mrb[0].mxu0 %v2796
        %v2925 = vpop.f32.mrb[0].mxu0
        %v2926 = vadd.f32 %v2517, %v2925
        %v2927 = vpop.f32.mrb[0].mxu0
        %v2928 = vpop.f32.mrb[0].mxu0
        %v2929 = vadd.f32 %v2520, %v2928
        %v2930 = vpop.f32.mrb[0].mxu0
        %2931 = vmatprep.mubr.bf16.mxu0 0
        %2932 = vmatmul.mubr.bf16.gmra.mrb[0].mxu0 %v2799
        %v2933 = vpop.f32.mrb[0].mxu0
        %v2934 = vadd.f32 %v2525, %v2933
        %v2935 = vpop.f32.mrb[0].mxu0
        %v2936 = vpop.f32.mrb[0].mxu0
        %v2937 = vadd.f32 %v2528, %v2936
        %v2938 = vpop.f32.mrb[0].mxu0
        %2939 = vmatprep.mubr.bf16.mxu0 0
        %2940 = vmatmul.mubr.bf16.gmra.mrb[0].mxu0 %v2802
        %v2941 = vpop.f32.mrb[0].mxu0
        %v2942 = vadd.f32 %v2533, %v2941
        %v2943 = vpop.f32.mrb[0].mxu0
        %v2944 = vpop.f32.mrb[0].mxu0
        %v2945 = vadd.f32 %v2536, %v2944
        %v2946 = vpop.f32.mrb[0].mxu0
        %2947 = vmatprep.mubr.bf16.mxu0 0
        %2948 = vmatmul.mubr.bf16.gmra.mrb[0].mxu0 %v2805
        %v2949 = vpop.f32.mrb[0].mxu0
        %v2950 = vadd.f32 %v2541, %v2949
        %v2951 = vpop.f32.mrb[0].mxu0
        %v2952 = vpop.f32.mrb[0].mxu0
        %v2953 = vadd.f32 %v2544, %v2952
        %v2954 = vpop.f32.mrb[0].mxu0
        %2955 = vmatprep.mubr.bf16.mxu0 0
        %2956 = vmatmul.mubr.bf16.gmra.mrb[0].mxu0 %v2808
        %v2957 = vpop.f32.mrb[0].mxu0
        %v2958 = vadd.f32 %v2549, %v2957
        %v2959 = vpop.f32.mrb[0].mxu0
        %v2960 = vpop.f32.mrb[0].mxu0
        %v2961 = vadd.f32 %v2552, %v2960
        %v2962 = vpop.f32.mrb[0].mxu0
        %2963 = vmatprep.mubr.bf16.mxu0 0
        %2964 = vmatmul.mubr.bf16.gmra.mrb[0].mxu0 %v2811
        %v2965 = vpop.f32.mrb[0].mxu0
        %v2966 = vadd.f32 %v2557, %v2965
        %v2967 = vpop.f32.mrb[0].mxu0
        %v2968 = vpop.f32.mrb[0].mxu0
        %v2969 = vadd.f32 %v2560, %v2968
        %v2970 = vpop.f32.mrb[0].mxu0
        %2971 = vmatprep.mubr.bf16.mxu0 0
        %2972 = vmatmul.mubr.bf16.gmra.mrb[0].mxu0 %v2814
        %v2973 = vpop.f32.mrb[0].mxu0
        %v2974 = vadd.f32 %v2565, %v2973
        %v2975 = vpop.f32.mrb[0].mxu0
        %v2976 = vpop.f32.mrb[0].mxu0
        %v2977 = vadd.f32 %v2568, %v2976
        %v2978 = vpop.f32.mrb[0].mxu0
        %2979 = vmatprep.mubr.bf16.mxu0 0
        %2980 = vmatmul.mubr.bf16.gmra.mrb[0].mxu0 %v2817
        %v2981 = vpop.f32.mrb[0].mxu0
        %v2982 = vadd.f32 %v2573, %v2981
        %v2983 = vpop.f32.mrb[0].mxu0
        %v2984 = vpop.f32.mrb[0].mxu0
        %v2985 = vadd.f32 %v2576, %v2984
        %v2986 = vpop.f32.mrb[0].mxu0
        %2987 = vmatprep.mubr.bf16.mxu0 0
        %2988 = vmatmul.mubr.bf16.gmra.mrb[0].mxu0 %v2820
        %v2989 = vpop.f32.mrb[0].mxu0
        %v2990 = vadd.f32 %v2581, %v2989
        %v2991 = vpop.f32.mrb[0].mxu0
        %v2992 = vpop.f32.mrb[0].mxu0
        %v2993 = vadd.f32 %v2584, %v2992
        %v2994 = vpop.f32.mrb[0].mxu0
        %2995 = vmatprep.mubr.bf16.mxu0 0
        %2996 = vmatmul.mubr.bf16.gmra.mrb[0].mxu0 %v2823
        %v2997 = vpop.f32.mrb[0].mxu0
        %v2998 = vadd.f32 %v2589, %v2997
        %v2999 = vpop.f32.mrb[0].mxu0
        %v3000 = vpop.f32.mrb[0].mxu0
        %v3001 = vadd.f32 %v2592, %v3000
        %v3002 = vpop.f32.mrb[0].mxu0
        %3003 = vmatprep.mubr.bf16.mxu0 0
        %3004 = vmatmul.mubr.bf16.gmra.mrb[0].mxu0 %v2826
        %v3005 = vpop.f32.mrb[0].mxu0
        %v3006 = vadd.f32 %v2597, %v3005
        %v3007 = vpop.f32.mrb[0].mxu0
        %v3008 = vpop.f32.mrb[0].mxu0
        %v3009 = vadd.f32 %v2600, %v3008
        %v3010 = vpop.f32.mrb[0].mxu0
        %3011 = vmatprep.mubr.bf16.mxu0 0
        %3012 = vmatmul.mubr.bf16.gmra.mrb[0].mxu0 %v2829
        %v3013 = vpop.f32.mrb[0].mxu0
        %v3014 = vadd.f32 %v2605, %v3013
        %v3015 = vpop.f32.mrb[0].mxu0
        %v3016 = vpop.f32.mrb[0].mxu0
        %v3017 = vadd.f32 %v2608, %v3016
        %v3018 = vpop.f32.mrb[0].mxu0
        %3019 = vmatprep.mubr.bf16.mxu0 0
        %3020 = vmatmul.mubr.bf16.gmra.mrb[0].mxu0 %v2832
        %v3021 = vpop.f32.mrb[0].mxu0
        %v3022 = vadd.f32 %v2613, %v3021
        %v3023 = vpop.f32.mrb[0].mxu0
        %v3024 = vpop.f32.mrb[0].mxu0
        %v3025 = vadd.f32 %v2616, %v3024
        %v3026 = vpop.f32.mrb[0].mxu0
        %3027 = vmatprep.mubr.bf16.mxu0 0
        %3028 = vmatmul.mubr.bf16.gmra.mrb[0].mxu0 %v2835
        %v3029 = vpop.f32.mrb[0].mxu0
        %v3030 = vadd.f32 %v2621, %v3029
        %v3031 = vpop.f32.mrb[0].mxu0
        %v3032 = vpop.f32.mrb[0].mxu0
        %v3033 = vadd.f32 %v2624, %v3032
        %v3034 = vpop.f32.mrb[0].mxu0
        %3035 = vmatprep.mubr.bf16.mxu0 0
        %3036 = vmatmul.mubr.bf16.gmra.mrb[0].mxu0 %v2838
        %v3037 = vpop.f32.mrb[0].mxu0
        %v3038 = vadd.f32 %v2629, %v3037
        %v3039 = vpop.f32.mrb[0].mxu0
        %v3040 = vpop.f32.mrb[0].mxu0
        %v3041 = vadd.f32 %v2632, %v3040
        %v3042 = vpop.f32.mrb[0].mxu0
        %3043 = vmatprep.mubr.bf16.mxu0 0
        %3044 = vmatmul.mubr.bf16.gmra.mrb[0].mxu0 %v2841
        %v3045 = vpop.f32.mrb[0].mxu0
        %v3046 = vadd.f32 %v2637, %v3045
        %v3047 = vpop.f32.mrb[0].mxu0
        %v3048 = vpop.f32.mrb[0].mxu0
        %v3049 = vadd.f32 %v2640, %v3048
        %v3050 = vpop.f32.mrb[0].mxu0
        %3051 = vmatprep.mubr.bf16.mxu0 0
        %3052 = vmatmul.mubr.bf16.gmra.mrb[0].mxu0 %v2844
        %v3053 = vpop.f32.mrb[0].mxu0
        %v3054 = vadd.f32 %v2645, %v3053
        %v3055 = vpop.f32.mrb[0].mxu0
        %v3056 = vpop.f32.mrb[0].mxu0
        %v3057 = vadd.f32 %v2648, %v3056
        %v3058 = vpop.f32.mrb[0].mxu0
        %3059 = vmatprep.mubr.bf16.mxu0 0
        %3060 = vmatmul.mubr.bf16.gmra.mrb[0].mxu0 %v2847
        %v3061 = vpop.f32.mrb[0].mxu0
        %v3062 = vadd.f32 %v2653, %v3061
        %v3063 = vpop.f32.mrb[0].mxu0
        %v3064 = vpop.f32.mrb[0].mxu0
        %v3065 = vadd.f32 %v2656, %v3064
        %v3066 = vpop.f32.mrb[0].mxu0
        %3067 = vmatprep.mubr.bf16.mxu0 0
        %3068 = vmatmul.mubr.bf16.gmra.mrb[0].mxu0 %v2850
        %v3069 = vpop.f32.mrb[0].mxu0
        %v3070 = vadd.f32 %v2661, %v3069
        %v3071 = vpop.f32.mrb[0].mxu0
        %v3072 = vpop.f32.mrb[0].mxu0
        %v3073 = vadd.f32 %v2664, %v3072
        %v3074 = vpop.f32.mrb[0].mxu0
        %3075 = vmatprep.mubr.bf16.mxu0 0
        %3076 = vmatmul.mubr.bf16.gmra.mrb[0].mxu0 %v2853
        %v3077 = vpop.f32.mrb[0].mxu0
        %v3078 = vadd.f32 %v2669, %v3077
        %v3079 = vpop.f32.mrb[0].mxu0
        %v3080 = vpop.f32.mrb[0].mxu0
        %v3081 = vadd.f32 %v2672, %v3080
        %v3082 = vpop.f32.mrb[0].mxu0
        %3083 = vmatprep.mubr.bf16.mxu0 0
        %3084 = vmatmul.mubr.bf16.gmra.mrb[0].mxu0 %v2856
        %v3085 = vpop.f32.mrb[0].mxu0
        %v3086 = vadd.f32 %v2677, %v3085
        %v3087 = vpop.f32.mrb[0].mxu0
        %v3088 = vpop.f32.mrb[0].mxu0
        %v3089 = vadd.f32 %v2680, %v3088
        %v3090 = vpop.f32.mrb[0].mxu0
        %3091 = vmatprep.mubr.bf16.mxu0 0
        %3092 = vmatmul.mubr.bf16.gmra.mrb[0].mxu0 %v2859
        %v3093 = vpop.f32.mrb[0].mxu0
        %v3094 = vadd.f32 %v2685, %v3093
        %v3095 = vpop.f32.mrb[0].mxu0
        %v3096 = vpop.f32.mrb[0].mxu0
        %v3097 = vadd.f32 %v2688, %v3096
        %v3098 = vpop.f32.mrb[0].mxu0
        %3099 = vmatprep.mubr.bf16.mxu0 0
        %3100 = vmatmul.mubr.bf16.gmra.mrb[0].mxu0 %v2862
        %v3101 = vpop.f32.mrb[0].mxu0
        %v3102 = vadd.f32 %v2693, %v3101
        %v3103 = vpop.f32.mrb[0].mxu0
        %v3104 = vpop.f32.mrb[0].mxu0
        %v3105 = vadd.f32 %v2696, %v3104
        %v3106 = vpop.f32.mrb[0].mxu0
        %3107 = vmatprep.mubr.bf16.mxu0 0
        %3108 = vmatmul.mubr.bf16.gmra.mrb[0].mxu0 %v2865
        %v3109 = vpop.f32.mrb[0].mxu0
        %v3110 = vadd.f32 %v2701, %v3109
        %v3111 = vpop.f32.mrb[0].mxu0
        %v3112 = vpop.f32.mrb[0].mxu0
        %v3113 = vadd.f32 %v2704, %v3112
        %v3114 = vpop.f32.mrb[0].mxu0
        %3115 = vmatprep.mubr.bf16.mxu0 0
        %3116 = vmatmul.mubr.bf16.gmra.mrb[0].mxu0 %v2868
        %v3117 = vpop.f32.mrb[0].mxu0
        %v3118 = vadd.f32 %v2709, %v3117
        %v3119 = vpop.f32.mrb[0].mxu0
        %v3120 = vpop.f32.mrb[0].mxu0
        %v3121 = vadd.f32 %v2712, %v3120
        %v3122 = vpop.f32.mrb[0].mxu0
        %3123 = vmatprep.mubr.bf16.mxu0 0
        %3124 = vmatmul.mubr.bf16.gmra.mrb[0].mxu0 %v2871
        %v3125 = vpop.f32.mrb[0].mxu0
        %v3126 = vadd.f32 %v2717, %v3125
        %v3127 = vpop.f32.mrb[0].mxu0
        %v3128 = vpop.f32.mrb[0].mxu0
        %v3129 = vadd.f32 %v2720, %v3128
        %v3130 = vpop.f32.mrb[0].mxu0
        %3131 = vmatprep.mubr.bf16.mxu0 0
        %3132 = vmatmul.mubr.bf16.gmra.mrb[0].mxu0 %v2874
        %v3133 = vpop.f32.mrb[0].mxu0
        %v3134 = vadd.f32 %v2725, %v3133
        %v3135 = vpop.f32.mrb[0].mxu0
        %v3136 = vpop.f32.mrb[0].mxu0
        %v3137 = vadd.f32 %v2728, %v3136
        %v3138 = vpop.f32.mrb[0].mxu0
        %3139 = vmatprep.mubr.bf16.mxu0 0
        %3140 = vmatmul.mubr.bf16.gmra.mrb[0].mxu0 %v2877
        %v3141 = vpop.f32.mrb[0].mxu0
        %v3142 = vadd.f32 %v2733, %v3141
        %v3143 = vpop.f32.mrb[0].mxu0
        %v3144 = vpop.f32.mrb[0].mxu0
        %v3145 = vadd.f32 %v2736, %v3144
        %v3146 = vpop.f32.mrb[0].mxu0
        %3147 = vmatprep.mubr.bf16.mxu0 0
        %3148 = vmatmul.mubr.bf16.gmra.mrb[0].mxu0 %v2880
        %v3149 = vpop.f32.mrb[0].mxu0
        %v3150 = vadd.f32 %v2741, %v3149
        %v3151 = vpop.f32.mrb[0].mxu0
        %v3152 = vpop.f32.mrb[0].mxu0
        %v3153 = vadd.f32 %v2744, %v3152
        %v3154 = vpop.f32.mrb[0].mxu0
        %3155 = vmatprep.mubr.bf16.mxu0 0
        %3156 = vmatmul.mubr.bf16.gmra.mrb[0].mxu0 %v2883
        %v3157 = vpop.f32.mrb[0].mxu0
        %v3158 = vadd.f32 %v2749, %v3157
        %v3159 = vpop.f32.mrb[0].mxu0
        %v3160 = vpop.f32.mrb[0].mxu0
        %v3161 = vadd.f32 %v2752, %v3160
        %v3162 = vpop.f32.mrb[0].mxu0
        %3163 = vmatprep.mubr.bf16.mxu0 0
        %3164 = vmatmul.mubr.bf16.gmra.mrb[0].mxu0 %v2886
        %v3165 = vpop.f32.mrb[0].mxu0
        %v3166 = vadd.f32 %v2757, %v3165
        %v3167 = vpop.f32.mrb[0].mxu0
        %v3168 = vpop.f32.mrb[0].mxu0
        %v3169 = vadd.f32 %v2760, %v3168
        %v3170 = vpop.f32.mrb[0].mxu0
        %3171 = vmatprep.mubr.bf16.mxu0 0
        %3172 = vmatmul.mubr.bf16.gmra.mrb[0].mxu0 %v2889
        %v3173 = vpop.f32.mrb[0].mxu0
        %v3174 = vadd.f32 %v2765, %v3173
        %v3175 = vpop.f32.mrb[0].mxu0
        %v3176 = vpop.f32.mrb[0].mxu0
        %v3177 = vadd.f32 %v2768, %v3176
        %v3178 = vpop.f32.mrb[0].mxu0
        %3179 = vdwg.mxu0
        %s3180 = scalar_lea.vmem %s4, 4
        %v3181 = vld [vmem:[%s3180] sm:$0x1]
        %v3183 = vlaneseq
        %v3184 = vshrl.u32 %v3183, 7
        %v3185 = vsub.s32 0, %v3184
        %v3186 = vrot.slane %v3181, %v3185
        %v3188 = vadd.f32 %v2926, %v3186
        %v3189 = vadd.f32 %v2929, %v3186
        %v3190 = vadd.f32 %v2934, %v3186
        %v3191 = vadd.f32 %v2937, %v3186
        %v3192 = vadd.f32 %v2942, %v3186
        %v3193 = vadd.f32 %v2945, %v3186
        %v3194 = vadd.f32 %v2950, %v3186
        %v3195 = vadd.f32 %v2953, %v3186
        %v3196 = vadd.f32 %v2958, %v3186
        %v3197 = vadd.f32 %v2961, %v3186
        %v3198 = vadd.f32 %v2966, %v3186
        %v3199 = vadd.f32 %v2969, %v3186
        %v3200 = vadd.f32 %v2974, %v3186
        %v3201 = vadd.f32 %v2977, %v3186
        %v3202 = vadd.f32 %v2982, %v3186
        %v3203 = vadd.f32 %v2985, %v3186
        %v3204 = vadd.f32 %v2990, %v3186
        %v3205 = vadd.f32 %v2993, %v3186
        %v3206 = vadd.f32 %v2998, %v3186
        %v3207 = vadd.f32 %v3001, %v3186
        %v3208 = vadd.f32 %v3006, %v3186
        %v3209 = vadd.f32 %v3009, %v3186
        %v3210 = vadd.f32 %v3014, %v3186
        %v3211 = vadd.f32 %v3017, %v3186
        %v3212 = vadd.f32 %v3022, %v3186
        %v3213 = vadd.f32 %v3025, %v3186
        %v3214 = vadd.f32 %v3030, %v3186
        %v3215 = vadd.f32 %v3033, %v3186
        %v3216 = vadd.f32 %v3038, %v3186
        %v3217 = vadd.f32 %v3041, %v3186
        %v3218 = vadd.f32 %v3046, %v3186
        %v3219 = vadd.f32 %v3049, %v3186
        %v3220 = vadd.f32 %v3054, %v3186
        %v3221 = vadd.f32 %v3057, %v3186
        %v3222 = vadd.f32 %v3062, %v3186
        %v3223 = vadd.f32 %v3065, %v3186
        %v3224 = vadd.f32 %v3070, %v3186
        %v3225 = vadd.f32 %v3073, %v3186
        %v3226 = vadd.f32 %v3078, %v3186
        %v3227 = vadd.f32 %v3081, %v3186
        %v3228 = vadd.f32 %v3086, %v3186
        %v3229 = vadd.f32 %v3089, %v3186
        %v3230 = vadd.f32 %v3094, %v3186
        %v3231 = vadd.f32 %v3097, %v3186
        %v3232 = vadd.f32 %v3102, %v3186
        %v3233 = vadd.f32 %v3105, %v3186
        %v3234 = vadd.f32 %v3110, %v3186
        %v3235 = vadd.f32 %v3113, %v3186
        %v3236 = vadd.f32 %v3118, %v3186
        %v3237 = vadd.f32 %v3121, %v3186
        %v3238 = vadd.f32 %v3126, %v3186
        %v3239 = vadd.f32 %v3129, %v3186
        %v3240 = vadd.f32 %v3134, %v3186
        %v3241 = vadd.f32 %v3137, %v3186
        %v3242 = vadd.f32 %v3142, %v3186
        %v3243 = vadd.f32 %v3145, %v3186
        %v3244 = vadd.f32 %v3150, %v3186
        %v3245 = vadd.f32 %v3153, %v3186
        %v3246 = vadd.f32 %v3158, %v3186
        %v3247 = vadd.f32 %v3161, %v3186
        %v3248 = vadd.f32 %v3166, %v3186
        %v3249 = vadd.f32 %v3169, %v3186
        %v3250 = vadd.f32 %v3174, %v3186
        %v3251 = vadd.f32 %v3177, %v3186
        %v3252 = vmax.f32 %v3188, 0.0
        %v3253 = vmax.f32 %v3189, 0.0
        %v3254 = vmax.f32 %v3190, 0.0
        %v3255 = vmax.f32 %v3191, 0.0
        %v3256 = vmax.f32 %v3192, 0.0
        %v3257 = vmax.f32 %v3193, 0.0
        %v3258 = vmax.f32 %v3194, 0.0
        %v3259 = vmax.f32 %v3195, 0.0
        %v3260 = vmax.f32 %v3196, 0.0
        %v3261 = vmax.f32 %v3197, 0.0
        %v3262 = vmax.f32 %v3198, 0.0
        %v3263 = vmax.f32 %v3199, 0.0
        %v3264 = vmax.f32 %v3200, 0.0
        %v3265 = vmax.f32 %v3201, 0.0
        %v3266 = vmax.f32 %v3202, 0.0
        %v3267 = vmax.f32 %v3203, 0.0
        %v3268 = vmax.f32 %v3204, 0.0
        %v3269 = vmax.f32 %v3205, 0.0
        %v3270 = vmax.f32 %v3206, 0.0
        %v3271 = vmax.f32 %v3207, 0.0
        %v3272 = vmax.f32 %v3208, 0.0
        %v3273 = vmax.f32 %v3209, 0.0
        %v3274 = vmax.f32 %v3210, 0.0
        %v3275 = vmax.f32 %v3211, 0.0
        %v3276 = vmax.f32 %v3212, 0.0
        %v3277 = vmax.f32 %v3213, 0.0
        %v3278 = vmax.f32 %v3214, 0.0
        %v3279 = vmax.f32 %v3215, 0.0
        %v3280 = vmax.f32 %v3216, 0.0
        %v3281 = vmax.f32 %v3217, 0.0
        %v3282 = vmax.f32 %v3218, 0.0
        %v3283 = vmax.f32 %v3219, 0.0
        %v3284 = vmax.f32 %v3220, 0.0
        %v3285 = vmax.f32 %v3221, 0.0
        %v3286 = vmax.f32 %v3222, 0.0
        %v3287 = vmax.f32 %v3223, 0.0
        %v3288 = vmax.f32 %v3224, 0.0
        %v3289 = vmax.f32 %v3225, 0.0
        %v3290 = vmax.f32 %v3226, 0.0
        %v3291 = vmax.f32 %v3227, 0.0
        %v3292 = vmax.f32 %v3228, 0.0
        %v3293 = vmax.f32 %v3229, 0.0
        %v3294 = vmax.f32 %v3230, 0.0
        %v3295 = vmax.f32 %v3231, 0.0
        %v3296 = vmax.f32 %v3232, 0.0
        %v3297 = vmax.f32 %v3233, 0.0
        %v3298 = vmax.f32 %v3234, 0.0
        %v3299 = vmax.f32 %v3235, 0.0
        %v3300 = vmax.f32 %v3236, 0.0
        %v3301 = vmax.f32 %v3237, 0.0
        %v3302 = vmax.f32 %v3238, 0.0
        %v3303 = vmax.f32 %v3239, 0.0
        %v3304 = vmax.f32 %v3240, 0.0
        %v3305 = vmax.f32 %v3241, 0.0
        %v3306 = vmax.f32 %v3242, 0.0
        %v3307 = vmax.f32 %v3243, 0.0
        %v3308 = vmax.f32 %v3244, 0.0
        %v3309 = vmax.f32 %v3245, 0.0
        %v3310 = vmax.f32 %v3246, 0.0
        %v3311 = vmax.f32 %v3247, 0.0
        %v3312 = vmax.f32 %v3248, 0.0
        %v3313 = vmax.f32 %v3249, 0.0
        %v3314 = vmax.f32 %v3250, 0.0
        %v3315 = vmax.f32 %v3251, 0.0
        %v3316 = vpack.c.bf16 %v3253, %v3252
        %v3317 = vpack.c.bf16 %v3255, %v3254
        %v3318 = vpack.c.bf16 %v3257, %v3256
        %v3319 = vpack.c.bf16 %v3259, %v3258
        %v3320 = vpack.c.bf16 %v3261, %v3260
        %v3321 = vpack.c.bf16 %v3263, %v3262
        %v3322 = vpack.c.bf16 %v3265, %v3264
        %v3323 = vpack.c.bf16 %v3267, %v3266
        %v3324 = vpack.c.bf16 %v3269, %v3268
        %v3325 = vpack.c.bf16 %v3271, %v3270
        %v3326 = vpack.c.bf16 %v3273, %v3272
        %v3327 = vpack.c.bf16 %v3275, %v3274
        %v3328 = vpack.c.bf16 %v3277, %v3276
        %v3329 = vpack.c.bf16 %v3279, %v3278
        %v3330 = vpack.c.bf16 %v3281, %v3280
        %v3331 = vpack.c.bf16 %v3283, %v3282
        %v3332 = vpack.c.bf16 %v3285, %v3284
        %v3333 = vpack.c.bf16 %v3287, %v3286
        %v3334 = vpack.c.bf16 %v3289, %v3288
        %v3335 = vpack.c.bf16 %v3291, %v3290
        %v3336 = vpack.c.bf16 %v3293, %v3292
        %v3337 = vpack.c.bf16 %v3295, %v3294
        %v3338 = vpack.c.bf16 %v3297, %v3296
        %v3339 = vpack.c.bf16 %v3299, %v3298
        %v3340 = vpack.c.bf16 %v3301, %v3300
        %v3341 = vpack.c.bf16 %v3303, %v3302
        %v3342 = vpack.c.bf16 %v3305, %v3304
        %v3343 = vpack.c.bf16 %v3307, %v3306
        %v3344 = vpack.c.bf16 %v3309, %v3308
        %v3345 = vpack.c.bf16 %v3311, %v3310
        %v3346 = vpack.c.bf16 %v3313, %v3312
        %v3347 = vpack.c.bf16 %v3315, %v3314
        %s3348 = scalar_lea.vmem %s2, 128
        %v3349 = vld [vmem:[%s3348] sm:$0xf]
        %v3350 = vld [vmem:[%s3348 + $0x4] sm:$0xf]
        %v3351 = vld [vmem:[%s3348 + $0x8] sm:$0xf]
        %v3352 = vld [vmem:[%s3348 + $0xc] sm:$0xf]
        %v3353 = vld [vmem:[%s3348 + $0x10] sm:$0xf]
        %v3354 = vld [vmem:[%s3348 + $0x14] sm:$0xf]
        %v3355 = vld [vmem:[%s3348 + $0x18] sm:$0xf]
        %v3356 = vld [vmem:[%s3348 + $0x1c] sm:$0xf]
        %s3357 = scalar_lea.vmem %s4, 5
        %v3358 = vld [vmem:[%s3357] sm:$0x1]
        %v3360 = vlaneseq
        %v3361 = vshrl.u32 %v3360, 7
        %v3362 = vsub.s32 0, %v3361
        %v3363 = vrot.slane %v3358, %v3362
        %v3373 = vunpack.c.l.b16 %v3349
        %v3374 = vunpack.c.l.b16 %v3350
        %v3375 = vunpack.c.l.b16 %v3351
        %v3376 = vunpack.c.l.b16 %v3352
        %v3377 = vunpack.c.l.b16 %v3353
        %v3378 = vunpack.c.l.b16 %v3354
        %v3379 = vunpack.c.l.b16 %v3355
        %v3380 = vunpack.c.l.b16 %v3356
        %v3381 = vpack.c.b16 %v3374, %v3373
        %v3382 = vpack.c.b16 %v3376, %v3375
        %v3383 = vpack.c.b16 %v3378, %v3377
        %v3384 = vpack.c.b16 %v3380, %v3379
        %v3390 = vsel %vm923, %v3316, 0
        %v3393 = vsel %vm923, %v3317, 0
        %v3396 = vsel %vm923, %v3318, 0
        %v3399 = vsel %vm923, %v3319, 0
        %v3402 = vsel %vm923, %v3320, 0
        %v3405 = vsel %vm923, %v3321, 0
        %v3408 = vsel %vm923, %v3322, 0
        %v3411 = vsel %vm923, %v3323, 0
        %v3414 = vsel %vm923, %v3324, 0
        %v3417 = vsel %vm923, %v3325, 0
        %v3420 = vsel %vm923, %v3326, 0
        %v3423 = vsel %vm923, %v3327, 0
        %v3426 = vsel %vm923, %v3328, 0
        %v3429 = vsel %vm923, %v3329, 0
        %v3432 = vsel %vm923, %v3330, 0
        %v3435 = vsel %vm923, %v3331, 0
        %v3438 = vsel %vm923, %v3332, 0
        %v3441 = vsel %vm923, %v3333, 0
        %v3444 = vsel %vm923, %v3334, 0
        %v3447 = vsel %vm923, %v3335, 0
        %v3450 = vsel %vm923, %v3336, 0
        %v3453 = vsel %vm923, %v3337, 0
        %v3456 = vsel %vm923, %v3338, 0
        %v3459 = vsel %vm923, %v3339, 0
        %v3462 = vsel %vm923, %v3340, 0
        %v3465 = vsel %vm923, %v3341, 0
        %v3468 = vsel %vm923, %v3342, 0
        %v3471 = vsel %vm923, %v3343, 0
        %v3474 = vsel %vm923, %v3344, 0
        %v3477 = vsel %vm923, %v3345, 0
        %v3480 = vsel %vm923, %v3346, 0
        %v3483 = vsel %vm923, %v3347, 0
        %3485 = vmatprep.subr.bf16.mxu0 0
        %3486 = vmatpush1.bf16.msra.mxu0 %v3381
        %3487 = vmatprep.subr.bf16.mxu0 0
        %3488 = vmatpush1.bf16.msra.mxu0 %v3382
        %3489 = vmatprep.subr.bf16.mxu0 0
        %3490 = vmatpush1.bf16.msra.mxu0 %v3383
        %3491 = vmatprep.subr.bf16.mxu0 0
        %3492 = vmatpush1.bf16.msra.mxu0 %v3384
        %3493 = vmatprep.subr.bf16.mxu0 0
        %3494 = vmatpush1.bf16.msra.mxu0 0
        %3495 = vmatprep.subr.bf16.mxu0 0
        %3496 = vmatpush1.bf16.msra.mxu0 0
        %3497 = vmatprep.subr.bf16.mxu0 0
        %3498 = vmatpush1.bf16.msra.mxu0 0
        %3499 = vmatprep.subr.bf16.mxu0 0
        %3500 = vmatpush1.bf16.msra.mxu0 0
        %3501 = vmatprep.subr.bf16.mxu0 0
        %3502 = vmatpush1.bf16.msra.mxu0 0
        %3503 = vmatprep.subr.bf16.mxu0 0
        %3504 = vmatpush1.bf16.msra.mxu0 0
        %3505 = vmatprep.subr.bf16.mxu0 0
        %3506 = vmatpush1.bf16.msra.mxu0 0
        %3507 = vmatprep.subr.bf16.mxu0 0
        %3508 = vmatpush1.bf16.msra.mxu0 0
        %3509 = vmatprep.subr.bf16.mxu0 0
        %3510 = vmatpush1.bf16.msra.mxu0 0
        %3511 = vmatprep.subr.bf16.mxu0 0
        %3512 = vmatpush1.bf16.msra.mxu0 0
        %3513 = vmatprep.subr.bf16.mxu0 0
        %3514 = vmatpush1.bf16.msra.mxu0 0
        %3515 = vmatprep.subr.bf16.mxu0 0
        %3516 = vmatpush1.bf16.msra.mxu0 0
        %3517 = vmatprep.mubr.bf16.mxu0 0
        %3518 = vmatmul.mubr.bf16.gmra.mrb[0].mxu0 %v3390
        %v3519 = vpop.f32.mrb[0].mxu0
        %v3520 = vadd.f32 %v3363, %v3519
        %v3521 = vpop.f32.mrb[0].mxu0
        %v3522 = vpop.f32.mrb[0].mxu0
        %v3523 = vadd.f32 %v3363, %v3522
        %v3524 = vpop.f32.mrb[0].mxu0
        %3525 = vmatprep.mubr.bf16.mxu0 0
        %3526 = vmatmul.mubr.bf16.gmra.mrb[0].mxu0 %v3393
        %v3527 = vpop.f32.mrb[0].mxu0
        %v3528 = vadd.f32 %v3363, %v3527
        %v3529 = vpop.f32.mrb[0].mxu0
        %v3530 = vpop.f32.mrb[0].mxu0
        %v3531 = vadd.f32 %v3363, %v3530
        %v3532 = vpop.f32.mrb[0].mxu0
        %3533 = vmatprep.mubr.bf16.mxu0 0
        %3534 = vmatmul.mubr.bf16.gmra.mrb[0].mxu0 %v3396
        %v3535 = vpop.f32.mrb[0].mxu0
        %v3536 = vadd.f32 %v3363, %v3535
        %v3537 = vpop.f32.mrb[0].mxu0
        %v3538 = vpop.f32.mrb[0].mxu0
        %v3539 = vadd.f32 %v3363, %v3538
        %v3540 = vpop.f32.mrb[0].mxu0
        %3541 = vmatprep.mubr.bf16.mxu0 0
        %3542 = vmatmul.mubr.bf16.gmra.mrb[0].mxu0 %v3399
        %v3543 = vpop.f32.mrb[0].mxu0
        %v3544 = vadd.f32 %v3363, %v3543
        %v3545 = vpop.f32.mrb[0].mxu0
        %v3546 = vpop.f32.mrb[0].mxu0
        %v3547 = vadd.f32 %v3363, %v3546
        %v3548 = vpop.f32.mrb[0].mxu0
        %3549 = vmatprep.mubr.bf16.mxu0 0
        %3550 = vmatmul.mubr.bf16.gmra.mrb[0].mxu0 %v3402
        %v3551 = vpop.f32.mrb[0].mxu0
        %v3552 = vadd.f32 %v3363, %v3551
        %v3553 = vpop.f32.mrb[0].mxu0
        %v3554 = vpop.f32.mrb[0].mxu0
        %v3555 = vadd.f32 %v3363, %v3554
        %v3556 = vpop.f32.mrb[0].mxu0
        %3557 = vmatprep.mubr.bf16.mxu0 0
        %3558 = vmatmul.mubr.bf16.gmra.mrb[0].mxu0 %v3405
        %v3559 = vpop.f32.mrb[0].mxu0
        %v3560 = vadd.f32 %v3363, %v3559
        %v3561 = vpop.f32.mrb[0].mxu0
        %v3562 = vpop.f32.mrb[0].mxu0
        %v3563 = vadd.f32 %v3363, %v3562
        %v3564 = vpop.f32.mrb[0].mxu0
        %3565 = vmatprep.mubr.bf16.mxu0 0
        %3566 = vmatmul.mubr.bf16.gmra.mrb[0].mxu0 %v3408
        %v3567 = vpop.f32.mrb[0].mxu0
        %v3568 = vadd.f32 %v3363, %v3567
        %v3569 = vpop.f32.mrb[0].mxu0
        %v3570 = vpop.f32.mrb[0].mxu0
        %v3571 = vadd.f32 %v3363, %v3570
        %v3572 = vpop.f32.mrb[0].mxu0
        %3573 = vmatprep.mubr.bf16.mxu0 0
        %3574 = vmatmul.mubr.bf16.gmra.mrb[0].mxu0 %v3411
        %v3575 = vpop.f32.mrb[0].mxu0
        %v3576 = vadd.f32 %v3363, %v3575
        %v3577 = vpop.f32.mrb[0].mxu0
        %v3578 = vpop.f32.mrb[0].mxu0
        %v3579 = vadd.f32 %v3363, %v3578
        %v3580 = vpop.f32.mrb[0].mxu0
        %3581 = vmatprep.mubr.bf16.mxu0 0
        %3582 = vmatmul.mubr.bf16.gmra.mrb[0].mxu0 %v3414
        %v3583 = vpop.f32.mrb[0].mxu0
        %v3584 = vadd.f32 %v3363, %v3583
        %v3585 = vpop.f32.mrb[0].mxu0
        %v3586 = vpop.f32.mrb[0].mxu0
        %v3587 = vadd.f32 %v3363, %v3586
        %v3588 = vpop.f32.mrb[0].mxu0
        %3589 = vmatprep.mubr.bf16.mxu0 0
        %3590 = vmatmul.mubr.bf16.gmra.mrb[0].mxu0 %v3417
        %v3591 = vpop.f32.mrb[0].mxu0
        %v3592 = vadd.f32 %v3363, %v3591
        %v3593 = vpop.f32.mrb[0].mxu0
        %v3594 = vpop.f32.mrb[0].mxu0
        %v3595 = vadd.f32 %v3363, %v3594
        %v3596 = vpop.f32.mrb[0].mxu0
        %3597 = vmatprep.mubr.bf16.mxu0 0
        %3598 = vmatmul.mubr.bf16.gmra.mrb[0].mxu0 %v3420
        %v3599 = vpop.f32.mrb[0].mxu0
        %v3600 = vadd.f32 %v3363, %v3599
        %v3601 = vpop.f32.mrb[0].mxu0
        %v3602 = vpop.f32.mrb[0].mxu0
        %v3603 = vadd.f32 %v3363, %v3602
        %v3604 = vpop.f32.mrb[0].mxu0
        %3605 = vmatprep.mubr.bf16.mxu0 0
        %3606 = vmatmul.mubr.bf16.gmra.mrb[0].mxu0 %v3423
        %v3607 = vpop.f32.mrb[0].mxu0
        %v3608 = vadd.f32 %v3363, %v3607
        %v3609 = vpop.f32.mrb[0].mxu0
        %v3610 = vpop.f32.mrb[0].mxu0
        %v3611 = vadd.f32 %v3363, %v3610
        %v3612 = vpop.f32.mrb[0].mxu0
        %3613 = vmatprep.mubr.bf16.mxu0 0
        %3614 = vmatmul.mubr.bf16.gmra.mrb[0].mxu0 %v3426
        %v3615 = vpop.f32.mrb[0].mxu0
        %v3616 = vadd.f32 %v3363, %v3615
        %v3617 = vpop.f32.mrb[0].mxu0
        %v3618 = vpop.f32.mrb[0].mxu0
        %v3619 = vadd.f32 %v3363, %v3618
        %v3620 = vpop.f32.mrb[0].mxu0
        %3621 = vmatprep.mubr.bf16.mxu0 0
        %3622 = vmatmul.mubr.bf16.gmra.mrb[0].mxu0 %v3429
        %v3623 = vpop.f32.mrb[0].mxu0
        %v3624 = vadd.f32 %v3363, %v3623
        %v3625 = vpop.f32.mrb[0].mxu0
        %v3626 = vpop.f32.mrb[0].mxu0
        %v3627 = vadd.f32 %v3363, %v3626
        %v3628 = vpop.f32.mrb[0].mxu0
        %3629 = vmatprep.mubr.bf16.mxu0 0
        %3630 = vmatmul.mubr.bf16.gmra.mrb[0].mxu0 %v3432
        %v3631 = vpop.f32.mrb[0].mxu0
        %v3632 = vadd.f32 %v3363, %v3631
        %v3633 = vpop.f32.mrb[0].mxu0
        %v3634 = vpop.f32.mrb[0].mxu0
        %v3635 = vadd.f32 %v3363, %v3634
        %v3636 = vpop.f32.mrb[0].mxu0
        %3637 = vmatprep.mubr.bf16.mxu0 0
        %3638 = vmatmul.mubr.bf16.gmra.mrb[0].mxu0 %v3435
        %v3639 = vpop.f32.mrb[0].mxu0
        %v3640 = vadd.f32 %v3363, %v3639
        %v3641 = vpop.f32.mrb[0].mxu0
        %v3642 = vpop.f32.mrb[0].mxu0
        %v3643 = vadd.f32 %v3363, %v3642
        %v3644 = vpop.f32.mrb[0].mxu0
        %3645 = vmatprep.mubr.bf16.mxu0 0
        %3646 = vmatmul.mubr.bf16.gmra.mrb[0].mxu0 %v3438
        %v3647 = vpop.f32.mrb[0].mxu0
        %v3648 = vadd.f32 %v3363, %v3647
        %v3649 = vpop.f32.mrb[0].mxu0
        %v3650 = vpop.f32.mrb[0].mxu0
        %v3651 = vadd.f32 %v3363, %v3650
        %v3652 = vpop.f32.mrb[0].mxu0
        %3653 = vmatprep.mubr.bf16.mxu0 0
        %3654 = vmatmul.mubr.bf16.gmra.mrb[0].mxu0 %v3441
        %v3655 = vpop.f32.mrb[0].mxu0
        %v3656 = vadd.f32 %v3363, %v3655
        %v3657 = vpop.f32.mrb[0].mxu0
        %v3658 = vpop.f32.mrb[0].mxu0
        %v3659 = vadd.f32 %v3363, %v3658
        %v3660 = vpop.f32.mrb[0].mxu0
        %3661 = vmatprep.mubr.bf16.mxu0 0
        %3662 = vmatmul.mubr.bf16.gmra.mrb[0].mxu0 %v3444
        %v3663 = vpop.f32.mrb[0].mxu0
        %v3664 = vadd.f32 %v3363, %v3663
        %v3665 = vpop.f32.mrb[0].mxu0
        %v3666 = vpop.f32.mrb[0].mxu0
        %v3667 = vadd.f32 %v3363, %v3666
        %v3668 = vpop.f32.mrb[0].mxu0
        %3669 = vmatprep.mubr.bf16.mxu0 0
        %3670 = vmatmul.mubr.bf16.gmra.mrb[0].mxu0 %v3447
        %v3671 = vpop.f32.mrb[0].mxu0
        %v3672 = vadd.f32 %v3363, %v3671
        %v3673 = vpop.f32.mrb[0].mxu0
        %v3674 = vpop.f32.mrb[0].mxu0
        %v3675 = vadd.f32 %v3363, %v3674
        %v3676 = vpop.f32.mrb[0].mxu0
        %3677 = vmatprep.mubr.bf16.mxu0 0
        %3678 = vmatmul.mubr.bf16.gmra.mrb[0].mxu0 %v3450
        %v3679 = vpop.f32.mrb[0].mxu0
        %v3680 = vadd.f32 %v3363, %v3679
        %v3681 = vpop.f32.mrb[0].mxu0
        %v3682 = vpop.f32.mrb[0].mxu0
        %v3683 = vadd.f32 %v3363, %v3682
        %v3684 = vpop.f32.mrb[0].mxu0
        %3685 = vmatprep.mubr.bf16.mxu0 0
        %3686 = vmatmul.mubr.bf16.gmra.mrb[0].mxu0 %v3453
        %v3687 = vpop.f32.mrb[0].mxu0
        %v3688 = vadd.f32 %v3363, %v3687
        %v3689 = vpop.f32.mrb[0].mxu0
        %v3690 = vpop.f32.mrb[0].mxu0
        %v3691 = vadd.f32 %v3363, %v3690
        %v3692 = vpop.f32.mrb[0].mxu0
        %3693 = vmatprep.mubr.bf16.mxu0 0
        %3694 = vmatmul.mubr.bf16.gmra.mrb[0].mxu0 %v3456
        %v3695 = vpop.f32.mrb[0].mxu0
        %v3696 = vadd.f32 %v3363, %v3695
        %v3697 = vpop.f32.mrb[0].mxu0
        %v3698 = vpop.f32.mrb[0].mxu0
        %v3699 = vadd.f32 %v3363, %v3698
        %v3700 = vpop.f32.mrb[0].mxu0
        %3701 = vmatprep.mubr.bf16.mxu0 0
        %3702 = vmatmul.mubr.bf16.gmra.mrb[0].mxu0 %v3459
        %v3703 = vpop.f32.mrb[0].mxu0
        %v3704 = vadd.f32 %v3363, %v3703
        %v3705 = vpop.f32.mrb[0].mxu0
        %v3706 = vpop.f32.mrb[0].mxu0
        %v3707 = vadd.f32 %v3363, %v3706
        %v3708 = vpop.f32.mrb[0].mxu0
        %3709 = vmatprep.mubr.bf16.mxu0 0
        %3710 = vmatmul.mubr.bf16.gmra.mrb[0].mxu0 %v3462
        %v3711 = vpop.f32.mrb[0].mxu0
        %v3712 = vadd.f32 %v3363, %v3711
        %v3713 = vpop.f32.mrb[0].mxu0
        %v3714 = vpop.f32.mrb[0].mxu0
        %v3715 = vadd.f32 %v3363, %v3714
        %v3716 = vpop.f32.mrb[0].mxu0
        %3717 = vmatprep.mubr.bf16.mxu0 0
        %3718 = vmatmul.mubr.bf16.gmra.mrb[0].mxu0 %v3465
        %v3719 = vpop.f32.mrb[0].mxu0
        %v3720 = vadd.f32 %v3363, %v3719
        %v3721 = vpop.f32.mrb[0].mxu0
        %v3722 = vpop.f32.mrb[0].mxu0
        %v3723 = vadd.f32 %v3363, %v3722
        %v3724 = vpop.f32.mrb[0].mxu0
        %3725 = vmatprep.mubr.bf16.mxu0 0
        %3726 = vmatmul.mubr.bf16.gmra.mrb[0].mxu0 %v3468
        %v3727 = vpop.f32.mrb[0].mxu0
        %v3728 = vadd.f32 %v3363, %v3727
        %v3729 = vpop.f32.mrb[0].mxu0
        %v3730 = vpop.f32.mrb[0].mxu0
        %v3731 = vadd.f32 %v3363, %v3730
        %v3732 = vpop.f32.mrb[0].mxu0
        %3733 = vmatprep.mubr.bf16.mxu0 0
        %3734 = vmatmul.mubr.bf16.gmra.mrb[0].mxu0 %v3471
        %v3735 = vpop.f32.mrb[0].mxu0
        %v3736 = vadd.f32 %v3363, %v3735
        %v3737 = vpop.f32.mrb[0].mxu0
        %v3738 = vpop.f32.mrb[0].mxu0
        %v3739 = vadd.f32 %v3363, %v3738
        %v3740 = vpop.f32.mrb[0].mxu0
        %3741 = vmatprep.mubr.bf16.mxu0 0
        %3742 = vmatmul.mubr.bf16.gmra.mrb[0].mxu0 %v3474
        %v3743 = vpop.f32.mrb[0].mxu0
        %v3744 = vadd.f32 %v3363, %v3743
        %v3745 = vpop.f32.mrb[0].mxu0
        %v3746 = vpop.f32.mrb[0].mxu0
        %v3747 = vadd.f32 %v3363, %v3746
        %v3748 = vpop.f32.mrb[0].mxu0
        %3749 = vmatprep.mubr.bf16.mxu0 0
        %3750 = vmatmul.mubr.bf16.gmra.mrb[0].mxu0 %v3477
        %v3751 = vpop.f32.mrb[0].mxu0
        %v3752 = vadd.f32 %v3363, %v3751
        %v3753 = vpop.f32.mrb[0].mxu0
        %v3754 = vpop.f32.mrb[0].mxu0
        %v3755 = vadd.f32 %v3363, %v3754
        %v3756 = vpop.f32.mrb[0].mxu0
        %3757 = vmatprep.mubr.bf16.mxu0 0
        %3758 = vmatmul.mubr.bf16.gmra.mrb[0].mxu0 %v3480
        %v3759 = vpop.f32.mrb[0].mxu0
        %v3760 = vadd.f32 %v3363, %v3759
        %v3761 = vpop.f32.mrb[0].mxu0
        %v3762 = vpop.f32.mrb[0].mxu0
        %v3763 = vadd.f32 %v3363, %v3762
        %v3764 = vpop.f32.mrb[0].mxu0
        %3765 = vmatprep.mubr.bf16.mxu0 0
        %3766 = vmatmul.mubr.bf16.gmra.mrb[0].mxu0 %v3483
        %v3767 = vpop.f32.mrb[0].mxu0
        %v3768 = vadd.f32 %v3363, %v3767
        %v3769 = vpop.f32.mrb[0].mxu0
        %v3770 = vpop.f32.mrb[0].mxu0
        %v3771 = vadd.f32 %v3363, %v3770
        %v3772 = vpop.f32.mrb[0].mxu0
        %3773 = vdwg.mxu0
        %v3774 = vmax.f32 %v3520, 0.0
        %v3775 = vmax.f32 %v3523, 0.0
        %v3776 = vmax.f32 %v3528, 0.0
        %v3777 = vmax.f32 %v3531, 0.0
        %v3778 = vmax.f32 %v3536, 0.0
        %v3779 = vmax.f32 %v3539, 0.0
        %v3780 = vmax.f32 %v3544, 0.0
        %v3781 = vmax.f32 %v3547, 0.0
        %v3782 = vmax.f32 %v3552, 0.0
        %v3783 = vmax.f32 %v3555, 0.0
        %v3784 = vmax.f32 %v3560, 0.0
        %v3785 = vmax.f32 %v3563, 0.0
        %v3786 = vmax.f32 %v3568, 0.0
        %v3787 = vmax.f32 %v3571, 0.0
        %v3788 = vmax.f32 %v3576, 0.0
        %v3789 = vmax.f32 %v3579, 0.0
        %v3790 = vmax.f32 %v3584, 0.0
        %v3791 = vmax.f32 %v3587, 0.0
        %v3792 = vmax.f32 %v3592, 0.0
        %v3793 = vmax.f32 %v3595, 0.0
        %v3794 = vmax.f32 %v3600, 0.0
        %v3795 = vmax.f32 %v3603, 0.0
        %v3796 = vmax.f32 %v3608, 0.0
        %v3797 = vmax.f32 %v3611, 0.0
        %v3798 = vmax.f32 %v3616, 0.0
        %v3799 = vmax.f32 %v3619, 0.0
        %v3800 = vmax.f32 %v3624, 0.0
        %v3801 = vmax.f32 %v3627, 0.0
        %v3802 = vmax.f32 %v3632, 0.0
        %v3803 = vmax.f32 %v3635, 0.0
        %v3804 = vmax.f32 %v3640, 0.0
        %v3805 = vmax.f32 %v3643, 0.0
        %v3806 = vmax.f32 %v3648, 0.0
        %v3807 = vmax.f32 %v3651, 0.0
        %v3808 = vmax.f32 %v3656, 0.0
        %v3809 = vmax.f32 %v3659, 0.0
        %v3810 = vmax.f32 %v3664, 0.0
        %v3811 = vmax.f32 %v3667, 0.0
        %v3812 = vmax.f32 %v3672, 0.0
        %v3813 = vmax.f32 %v3675, 0.0
        %v3814 = vmax.f32 %v3680, 0.0
        %v3815 = vmax.f32 %v3683, 0.0
        %v3816 = vmax.f32 %v3688, 0.0
        %v3817 = vmax.f32 %v3691, 0.0
        %v3818 = vmax.f32 %v3696, 0.0
        %v3819 = vmax.f32 %v3699, 0.0
        %v3820 = vmax.f32 %v3704, 0.0
        %v3821 = vmax.f32 %v3707, 0.0
        %v3822 = vmax.f32 %v3712, 0.0
        %v3823 = vmax.f32 %v3715, 0.0
        %v3824 = vmax.f32 %v3720, 0.0
        %v3825 = vmax.f32 %v3723, 0.0
        %v3826 = vmax.f32 %v3728, 0.0
        %v3827 = vmax.f32 %v3731, 0.0
        %v3828 = vmax.f32 %v3736, 0.0
        %v3829 = vmax.f32 %v3739, 0.0
        %v3830 = vmax.f32 %v3744, 0.0
        %v3831 = vmax.f32 %v3747, 0.0
        %v3832 = vmax.f32 %v3752, 0.0
        %v3833 = vmax.f32 %v3755, 0.0
        %v3834 = vmax.f32 %v3760, 0.0
        %v3835 = vmax.f32 %v3763, 0.0
        %v3836 = vmax.f32 %v3768, 0.0
        %v3837 = vmax.f32 %v3771, 0.0
        %v3838 = vpack.c.bf16 %v3775, %v3774
        %v3839 = vpack.c.bf16 %v3777, %v3776
        %v3840 = vpack.c.bf16 %v3779, %v3778
        %v3841 = vpack.c.bf16 %v3781, %v3780
        %v3842 = vpack.c.bf16 %v3783, %v3782
        %v3843 = vpack.c.bf16 %v3785, %v3784
        %v3844 = vpack.c.bf16 %v3787, %v3786
        %v3845 = vpack.c.bf16 %v3789, %v3788
        %v3846 = vpack.c.bf16 %v3791, %v3790
        %v3847 = vpack.c.bf16 %v3793, %v3792
        %v3848 = vpack.c.bf16 %v3795, %v3794
        %v3849 = vpack.c.bf16 %v3797, %v3796
        %v3850 = vpack.c.bf16 %v3799, %v3798
        %v3851 = vpack.c.bf16 %v3801, %v3800
        %v3852 = vpack.c.bf16 %v3803, %v3802
        %v3853 = vpack.c.bf16 %v3805, %v3804
        %v3854 = vpack.c.bf16 %v3807, %v3806
        %v3855 = vpack.c.bf16 %v3809, %v3808
        %v3856 = vpack.c.bf16 %v3811, %v3810
        %v3857 = vpack.c.bf16 %v3813, %v3812
        %v3858 = vpack.c.bf16 %v3815, %v3814
        %v3859 = vpack.c.bf16 %v3817, %v3816
        %v3860 = vpack.c.bf16 %v3819, %v3818
        %v3861 = vpack.c.bf16 %v3821, %v3820
        %v3862 = vpack.c.bf16 %v3823, %v3822
        %v3863 = vpack.c.bf16 %v3825, %v3824
        %v3864 = vpack.c.bf16 %v3827, %v3826
        %v3865 = vpack.c.bf16 %v3829, %v3828
        %v3866 = vpack.c.bf16 %v3831, %v3830
        %v3867 = vpack.c.bf16 %v3833, %v3832
        %v3868 = vpack.c.bf16 %v3835, %v3834
        %v3869 = vpack.c.bf16 %v3837, %v3836
        %s3870 = scalar_lea.vmem %s2, 160
        %v3871 = vld [vmem:[%s3870] sm:$0xf]
        %v3872 = vld [vmem:[%s3870 + $0x4] sm:$0xf]
        %v3873 = vld [vmem:[%s3870 + $0x8] sm:$0xf]
        %v3874 = vld [vmem:[%s3870 + $0xc] sm:$0xf]
        %v3875 = vld [vmem:[%s3870 + $0x10] sm:$0xf]
        %v3876 = vld [vmem:[%s3870 + $0x14] sm:$0xf]
        %v3877 = vld [vmem:[%s3870 + $0x18] sm:$0xf]
        %v3878 = vld [vmem:[%s3870 + $0x1c] sm:$0xf]
        %s3879 = scalar_lea.vmem %s4, 6
        %v3880 = vld [vmem:[%s3879] sm:$0x1]
        %v3882 = vlaneseq
        %v3883 = vshrl.u32 %v3882, 7
        %v3884 = vsub.s32 0, %v3883
        %v3885 = vrot.slane %v3880, %v3884
        %v3895 = vunpack.c.l.b16 %v3871
        %v3896 = vunpack.c.l.b16 %v3872
        %v3897 = vunpack.c.l.b16 %v3873
        %v3898 = vunpack.c.l.b16 %v3874
        %v3899 = vunpack.c.l.b16 %v3875
        %v3900 = vunpack.c.l.b16 %v3876
        %v3901 = vunpack.c.l.b16 %v3877
        %v3902 = vunpack.c.l.b16 %v3878
        %v3903 = vpack.c.b16 %v3896, %v3895
        %v3904 = vpack.c.b16 %v3898, %v3897
        %v3905 = vpack.c.b16 %v3900, %v3899
        %v3906 = vpack.c.b16 %v3902, %v3901
        %v3912 = vsel %vm923, %v3838, 0
        %v3915 = vsel %vm923, %v3839, 0
        %v3918 = vsel %vm923, %v3840, 0
        %v3921 = vsel %vm923, %v3841, 0
        %v3924 = vsel %vm923, %v3842, 0
        %v3927 = vsel %vm923, %v3843, 0
        %v3930 = vsel %vm923, %v3844, 0
        %v3933 = vsel %vm923, %v3845, 0
        %v3936 = vsel %vm923, %v3846, 0
        %v3939 = vsel %vm923, %v3847, 0
        %v3942 = vsel %vm923, %v3848, 0
        %v3945 = vsel %vm923, %v3849, 0
        %v3948 = vsel %vm923, %v3850, 0
        %v3951 = vsel %vm923, %v3851, 0
        %v3954 = vsel %vm923, %v3852, 0
        %v3957 = vsel %vm923, %v3853, 0
        %v3960 = vsel %vm923, %v3854, 0
        %v3963 = vsel %vm923, %v3855, 0
        %v3966 = vsel %vm923, %v3856, 0
        %v3969 = vsel %vm923, %v3857, 0
        %v3972 = vsel %vm923, %v3858, 0
        %v3975 = vsel %vm923, %v3859, 0
        %v3978 = vsel %vm923, %v3860, 0
        %v3981 = vsel %vm923, %v3861, 0
        %v3984 = vsel %vm923, %v3862, 0
        %v3987 = vsel %vm923, %v3863, 0
        %v3990 = vsel %vm923, %v3864, 0
        %v3993 = vsel %vm923, %v3865, 0
        %v3996 = vsel %vm923, %v3866, 0
        %v3999 = vsel %vm923, %v3867, 0
        %v4002 = vsel %vm923, %v3868, 0
        %v4005 = vsel %vm923, %v3869, 0
        %4007 = vmatprep.subr.bf16.mxu0 0
        %4008 = vmatpush1.bf16.msra.mxu0 %v3903
        %4009 = vmatprep.subr.bf16.mxu0 0
        %4010 = vmatpush1.bf16.msra.mxu0 %v3904
        %4011 = vmatprep.subr.bf16.mxu0 0
        %4012 = vmatpush1.bf16.msra.mxu0 %v3905
        %4013 = vmatprep.subr.bf16.mxu0 0
        %4014 = vmatpush1.bf16.msra.mxu0 %v3906
        %4015 = vmatprep.subr.bf16.mxu0 0
        %4016 = vmatpush1.bf16.msra.mxu0 0
        %4017 = vmatprep.subr.bf16.mxu0 0
        %4018 = vmatpush1.bf16.msra.mxu0 0
        %4019 = vmatprep.subr.bf16.mxu0 0
        %4020 = vmatpush1.bf16.msra.mxu0 0
        %4021 = vmatprep.subr.bf16.mxu0 0
        %4022 = vmatpush1.bf16.msra.mxu0 0
        %4023 = vmatprep.subr.bf16.mxu0 0
        %4024 = vmatpush1.bf16.msra.mxu0 0
        %4025 = vmatprep.subr.bf16.mxu0 0
        %4026 = vmatpush1.bf16.msra.mxu0 0
        %4027 = vmatprep.subr.bf16.mxu0 0
        %4028 = vmatpush1.bf16.msra.mxu0 0
        %4029 = vmatprep.subr.bf16.mxu0 0
        %4030 = vmatpush1.bf16.msra.mxu0 0
        %4031 = vmatprep.subr.bf16.mxu0 0
        %4032 = vmatpush1.bf16.msra.mxu0 0
        %4033 = vmatprep.subr.bf16.mxu0 0
        %4034 = vmatpush1.bf16.msra.mxu0 0
        %4035 = vmatprep.subr.bf16.mxu0 0
        %4036 = vmatpush1.bf16.msra.mxu0 0
        %4037 = vmatprep.subr.bf16.mxu0 0
        %4038 = vmatpush1.bf16.msra.mxu0 0
        %4039 = vmatprep.mubr.bf16.mxu0 0
        %4040 = vmatmul.mubr.bf16.gmra.mrb[0].mxu0 %v3912
        %v4041 = vpop.f32.mrb[0].mxu0
        %v4042 = vadd.f32 %v3885, %v4041
        %v4043 = vpop.f32.mrb[0].mxu0
        %v4044 = vpop.f32.mrb[0].mxu0
        %v4045 = vadd.f32 %v3885, %v4044
        %v4046 = vpop.f32.mrb[0].mxu0
        %4047 = vmatprep.mubr.bf16.mxu0 0
        %4048 = vmatmul.mubr.bf16.gmra.mrb[0].mxu0 %v3915
        %v4049 = vpop.f32.mrb[0].mxu0
        %v4050 = vadd.f32 %v3885, %v4049
        %v4051 = vpop.f32.mrb[0].mxu0
        %v4052 = vpop.f32.mrb[0].mxu0
        %v4053 = vadd.f32 %v3885, %v4052
        %v4054 = vpop.f32.mrb[0].mxu0
        %4055 = vmatprep.mubr.bf16.mxu0 0
        %4056 = vmatmul.mubr.bf16.gmra.mrb[0].mxu0 %v3918
        %v4057 = vpop.f32.mrb[0].mxu0
        %v4058 = vadd.f32 %v3885, %v4057
        %v4059 = vpop.f32.mrb[0].mxu0
        %v4060 = vpop.f32.mrb[0].mxu0
        %v4061 = vadd.f32 %v3885, %v4060
        %v4062 = vpop.f32.mrb[0].mxu0
        %4063 = vmatprep.mubr.bf16.mxu0 0
        %4064 = vmatmul.mubr.bf16.gmra.mrb[0].mxu0 %v3921
        %v4065 = vpop.f32.mrb[0].mxu0
        %v4066 = vadd.f32 %v3885, %v4065
        %v4067 = vpop.f32.mrb[0].mxu0
        %v4068 = vpop.f32.mrb[0].mxu0
        %v4069 = vadd.f32 %v3885, %v4068
        %v4070 = vpop.f32.mrb[0].mxu0
        %4071 = vmatprep.mubr.bf16.mxu0 0
        %4072 = vmatmul.mubr.bf16.gmra.mrb[0].mxu0 %v3924
        %v4073 = vpop.f32.mrb[0].mxu0
        %v4074 = vadd.f32 %v3885, %v4073
        %v4075 = vpop.f32.mrb[0].mxu0
        %v4076 = vpop.f32.mrb[0].mxu0
        %v4077 = vadd.f32 %v3885, %v4076
        %v4078 = vpop.f32.mrb[0].mxu0
        %4079 = vmatprep.mubr.bf16.mxu0 0
        %4080 = vmatmul.mubr.bf16.gmra.mrb[0].mxu0 %v3927
        %v4081 = vpop.f32.mrb[0].mxu0
        %v4082 = vadd.f32 %v3885, %v4081
        %v4083 = vpop.f32.mrb[0].mxu0
        %v4084 = vpop.f32.mrb[0].mxu0
        %v4085 = vadd.f32 %v3885, %v4084
        %v4086 = vpop.f32.mrb[0].mxu0
        %4087 = vmatprep.mubr.bf16.mxu0 0
        %4088 = vmatmul.mubr.bf16.gmra.mrb[0].mxu0 %v3930
        %v4089 = vpop.f32.mrb[0].mxu0
        %v4090 = vadd.f32 %v3885, %v4089
        %v4091 = vpop.f32.mrb[0].mxu0
        %v4092 = vpop.f32.mrb[0].mxu0
        %v4093 = vadd.f32 %v3885, %v4092
        %v4094 = vpop.f32.mrb[0].mxu0
        %4095 = vmatprep.mubr.bf16.mxu0 0
        %4096 = vmatmul.mubr.bf16.gmra.mrb[0].mxu0 %v3933
        %v4097 = vpop.f32.mrb[0].mxu0
        %v4098 = vadd.f32 %v3885, %v4097
        %v4099 = vpop.f32.mrb[0].mxu0
        %v4100 = vpop.f32.mrb[0].mxu0
        %v4101 = vadd.f32 %v3885, %v4100
        %v4102 = vpop.f32.mrb[0].mxu0
        %4103 = vmatprep.mubr.bf16.mxu0 0
        %4104 = vmatmul.mubr.bf16.gmra.mrb[0].mxu0 %v3936
        %v4105 = vpop.f32.mrb[0].mxu0
        %v4106 = vadd.f32 %v3885, %v4105
        %v4107 = vpop.f32.mrb[0].mxu0
        %v4108 = vpop.f32.mrb[0].mxu0
        %v4109 = vadd.f32 %v3885, %v4108
        %v4110 = vpop.f32.mrb[0].mxu0
        %4111 = vmatprep.mubr.bf16.mxu0 0
        %4112 = vmatmul.mubr.bf16.gmra.mrb[0].mxu0 %v3939
        %v4113 = vpop.f32.mrb[0].mxu0
        %v4114 = vadd.f32 %v3885, %v4113
        %v4115 = vpop.f32.mrb[0].mxu0
        %v4116 = vpop.f32.mrb[0].mxu0
        %v4117 = vadd.f32 %v3885, %v4116
        %v4118 = vpop.f32.mrb[0].mxu0
        %4119 = vmatprep.mubr.bf16.mxu0 0
        %4120 = vmatmul.mubr.bf16.gmra.mrb[0].mxu0 %v3942
        %v4121 = vpop.f32.mrb[0].mxu0
        %v4122 = vadd.f32 %v3885, %v4121
        %v4123 = vpop.f32.mrb[0].mxu0
        %v4124 = vpop.f32.mrb[0].mxu0
        %v4125 = vadd.f32 %v3885, %v4124
        %v4126 = vpop.f32.mrb[0].mxu0
        %4127 = vmatprep.mubr.bf16.mxu0 0
        %4128 = vmatmul.mubr.bf16.gmra.mrb[0].mxu0 %v3945
        %v4129 = vpop.f32.mrb[0].mxu0
        %v4130 = vadd.f32 %v3885, %v4129
        %v4131 = vpop.f32.mrb[0].mxu0
        %v4132 = vpop.f32.mrb[0].mxu0
        %v4133 = vadd.f32 %v3885, %v4132
        %v4134 = vpop.f32.mrb[0].mxu0
        %4135 = vmatprep.mubr.bf16.mxu0 0
        %4136 = vmatmul.mubr.bf16.gmra.mrb[0].mxu0 %v3948
        %v4137 = vpop.f32.mrb[0].mxu0
        %v4138 = vadd.f32 %v3885, %v4137
        %v4139 = vpop.f32.mrb[0].mxu0
        %v4140 = vpop.f32.mrb[0].mxu0
        %v4141 = vadd.f32 %v3885, %v4140
        %v4142 = vpop.f32.mrb[0].mxu0
        %4143 = vmatprep.mubr.bf16.mxu0 0
        %4144 = vmatmul.mubr.bf16.gmra.mrb[0].mxu0 %v3951
        %v4145 = vpop.f32.mrb[0].mxu0
        %v4146 = vadd.f32 %v3885, %v4145
        %v4147 = vpop.f32.mrb[0].mxu0
        %v4148 = vpop.f32.mrb[0].mxu0
        %v4149 = vadd.f32 %v3885, %v4148
        %v4150 = vpop.f32.mrb[0].mxu0
        %4151 = vmatprep.mubr.bf16.mxu0 0
        %4152 = vmatmul.mubr.bf16.gmra.mrb[0].mxu0 %v3954
        %v4153 = vpop.f32.mrb[0].mxu0
        %v4154 = vadd.f32 %v3885, %v4153
        %v4155 = vpop.f32.mrb[0].mxu0
        %v4156 = vpop.f32.mrb[0].mxu0
        %v4157 = vadd.f32 %v3885, %v4156
        %v4158 = vpop.f32.mrb[0].mxu0
        %4159 = vmatprep.mubr.bf16.mxu0 0
        %4160 = vmatmul.mubr.bf16.gmra.mrb[0].mxu0 %v3957
        %v4161 = vpop.f32.mrb[0].mxu0
        %v4162 = vadd.f32 %v3885, %v4161
        %v4163 = vpop.f32.mrb[0].mxu0
        %v4164 = vpop.f32.mrb[0].mxu0
        %v4165 = vadd.f32 %v3885, %v4164
        %v4166 = vpop.f32.mrb[0].mxu0
        %4167 = vmatprep.mubr.bf16.mxu0 0
        %4168 = vmatmul.mubr.bf16.gmra.mrb[0].mxu0 %v3960
        %v4169 = vpop.f32.mrb[0].mxu0
        %v4170 = vadd.f32 %v3885, %v4169
        %v4171 = vpop.f32.mrb[0].mxu0
        %v4172 = vpop.f32.mrb[0].mxu0
        %v4173 = vadd.f32 %v3885, %v4172
        %v4174 = vpop.f32.mrb[0].mxu0
        %4175 = vmatprep.mubr.bf16.mxu0 0
        %4176 = vmatmul.mubr.bf16.gmra.mrb[0].mxu0 %v3963
        %v4177 = vpop.f32.mrb[0].mxu0
        %v4178 = vadd.f32 %v3885, %v4177
        %v4179 = vpop.f32.mrb[0].mxu0
        %v4180 = vpop.f32.mrb[0].mxu0
        %v4181 = vadd.f32 %v3885, %v4180
        %v4182 = vpop.f32.mrb[0].mxu0
        %4183 = vmatprep.mubr.bf16.mxu0 0
        %4184 = vmatmul.mubr.bf16.gmra.mrb[0].mxu0 %v3966
        %v4185 = vpop.f32.mrb[0].mxu0
        %v4186 = vadd.f32 %v3885, %v4185
        %v4187 = vpop.f32.mrb[0].mxu0
        %v4188 = vpop.f32.mrb[0].mxu0
        %v4189 = vadd.f32 %v3885, %v4188
        %v4190 = vpop.f32.mrb[0].mxu0
        %4191 = vmatprep.mubr.bf16.mxu0 0
        %4192 = vmatmul.mubr.bf16.gmra.mrb[0].mxu0 %v3969
        %v4193 = vpop.f32.mrb[0].mxu0
        %v4194 = vadd.f32 %v3885, %v4193
        %v4195 = vpop.f32.mrb[0].mxu0
        %v4196 = vpop.f32.mrb[0].mxu0
        %v4197 = vadd.f32 %v3885, %v4196
        %v4198 = vpop.f32.mrb[0].mxu0
        %4199 = vmatprep.mubr.bf16.mxu0 0
        %4200 = vmatmul.mubr.bf16.gmra.mrb[0].mxu0 %v3972
        %v4201 = vpop.f32.mrb[0].mxu0
        %v4202 = vadd.f32 %v3885, %v4201
        %v4203 = vpop.f32.mrb[0].mxu0
        %v4204 = vpop.f32.mrb[0].mxu0
        %v4205 = vadd.f32 %v3885, %v4204
        %v4206 = vpop.f32.mrb[0].mxu0
        %4207 = vmatprep.mubr.bf16.mxu0 0
        %4208 = vmatmul.mubr.bf16.gmra.mrb[0].mxu0 %v3975
        %v4209 = vpop.f32.mrb[0].mxu0
        %v4210 = vadd.f32 %v3885, %v4209
        %v4211 = vpop.f32.mrb[0].mxu0
        %v4212 = vpop.f32.mrb[0].mxu0
        %v4213 = vadd.f32 %v3885, %v4212
        %v4214 = vpop.f32.mrb[0].mxu0
        %4215 = vmatprep.mubr.bf16.mxu0 0
        %4216 = vmatmul.mubr.bf16.gmra.mrb[0].mxu0 %v3978
        %v4217 = vpop.f32.mrb[0].mxu0
        %v4218 = vadd.f32 %v3885, %v4217
        %v4219 = vpop.f32.mrb[0].mxu0
        %v4220 = vpop.f32.mrb[0].mxu0
        %v4221 = vadd.f32 %v3885, %v4220
        %v4222 = vpop.f32.mrb[0].mxu0
        %4223 = vmatprep.mubr.bf16.mxu0 0
        %4224 = vmatmul.mubr.bf16.gmra.mrb[0].mxu0 %v3981
        %v4225 = vpop.f32.mrb[0].mxu0
        %v4226 = vadd.f32 %v3885, %v4225
        %v4227 = vpop.f32.mrb[0].mxu0
        %v4228 = vpop.f32.mrb[0].mxu0
        %v4229 = vadd.f32 %v3885, %v4228
        %v4230 = vpop.f32.mrb[0].mxu0
        %4231 = vmatprep.mubr.bf16.mxu0 0
        %4232 = vmatmul.mubr.bf16.gmra.mrb[0].mxu0 %v3984
        %v4233 = vpop.f32.mrb[0].mxu0
        %v4234 = vadd.f32 %v3885, %v4233
        %v4235 = vpop.f32.mrb[0].mxu0
        %v4236 = vpop.f32.mrb[0].mxu0
        %v4237 = vadd.f32 %v3885, %v4236
        %v4238 = vpop.f32.mrb[0].mxu0
        %4239 = vmatprep.mubr.bf16.mxu0 0
        %4240 = vmatmul.mubr.bf16.gmra.mrb[0].mxu0 %v3987
        %v4241 = vpop.f32.mrb[0].mxu0
        %v4242 = vadd.f32 %v3885, %v4241
        %v4243 = vpop.f32.mrb[0].mxu0
        %v4244 = vpop.f32.mrb[0].mxu0
        %v4245 = vadd.f32 %v3885, %v4244
        %v4246 = vpop.f32.mrb[0].mxu0
        %4247 = vmatprep.mubr.bf16.mxu0 0
        %4248 = vmatmul.mubr.bf16.gmra.mrb[0].mxu0 %v3990
        %v4249 = vpop.f32.mrb[0].mxu0
        %v4250 = vadd.f32 %v3885, %v4249
        %v4251 = vpop.f32.mrb[0].mxu0
        %v4252 = vpop.f32.mrb[0].mxu0
        %v4253 = vadd.f32 %v3885, %v4252
        %v4254 = vpop.f32.mrb[0].mxu0
        %4255 = vmatprep.mubr.bf16.mxu0 0
        %4256 = vmatmul.mubr.bf16.gmra.mrb[0].mxu0 %v3993
        %v4257 = vpop.f32.mrb[0].mxu0
        %v4258 = vadd.f32 %v3885, %v4257
        %v4259 = vpop.f32.mrb[0].mxu0
        %v4260 = vpop.f32.mrb[0].mxu0
        %v4261 = vadd.f32 %v3885, %v4260
        %v4262 = vpop.f32.mrb[0].mxu0
        %4263 = vmatprep.mubr.bf16.mxu0 0
        %4264 = vmatmul.mubr.bf16.gmra.mrb[0].mxu0 %v3996
        %v4265 = vpop.f32.mrb[0].mxu0
        %v4266 = vadd.f32 %v3885, %v4265
        %v4267 = vpop.f32.mrb[0].mxu0
        %v4268 = vpop.f32.mrb[0].mxu0
        %v4269 = vadd.f32 %v3885, %v4268
        %v4270 = vpop.f32.mrb[0].mxu0
        %4271 = vmatprep.mubr.bf16.mxu0 0
        %4272 = vmatmul.mubr.bf16.gmra.mrb[0].mxu0 %v3999
        %v4273 = vpop.f32.mrb[0].mxu0
        %v4274 = vadd.f32 %v3885, %v4273
        %v4275 = vpop.f32.mrb[0].mxu0
        %v4276 = vpop.f32.mrb[0].mxu0
        %v4277 = vadd.f32 %v3885, %v4276
        %v4278 = vpop.f32.mrb[0].mxu0
        %4279 = vmatprep.mubr.bf16.mxu0 0
        %4280 = vmatmul.mubr.bf16.gmra.mrb[0].mxu0 %v4002
        %v4281 = vpop.f32.mrb[0].mxu0
        %v4282 = vadd.f32 %v3885, %v4281
        %v4283 = vpop.f32.mrb[0].mxu0
        %v4284 = vpop.f32.mrb[0].mxu0
        %v4285 = vadd.f32 %v3885, %v4284
        %v4286 = vpop.f32.mrb[0].mxu0
        %4287 = vmatprep.mubr.bf16.mxu0 0
        %4288 = vmatmul.mubr.bf16.gmra.mrb[0].mxu0 %v4005
        %v4289 = vpop.f32.mrb[0].mxu0
        %v4290 = vadd.f32 %v3885, %v4289
        %v4291 = vpop.f32.mrb[0].mxu0
        %v4292 = vpop.f32.mrb[0].mxu0
        %v4293 = vadd.f32 %v3885, %v4292
        %v4294 = vpop.f32.mrb[0].mxu0
        %4295 = vdwg.mxu0
        %v4296 = vmax.f32 %v4042, 0.0
        %v4297 = vmax.f32 %v4045, 0.0
        %v4298 = vmax.f32 %v4050, 0.0
        %v4299 = vmax.f32 %v4053, 0.0
        %v4300 = vmax.f32 %v4058, 0.0
        %v4301 = vmax.f32 %v4061, 0.0
        %v4302 = vmax.f32 %v4066, 0.0
        %v4303 = vmax.f32 %v4069, 0.0
        %v4304 = vmax.f32 %v4074, 0.0
        %v4305 = vmax.f32 %v4077, 0.0
        %v4306 = vmax.f32 %v4082, 0.0
        %v4307 = vmax.f32 %v4085, 0.0
        %v4308 = vmax.f32 %v4090, 0.0
        %v4309 = vmax.f32 %v4093, 0.0
        %v4310 = vmax.f32 %v4098, 0.0
        %v4311 = vmax.f32 %v4101, 0.0
        %v4312 = vmax.f32 %v4106, 0.0
        %v4313 = vmax.f32 %v4109, 0.0
        %v4314 = vmax.f32 %v4114, 0.0
        %v4315 = vmax.f32 %v4117, 0.0
        %v4316 = vmax.f32 %v4122, 0.0
        %v4317 = vmax.f32 %v4125, 0.0
        %v4318 = vmax.f32 %v4130, 0.0
        %v4319 = vmax.f32 %v4133, 0.0
        %v4320 = vmax.f32 %v4138, 0.0
        %v4321 = vmax.f32 %v4141, 0.0
        %v4322 = vmax.f32 %v4146, 0.0
        %v4323 = vmax.f32 %v4149, 0.0
        %v4324 = vmax.f32 %v4154, 0.0
        %v4325 = vmax.f32 %v4157, 0.0
        %v4326 = vmax.f32 %v4162, 0.0
        %v4327 = vmax.f32 %v4165, 0.0
        %v4328 = vmax.f32 %v4170, 0.0
        %v4329 = vmax.f32 %v4173, 0.0
        %v4330 = vmax.f32 %v4178, 0.0
        %v4331 = vmax.f32 %v4181, 0.0
        %v4332 = vmax.f32 %v4186, 0.0
        %v4333 = vmax.f32 %v4189, 0.0
        %v4334 = vmax.f32 %v4194, 0.0
        %v4335 = vmax.f32 %v4197, 0.0
        %v4336 = vmax.f32 %v4202, 0.0
        %v4337 = vmax.f32 %v4205, 0.0
        %v4338 = vmax.f32 %v4210, 0.0
        %v4339 = vmax.f32 %v4213, 0.0
        %v4340 = vmax.f32 %v4218, 0.0
        %v4341 = vmax.f32 %v4221, 0.0
        %v4342 = vmax.f32 %v4226, 0.0
        %v4343 = vmax.f32 %v4229, 0.0
        %v4344 = vmax.f32 %v4234, 0.0
        %v4345 = vmax.f32 %v4237, 0.0
        %v4346 = vmax.f32 %v4242, 0.0
        %v4347 = vmax.f32 %v4245, 0.0
        %v4348 = vmax.f32 %v4250, 0.0
        %v4349 = vmax.f32 %v4253, 0.0
        %v4350 = vmax.f32 %v4258, 0.0
        %v4351 = vmax.f32 %v4261, 0.0
        %v4352 = vmax.f32 %v4266, 0.0
        %v4353 = vmax.f32 %v4269, 0.0
        %v4354 = vmax.f32 %v4274, 0.0
        %v4355 = vmax.f32 %v4277, 0.0
        %v4356 = vmax.f32 %v4282, 0.0
        %v4357 = vmax.f32 %v4285, 0.0
        %v4358 = vmax.f32 %v4290, 0.0
        %v4359 = vmax.f32 %v4293, 0.0
        %v4360 = vpack.c.bf16 %v4297, %v4296
        %v4361 = vpack.c.bf16 %v4299, %v4298
        %v4362 = vpack.c.bf16 %v4301, %v4300
        %v4363 = vpack.c.bf16 %v4303, %v4302
        %v4364 = vpack.c.bf16 %v4305, %v4304
        %v4365 = vpack.c.bf16 %v4307, %v4306
        %v4366 = vpack.c.bf16 %v4309, %v4308
        %v4367 = vpack.c.bf16 %v4311, %v4310
        %v4368 = vpack.c.bf16 %v4313, %v4312
        %v4369 = vpack.c.bf16 %v4315, %v4314
        %v4370 = vpack.c.bf16 %v4317, %v4316
        %v4371 = vpack.c.bf16 %v4319, %v4318
        %v4372 = vpack.c.bf16 %v4321, %v4320
        %v4373 = vpack.c.bf16 %v4323, %v4322
        %v4374 = vpack.c.bf16 %v4325, %v4324
        %v4375 = vpack.c.bf16 %v4327, %v4326
        %v4376 = vpack.c.bf16 %v4329, %v4328
        %v4377 = vpack.c.bf16 %v4331, %v4330
        %v4378 = vpack.c.bf16 %v4333, %v4332
        %v4379 = vpack.c.bf16 %v4335, %v4334
        %v4380 = vpack.c.bf16 %v4337, %v4336
        %v4381 = vpack.c.bf16 %v4339, %v4338
        %v4382 = vpack.c.bf16 %v4341, %v4340
        %v4383 = vpack.c.bf16 %v4343, %v4342
        %v4384 = vpack.c.bf16 %v4345, %v4344
        %v4385 = vpack.c.bf16 %v4347, %v4346
        %v4386 = vpack.c.bf16 %v4349, %v4348
        %v4387 = vpack.c.bf16 %v4351, %v4350
        %v4388 = vpack.c.bf16 %v4353, %v4352
        %v4389 = vpack.c.bf16 %v4355, %v4354
        %v4390 = vpack.c.bf16 %v4357, %v4356
        %v4391 = vpack.c.bf16 %v4359, %v4358
        %s4392 = scalar_lea.vmem %s2, 192
        %v4393 = vld [vmem:[%s4392] sm:$0xf]
        %v4394 = vld [vmem:[%s4392 + $0x4] sm:$0xf]
        %v4395 = vld [vmem:[%s4392 + $0x8] sm:$0xf]
        %v4396 = vld [vmem:[%s4392 + $0xc] sm:$0xf]
        %v4397 = vld [vmem:[%s4392 + $0x10] sm:$0xf]
        %v4398 = vld [vmem:[%s4392 + $0x14] sm:$0xf]
        %v4399 = vld [vmem:[%s4392 + $0x18] sm:$0xf]
        %v4400 = vld [vmem:[%s4392 + $0x1c] sm:$0xf]
        %s4401 = scalar_lea.vmem %s4, 7
        %v4402 = vld [vmem:[%s4401] sm:$0x1]
        %v4404 = vlaneseq
        %v4405 = vshrl.u32 %v4404, 7
        %v4406 = vsub.s32 0, %v4405
        %v4407 = vrot.slane %v4402, %v4406
        %v4417 = vunpack.c.l.b16 %v4393
        %v4418 = vunpack.c.l.b16 %v4394
        %v4419 = vunpack.c.l.b16 %v4395
        %v4420 = vunpack.c.l.b16 %v4396
        %v4421 = vunpack.c.l.b16 %v4397
        %v4422 = vunpack.c.l.b16 %v4398
        %v4423 = vunpack.c.l.b16 %v4399
        %v4424 = vunpack.c.l.b16 %v4400
        %v4425 = vpack.c.b16 %v4418, %v4417
        %v4426 = vpack.c.b16 %v4420, %v4419
        %v4427 = vpack.c.b16 %v4422, %v4421
        %v4428 = vpack.c.b16 %v4424, %v4423
        %v4434 = vsel %vm923, %v4360, 0
        %v4437 = vsel %vm923, %v4361, 0
        %v4440 = vsel %vm923, %v4362, 0
        %v4443 = vsel %vm923, %v4363, 0
        %v4446 = vsel %vm923, %v4364, 0
        %v4449 = vsel %vm923, %v4365, 0
        %v4452 = vsel %vm923, %v4366, 0
        %v4455 = vsel %vm923, %v4367, 0
        %v4458 = vsel %vm923, %v4368, 0
        %v4461 = vsel %vm923, %v4369, 0
        %v4464 = vsel %vm923, %v4370, 0
        %v4467 = vsel %vm923, %v4371, 0
        %v4470 = vsel %vm923, %v4372, 0
        %v4473 = vsel %vm923, %v4373, 0
        %v4476 = vsel %vm923, %v4374, 0
        %v4479 = vsel %vm923, %v4375, 0
        %v4482 = vsel %vm923, %v4376, 0
        %v4485 = vsel %vm923, %v4377, 0
        %v4488 = vsel %vm923, %v4378, 0
        %v4491 = vsel %vm923, %v4379, 0
        %v4494 = vsel %vm923, %v4380, 0
        %v4497 = vsel %vm923, %v4381, 0
        %v4500 = vsel %vm923, %v4382, 0
        %v4503 = vsel %vm923, %v4383, 0
        %v4506 = vsel %vm923, %v4384, 0
        %v4509 = vsel %vm923, %v4385, 0
        %v4512 = vsel %vm923, %v4386, 0
        %v4515 = vsel %vm923, %v4387, 0
        %v4518 = vsel %vm923, %v4388, 0
        %v4521 = vsel %vm923, %v4389, 0
        %v4524 = vsel %vm923, %v4390, 0
        %v4527 = vsel %vm923, %v4391, 0
        %4529 = vmatprep.subr.bf16.mxu0 0
        %4530 = vmatpush1.bf16.msra.mxu0 %v4425
        %4531 = vmatprep.subr.bf16.mxu0 0
        %4532 = vmatpush1.bf16.msra.mxu0 %v4426
        %4533 = vmatprep.subr.bf16.mxu0 0
        %4534 = vmatpush1.bf16.msra.mxu0 %v4427
        %4535 = vmatprep.subr.bf16.mxu0 0
        %4536 = vmatpush1.bf16.msra.mxu0 %v4428
        %4537 = vmatprep.subr.bf16.mxu0 0
        %4538 = vmatpush1.bf16.msra.mxu0 0
        %4539 = vmatprep.subr.bf16.mxu0 0
        %4540 = vmatpush1.bf16.msra.mxu0 0
        %4541 = vmatprep.subr.bf16.mxu0 0
        %4542 = vmatpush1.bf16.msra.mxu0 0
        %4543 = vmatprep.subr.bf16.mxu0 0
        %4544 = vmatpush1.bf16.msra.mxu0 0
        %4545 = vmatprep.subr.bf16.mxu0 0
        %4546 = vmatpush1.bf16.msra.mxu0 0
        %4547 = vmatprep.subr.bf16.mxu0 0
        %4548 = vmatpush1.bf16.msra.mxu0 0
        %4549 = vmatprep.subr.bf16.mxu0 0
        %4550 = vmatpush1.bf16.msra.mxu0 0
        %4551 = vmatprep.subr.bf16.mxu0 0
        %4552 = vmatpush1.bf16.msra.mxu0 0
        %4553 = vmatprep.subr.bf16.mxu0 0
        %4554 = vmatpush1.bf16.msra.mxu0 0
        %4555 = vmatprep.subr.bf16.mxu0 0
        %4556 = vmatpush1.bf16.msra.mxu0 0
        %4557 = vmatprep.subr.bf16.mxu0 0
        %4558 = vmatpush1.bf16.msra.mxu0 0
        %4559 = vmatprep.subr.bf16.mxu0 0
        %4560 = vmatpush1.bf16.msra.mxu0 0
        %4561 = vmatprep.mubr.bf16.mxu0 0
        %4562 = vmatmul.mubr.bf16.gmra.mrb[0].mxu0 %v4434
        %v4563 = vpop.f32.mrb[0].mxu0
        %v4564 = vadd.f32 %v4407, %v4563
        %v4565 = vpop.f32.mrb[0].mxu0
        %v4566 = vpop.f32.mrb[0].mxu0
        %v4567 = vadd.f32 %v4407, %v4566
        %v4568 = vpop.f32.mrb[0].mxu0
        %4569 = vmatprep.mubr.bf16.mxu0 0
        %4570 = vmatmul.mubr.bf16.gmra.mrb[0].mxu0 %v4437
        %v4571 = vpop.f32.mrb[0].mxu0
        %v4572 = vadd.f32 %v4407, %v4571
        %v4573 = vpop.f32.mrb[0].mxu0
        %v4574 = vpop.f32.mrb[0].mxu0
        %v4575 = vadd.f32 %v4407, %v4574
        %v4576 = vpop.f32.mrb[0].mxu0
        %4577 = vmatprep.mubr.bf16.mxu0 0
        %4578 = vmatmul.mubr.bf16.gmra.mrb[0].mxu0 %v4440
        %v4579 = vpop.f32.mrb[0].mxu0
        %v4580 = vadd.f32 %v4407, %v4579
        %v4581 = vpop.f32.mrb[0].mxu0
        %v4582 = vpop.f32.mrb[0].mxu0
        %v4583 = vadd.f32 %v4407, %v4582
        %v4584 = vpop.f32.mrb[0].mxu0
        %4585 = vmatprep.mubr.bf16.mxu0 0
        %4586 = vmatmul.mubr.bf16.gmra.mrb[0].mxu0 %v4443
        %v4587 = vpop.f32.mrb[0].mxu0
        %v4588 = vadd.f32 %v4407, %v4587
        %v4589 = vpop.f32.mrb[0].mxu0
        %v4590 = vpop.f32.mrb[0].mxu0
        %v4591 = vadd.f32 %v4407, %v4590
        %v4592 = vpop.f32.mrb[0].mxu0
        %4593 = vmatprep.mubr.bf16.mxu0 0
        %4594 = vmatmul.mubr.bf16.gmra.mrb[0].mxu0 %v4446
        %v4595 = vpop.f32.mrb[0].mxu0
        %v4596 = vadd.f32 %v4407, %v4595
        %v4597 = vpop.f32.mrb[0].mxu0
        %v4598 = vpop.f32.mrb[0].mxu0
        %v4599 = vadd.f32 %v4407, %v4598
        %v4600 = vpop.f32.mrb[0].mxu0
        %4601 = vmatprep.mubr.bf16.mxu0 0
        %4602 = vmatmul.mubr.bf16.gmra.mrb[0].mxu0 %v4449
        %v4603 = vpop.f32.mrb[0].mxu0
        %v4604 = vadd.f32 %v4407, %v4603
        %v4605 = vpop.f32.mrb[0].mxu0
        %v4606 = vpop.f32.mrb[0].mxu0
        %v4607 = vadd.f32 %v4407, %v4606
        %v4608 = vpop.f32.mrb[0].mxu0
        %4609 = vmatprep.mubr.bf16.mxu0 0
        %4610 = vmatmul.mubr.bf16.gmra.mrb[0].mxu0 %v4452
        %v4611 = vpop.f32.mrb[0].mxu0
        %v4612 = vadd.f32 %v4407, %v4611
        %v4613 = vpop.f32.mrb[0].mxu0
        %v4614 = vpop.f32.mrb[0].mxu0
        %v4615 = vadd.f32 %v4407, %v4614
        %v4616 = vpop.f32.mrb[0].mxu0
        %4617 = vmatprep.mubr.bf16.mxu0 0
        %4618 = vmatmul.mubr.bf16.gmra.mrb[0].mxu0 %v4455
        %v4619 = vpop.f32.mrb[0].mxu0
        %v4620 = vadd.f32 %v4407, %v4619
        %v4621 = vpop.f32.mrb[0].mxu0
        %v4622 = vpop.f32.mrb[0].mxu0
        %v4623 = vadd.f32 %v4407, %v4622
        %v4624 = vpop.f32.mrb[0].mxu0
        %4625 = vmatprep.mubr.bf16.mxu0 0
        %4626 = vmatmul.mubr.bf16.gmra.mrb[0].mxu0 %v4458
        %v4627 = vpop.f32.mrb[0].mxu0
        %v4628 = vadd.f32 %v4407, %v4627
        %v4629 = vpop.f32.mrb[0].mxu0
        %v4630 = vpop.f32.mrb[0].mxu0
        %v4631 = vadd.f32 %v4407, %v4630
        %v4632 = vpop.f32.mrb[0].mxu0
        %4633 = vmatprep.mubr.bf16.mxu0 0
        %4634 = vmatmul.mubr.bf16.gmra.mrb[0].mxu0 %v4461
        %v4635 = vpop.f32.mrb[0].mxu0
        %v4636 = vadd.f32 %v4407, %v4635
        %v4637 = vpop.f32.mrb[0].mxu0
        %v4638 = vpop.f32.mrb[0].mxu0
        %v4639 = vadd.f32 %v4407, %v4638
        %v4640 = vpop.f32.mrb[0].mxu0
        %4641 = vmatprep.mubr.bf16.mxu0 0
        %4642 = vmatmul.mubr.bf16.gmra.mrb[0].mxu0 %v4464
        %v4643 = vpop.f32.mrb[0].mxu0
        %v4644 = vadd.f32 %v4407, %v4643
        %v4645 = vpop.f32.mrb[0].mxu0
        %v4646 = vpop.f32.mrb[0].mxu0
        %v4647 = vadd.f32 %v4407, %v4646
        %v4648 = vpop.f32.mrb[0].mxu0
        %4649 = vmatprep.mubr.bf16.mxu0 0
        %4650 = vmatmul.mubr.bf16.gmra.mrb[0].mxu0 %v4467
        %v4651 = vpop.f32.mrb[0].mxu0
        %v4652 = vadd.f32 %v4407, %v4651
        %v4653 = vpop.f32.mrb[0].mxu0
        %v4654 = vpop.f32.mrb[0].mxu0
        %v4655 = vadd.f32 %v4407, %v4654
        %v4656 = vpop.f32.mrb[0].mxu0
        %4657 = vmatprep.mubr.bf16.mxu0 0
        %4658 = vmatmul.mubr.bf16.gmra.mrb[0].mxu0 %v4470
        %v4659 = vpop.f32.mrb[0].mxu0
        %v4660 = vadd.f32 %v4407, %v4659
        %v4661 = vpop.f32.mrb[0].mxu0
        %v4662 = vpop.f32.mrb[0].mxu0
        %v4663 = vadd.f32 %v4407, %v4662
        %v4664 = vpop.f32.mrb[0].mxu0
        %4665 = vmatprep.mubr.bf16.mxu0 0
        %4666 = vmatmul.mubr.bf16.gmra.mrb[0].mxu0 %v4473
        %v4667 = vpop.f32.mrb[0].mxu0
        %v4668 = vadd.f32 %v4407, %v4667
        %v4669 = vpop.f32.mrb[0].mxu0
        %v4670 = vpop.f32.mrb[0].mxu0
        %v4671 = vadd.f32 %v4407, %v4670
        %v4672 = vpop.f32.mrb[0].mxu0
        %4673 = vmatprep.mubr.bf16.mxu0 0
        %4674 = vmatmul.mubr.bf16.gmra.mrb[0].mxu0 %v4476
        %v4675 = vpop.f32.mrb[0].mxu0
        %v4676 = vadd.f32 %v4407, %v4675
        %v4677 = vpop.f32.mrb[0].mxu0
        %v4678 = vpop.f32.mrb[0].mxu0
        %v4679 = vadd.f32 %v4407, %v4678
        %v4680 = vpop.f32.mrb[0].mxu0
        %4681 = vmatprep.mubr.bf16.mxu0 0
        %4682 = vmatmul.mubr.bf16.gmra.mrb[0].mxu0 %v4479
        %v4683 = vpop.f32.mrb[0].mxu0
        %v4684 = vadd.f32 %v4407, %v4683
        %v4685 = vpop.f32.mrb[0].mxu0
        %v4686 = vpop.f32.mrb[0].mxu0
        %v4687 = vadd.f32 %v4407, %v4686
        %v4688 = vpop.f32.mrb[0].mxu0
        %4689 = vmatprep.mubr.bf16.mxu0 0
        %4690 = vmatmul.mubr.bf16.gmra.mrb[0].mxu0 %v4482
        %v4691 = vpop.f32.mrb[0].mxu0
        %v4692 = vadd.f32 %v4407, %v4691
        %v4693 = vpop.f32.mrb[0].mxu0
        %v4694 = vpop.f32.mrb[0].mxu0
        %v4695 = vadd.f32 %v4407, %v4694
        %v4696 = vpop.f32.mrb[0].mxu0
        %4697 = vmatprep.mubr.bf16.mxu0 0
        %4698 = vmatmul.mubr.bf16.gmra.mrb[0].mxu0 %v4485
        %v4699 = vpop.f32.mrb[0].mxu0
        %v4700 = vadd.f32 %v4407, %v4699
        %v4701 = vpop.f32.mrb[0].mxu0
        %v4702 = vpop.f32.mrb[0].mxu0
        %v4703 = vadd.f32 %v4407, %v4702
        %v4704 = vpop.f32.mrb[0].mxu0
        %4705 = vmatprep.mubr.bf16.mxu0 0
        %4706 = vmatmul.mubr.bf16.gmra.mrb[0].mxu0 %v4488
        %v4707 = vpop.f32.mrb[0].mxu0
        %v4708 = vadd.f32 %v4407, %v4707
        %v4709 = vpop.f32.mrb[0].mxu0
        %v4710 = vpop.f32.mrb[0].mxu0
        %v4711 = vadd.f32 %v4407, %v4710
        %v4712 = vpop.f32.mrb[0].mxu0
        %4713 = vmatprep.mubr.bf16.mxu0 0
        %4714 = vmatmul.mubr.bf16.gmra.mrb[0].mxu0 %v4491
        %v4715 = vpop.f32.mrb[0].mxu0
        %v4716 = vadd.f32 %v4407, %v4715
        %v4717 = vpop.f32.mrb[0].mxu0
        %v4718 = vpop.f32.mrb[0].mxu0
        %v4719 = vadd.f32 %v4407, %v4718
        %v4720 = vpop.f32.mrb[0].mxu0
        %4721 = vmatprep.mubr.bf16.mxu0 0
        %4722 = vmatmul.mubr.bf16.gmra.mrb[0].mxu0 %v4494
        %v4723 = vpop.f32.mrb[0].mxu0
        %v4724 = vadd.f32 %v4407, %v4723
        %v4725 = vpop.f32.mrb[0].mxu0
        %v4726 = vpop.f32.mrb[0].mxu0
        %v4727 = vadd.f32 %v4407, %v4726
        %v4728 = vpop.f32.mrb[0].mxu0
        %4729 = vmatprep.mubr.bf16.mxu0 0
        %4730 = vmatmul.mubr.bf16.gmra.mrb[0].mxu0 %v4497
        %v4731 = vpop.f32.mrb[0].mxu0
        %v4732 = vadd.f32 %v4407, %v4731
        %v4733 = vpop.f32.mrb[0].mxu0
        %v4734 = vpop.f32.mrb[0].mxu0
        %v4735 = vadd.f32 %v4407, %v4734
        %v4736 = vpop.f32.mrb[0].mxu0
        %4737 = vmatprep.mubr.bf16.mxu0 0
        %4738 = vmatmul.mubr.bf16.gmra.mrb[0].mxu0 %v4500
        %v4739 = vpop.f32.mrb[0].mxu0
        %v4740 = vadd.f32 %v4407, %v4739
        %v4741 = vpop.f32.mrb[0].mxu0
        %v4742 = vpop.f32.mrb[0].mxu0
        %v4743 = vadd.f32 %v4407, %v4742
        %v4744 = vpop.f32.mrb[0].mxu0
        %4745 = vmatprep.mubr.bf16.mxu0 0
        %4746 = vmatmul.mubr.bf16.gmra.mrb[0].mxu0 %v4503
        %v4747 = vpop.f32.mrb[0].mxu0
        %v4748 = vadd.f32 %v4407, %v4747
        %v4749 = vpop.f32.mrb[0].mxu0
        %v4750 = vpop.f32.mrb[0].mxu0
        %v4751 = vadd.f32 %v4407, %v4750
        %v4752 = vpop.f32.mrb[0].mxu0
        %4753 = vmatprep.mubr.bf16.mxu0 0
        %4754 = vmatmul.mubr.bf16.gmra.mrb[0].mxu0 %v4506
        %v4755 = vpop.f32.mrb[0].mxu0
        %v4756 = vadd.f32 %v4407, %v4755
        %v4757 = vpop.f32.mrb[0].mxu0
        %v4758 = vpop.f32.mrb[0].mxu0
        %v4759 = vadd.f32 %v4407, %v4758
        %v4760 = vpop.f32.mrb[0].mxu0
        %4761 = vmatprep.mubr.bf16.mxu0 0
        %4762 = vmatmul.mubr.bf16.gmra.mrb[0].mxu0 %v4509
        %v4763 = vpop.f32.mrb[0].mxu0
        %v4764 = vadd.f32 %v4407, %v4763
        %v4765 = vpop.f32.mrb[0].mxu0
        %v4766 = vpop.f32.mrb[0].mxu0
        %v4767 = vadd.f32 %v4407, %v4766
        %v4768 = vpop.f32.mrb[0].mxu0
        %4769 = vmatprep.mubr.bf16.mxu0 0
        %4770 = vmatmul.mubr.bf16.gmra.mrb[0].mxu0 %v4512
        %v4771 = vpop.f32.mrb[0].mxu0
        %v4772 = vadd.f32 %v4407, %v4771
        %v4773 = vpop.f32.mrb[0].mxu0
        %v4774 = vpop.f32.mrb[0].mxu0
        %v4775 = vadd.f32 %v4407, %v4774
        %v4776 = vpop.f32.mrb[0].mxu0
        %4777 = vmatprep.mubr.bf16.mxu0 0
        %4778 = vmatmul.mubr.bf16.gmra.mrb[0].mxu0 %v4515
        %v4779 = vpop.f32.mrb[0].mxu0
        %v4780 = vadd.f32 %v4407, %v4779
        %v4781 = vpop.f32.mrb[0].mxu0
        %v4782 = vpop.f32.mrb[0].mxu0
        %v4783 = vadd.f32 %v4407, %v4782
        %v4784 = vpop.f32.mrb[0].mxu0
        %4785 = vmatprep.mubr.bf16.mxu0 0
        %4786 = vmatmul.mubr.bf16.gmra.mrb[0].mxu0 %v4518
        %v4787 = vpop.f32.mrb[0].mxu0
        %v4788 = vadd.f32 %v4407, %v4787
        %v4789 = vpop.f32.mrb[0].mxu0
        %v4790 = vpop.f32.mrb[0].mxu0
        %v4791 = vadd.f32 %v4407, %v4790
        %v4792 = vpop.f32.mrb[0].mxu0
        %4793 = vmatprep.mubr.bf16.mxu0 0
        %4794 = vmatmul.mubr.bf16.gmra.mrb[0].mxu0 %v4521
        %v4795 = vpop.f32.mrb[0].mxu0
        %v4796 = vadd.f32 %v4407, %v4795
        %v4797 = vpop.f32.mrb[0].mxu0
        %v4798 = vpop.f32.mrb[0].mxu0
        %v4799 = vadd.f32 %v4407, %v4798
        %v4800 = vpop.f32.mrb[0].mxu0
        %4801 = vmatprep.mubr.bf16.mxu0 0
        %4802 = vmatmul.mubr.bf16.gmra.mrb[0].mxu0 %v4524
        %v4803 = vpop.f32.mrb[0].mxu0
        %v4804 = vadd.f32 %v4407, %v4803
        %v4805 = vpop.f32.mrb[0].mxu0
        %v4806 = vpop.f32.mrb[0].mxu0
        %v4807 = vadd.f32 %v4407, %v4806
        %v4808 = vpop.f32.mrb[0].mxu0
        %4809 = vmatprep.mubr.bf16.mxu0 0
        %4810 = vmatmul.mubr.bf16.gmra.mrb[0].mxu0 %v4527
        %v4811 = vpop.f32.mrb[0].mxu0
        %v4812 = vadd.f32 %v4407, %v4811
        %v4813 = vpop.f32.mrb[0].mxu0
        %v4814 = vpop.f32.mrb[0].mxu0
        %v4815 = vadd.f32 %v4407, %v4814
        %v4816 = vpop.f32.mrb[0].mxu0
        %4817 = vdwg.mxu0
        %v4818 = vmax.f32 %v4564, 0.0
        %v4819 = vmax.f32 %v4567, 0.0
        %v4820 = vmax.f32 %v4572, 0.0
        %v4821 = vmax.f32 %v4575, 0.0
        %v4822 = vmax.f32 %v4580, 0.0
        %v4823 = vmax.f32 %v4583, 0.0
        %v4824 = vmax.f32 %v4588, 0.0
        %v4825 = vmax.f32 %v4591, 0.0
        %v4826 = vmax.f32 %v4596, 0.0
        %v4827 = vmax.f32 %v4599, 0.0
        %v4828 = vmax.f32 %v4604, 0.0
        %v4829 = vmax.f32 %v4607, 0.0
        %v4830 = vmax.f32 %v4612, 0.0
        %v4831 = vmax.f32 %v4615, 0.0
        %v4832 = vmax.f32 %v4620, 0.0
        %v4833 = vmax.f32 %v4623, 0.0
        %v4834 = vmax.f32 %v4628, 0.0
        %v4835 = vmax.f32 %v4631, 0.0
        %v4836 = vmax.f32 %v4636, 0.0
        %v4837 = vmax.f32 %v4639, 0.0
        %v4838 = vmax.f32 %v4644, 0.0
        %v4839 = vmax.f32 %v4647, 0.0
        %v4840 = vmax.f32 %v4652, 0.0
        %v4841 = vmax.f32 %v4655, 0.0
        %v4842 = vmax.f32 %v4660, 0.0
        %v4843 = vmax.f32 %v4663, 0.0
        %v4844 = vmax.f32 %v4668, 0.0
        %v4845 = vmax.f32 %v4671, 0.0
        %v4846 = vmax.f32 %v4676, 0.0
        %v4847 = vmax.f32 %v4679, 0.0
        %v4848 = vmax.f32 %v4684, 0.0
        %v4849 = vmax.f32 %v4687, 0.0
        %v4850 = vmax.f32 %v4692, 0.0
        %v4851 = vmax.f32 %v4695, 0.0
        %v4852 = vmax.f32 %v4700, 0.0
        %v4853 = vmax.f32 %v4703, 0.0
        %v4854 = vmax.f32 %v4708, 0.0
        %v4855 = vmax.f32 %v4711, 0.0
        %v4856 = vmax.f32 %v4716, 0.0
        %v4857 = vmax.f32 %v4719, 0.0
        %v4858 = vmax.f32 %v4724, 0.0
        %v4859 = vmax.f32 %v4727, 0.0
        %v4860 = vmax.f32 %v4732, 0.0
        %v4861 = vmax.f32 %v4735, 0.0
        %v4862 = vmax.f32 %v4740, 0.0
        %v4863 = vmax.f32 %v4743, 0.0
        %v4864 = vmax.f32 %v4748, 0.0
        %v4865 = vmax.f32 %v4751, 0.0
        %v4866 = vmax.f32 %v4756, 0.0
        %v4867 = vmax.f32 %v4759, 0.0
        %v4868 = vmax.f32 %v4764, 0.0
        %v4869 = vmax.f32 %v4767, 0.0
        %v4870 = vmax.f32 %v4772, 0.0
        %v4871 = vmax.f32 %v4775, 0.0
        %v4872 = vmax.f32 %v4780, 0.0
        %v4873 = vmax.f32 %v4783, 0.0
        %v4874 = vmax.f32 %v4788, 0.0
        %v4875 = vmax.f32 %v4791, 0.0
        %v4876 = vmax.f32 %v4796, 0.0
        %v4877 = vmax.f32 %v4799, 0.0
        %v4878 = vmax.f32 %v4804, 0.0
        %v4879 = vmax.f32 %v4807, 0.0
        %v4880 = vmax.f32 %v4812, 0.0
        %v4881 = vmax.f32 %v4815, 0.0
        %v4882 = vpack.c.bf16 %v4819, %v4818
        %v4883 = vpack.c.bf16 %v4821, %v4820
        %v4884 = vpack.c.bf16 %v4823, %v4822
        %v4885 = vpack.c.bf16 %v4825, %v4824
        %v4886 = vpack.c.bf16 %v4827, %v4826
        %v4887 = vpack.c.bf16 %v4829, %v4828
        %v4888 = vpack.c.bf16 %v4831, %v4830
        %v4889 = vpack.c.bf16 %v4833, %v4832
        %v4890 = vpack.c.bf16 %v4835, %v4834
        %v4891 = vpack.c.bf16 %v4837, %v4836
        %v4892 = vpack.c.bf16 %v4839, %v4838
        %v4893 = vpack.c.bf16 %v4841, %v4840
        %v4894 = vpack.c.bf16 %v4843, %v4842
        %v4895 = vpack.c.bf16 %v4845, %v4844
        %v4896 = vpack.c.bf16 %v4847, %v4846
        %v4897 = vpack.c.bf16 %v4849, %v4848
        %v4898 = vpack.c.bf16 %v4851, %v4850
        %v4899 = vpack.c.bf16 %v4853, %v4852
        %v4900 = vpack.c.bf16 %v4855, %v4854
        %v4901 = vpack.c.bf16 %v4857, %v4856
        %v4902 = vpack.c.bf16 %v4859, %v4858
        %v4903 = vpack.c.bf16 %v4861, %v4860
        %v4904 = vpack.c.bf16 %v4863, %v4862
        %v4905 = vpack.c.bf16 %v4865, %v4864
        %v4906 = vpack.c.bf16 %v4867, %v4866
        %v4907 = vpack.c.bf16 %v4869, %v4868
        %v4908 = vpack.c.bf16 %v4871, %v4870
        %v4909 = vpack.c.bf16 %v4873, %v4872
        %v4910 = vpack.c.bf16 %v4875, %v4874
        %v4911 = vpack.c.bf16 %v4877, %v4876
        %v4912 = vpack.c.bf16 %v4879, %v4878
        %v4913 = vpack.c.bf16 %v4881, %v4880
        %v4914 = vld [vmem:[%s3] sm:$0xf]
        %v4915 = vld [vmem:[%s3 + $0x4] sm:$0xf]
        %v4916 = vld [vmem:[%s3 + $0x8] sm:$0xf]
        %v4917 = vld [vmem:[%s3 + $0xc] sm:$0xf]
        %v4918 = vld [vmem:[%s3 + $0x10] sm:$0xf]
        %v4919 = vld [vmem:[%s3 + $0x14] sm:$0xf]
        %v4920 = vld [vmem:[%s3 + $0x18] sm:$0xf]
        %v4921 = vld [vmem:[%s3 + $0x1c] sm:$0xf]
        %v4922 = vld [vmem:[%s5] sm:$0x1]
        %v4924 = vlaneseq
        %v4925 = vshrl.u32 %v4924, 7
        %v4926 = vsub.s32 0, %v4925
        %v4927 = vrot.slane %v4922, %v4926
        %v4937 = vunpack.c.l.b16 %v4914
        %v4938 = vunpack.c.l.b16 %v4915
        %v4939 = vunpack.c.l.b16 %v4916
        %v4940 = vunpack.c.l.b16 %v4917
        %v4941 = vunpack.c.l.b16 %v4918
        %v4942 = vunpack.c.l.b16 %v4919
        %v4943 = vunpack.c.l.b16 %v4920
        %v4944 = vunpack.c.l.b16 %v4921
        %v4945 = vpack.c.b16 %v4938, %v4937
        %v4946 = vpack.c.b16 %v4940, %v4939
        %v4947 = vpack.c.b16 %v4942, %v4941
        %v4948 = vpack.c.b16 %v4944, %v4943
        %v4954 = vsel %vm923, %v4882, 0
        %v4957 = vsel %vm923, %v4883, 0
        %v4960 = vsel %vm923, %v4884, 0
        %v4963 = vsel %vm923, %v4885, 0
        %v4966 = vsel %vm923, %v4886, 0
        %v4969 = vsel %vm923, %v4887, 0
        %v4972 = vsel %vm923, %v4888, 0
        %v4975 = vsel %vm923, %v4889, 0
        %v4978 = vsel %vm923, %v4890, 0
        %v4981 = vsel %vm923, %v4891, 0
        %v4984 = vsel %vm923, %v4892, 0
        %v4987 = vsel %vm923, %v4893, 0
        %v4990 = vsel %vm923, %v4894, 0
        %v4993 = vsel %vm923, %v4895, 0
        %v4996 = vsel %vm923, %v4896, 0
        %v4999 = vsel %vm923, %v4897, 0
        %v5002 = vsel %vm923, %v4898, 0
        %v5005 = vsel %vm923, %v4899, 0
        %v5008 = vsel %vm923, %v4900, 0
        %v5011 = vsel %vm923, %v4901, 0
        %v5014 = vsel %vm923, %v4902, 0
        %v5017 = vsel %vm923, %v4903, 0
        %v5020 = vsel %vm923, %v4904, 0
        %v5023 = vsel %vm923, %v4905, 0
        %v5026 = vsel %vm923, %v4906, 0
        %v5029 = vsel %vm923, %v4907, 0
        %v5032 = vsel %vm923, %v4908, 0
        %v5035 = vsel %vm923, %v4909, 0
        %v5038 = vsel %vm923, %v4910, 0
        %v5041 = vsel %vm923, %v4911, 0
        %v5044 = vsel %vm923, %v4912, 0
        %v5047 = vsel %vm923, %v4913, 0
        %5049 = vmatprep.subr.bf16.mxu0 0
        %5050 = vmatpush1.bf16.msra.mxu0 %v4945
        %5051 = vmatprep.subr.bf16.mxu0 0
        %5052 = vmatpush1.bf16.msra.mxu0 %v4946
        %5053 = vmatprep.subr.bf16.mxu0 0
        %5054 = vmatpush1.bf16.msra.mxu0 %v4947
        %5055 = vmatprep.subr.bf16.mxu0 0
        %5056 = vmatpush1.bf16.msra.mxu0 %v4948
        %5057 = vmatprep.subr.bf16.mxu0 0
        %5058 = vmatpush1.bf16.msra.mxu0 0
        %5059 = vmatprep.subr.bf16.mxu0 0
        %5060 = vmatpush1.bf16.msra.mxu0 0
        %5061 = vmatprep.subr.bf16.mxu0 0
        %5062 = vmatpush1.bf16.msra.mxu0 0
        %5063 = vmatprep.subr.bf16.mxu0 0
        %5064 = vmatpush1.bf16.msra.mxu0 0
        %5065 = vmatprep.subr.bf16.mxu0 0
        %5066 = vmatpush1.bf16.msra.mxu0 0
        %5067 = vmatprep.subr.bf16.mxu0 0
        %5068 = vmatpush1.bf16.msra.mxu0 0
        %5069 = vmatprep.subr.bf16.mxu0 0
        %5070 = vmatpush1.bf16.msra.mxu0 0
        %5071 = vmatprep.subr.bf16.mxu0 0
        %5072 = vmatpush1.bf16.msra.mxu0 0
        %5073 = vmatprep.subr.bf16.mxu0 0
        %5074 = vmatpush1.bf16.msra.mxu0 0
        %5075 = vmatprep.subr.bf16.mxu0 0
        %5076 = vmatpush1.bf16.msra.mxu0 0
        %5077 = vmatprep.subr.bf16.mxu0 0
        %5078 = vmatpush1.bf16.msra.mxu0 0
        %5079 = vmatprep.subr.bf16.mxu0 0
        %5080 = vmatpush1.bf16.msra.mxu0 0
        %5081 = vmatprep.mubr.bf16.mxu0 0
        %5082 = vmatmul.mubr.bf16.gmra.mrb[0].mxu0 %v4954
        %v5083 = vpop.f32.mrb[0].mxu0
        %v5084 = vadd.f32 %v4927, %v5083
        %v5085 = vpop.f32.mrb[0].mxu0
        %v5086 = vpop.f32.mrb[0].mxu0
        %v5087 = vadd.f32 %v4927, %v5086
        %v5088 = vpop.f32.mrb[0].mxu0
        %5089 = vmatprep.mubr.bf16.mxu0 0
        %5090 = vmatmul.mubr.bf16.gmra.mrb[0].mxu0 %v4957
        %v5091 = vpop.f32.mrb[0].mxu0
        %v5092 = vadd.f32 %v4927, %v5091
        %v5093 = vpop.f32.mrb[0].mxu0
        %v5094 = vpop.f32.mrb[0].mxu0
        %v5095 = vadd.f32 %v4927, %v5094
        %v5096 = vpop.f32.mrb[0].mxu0
        %5097 = vmatprep.mubr.bf16.mxu0 0
        %5098 = vmatmul.mubr.bf16.gmra.mrb[0].mxu0 %v4960
        %v5099 = vpop.f32.mrb[0].mxu0
        %v5100 = vadd.f32 %v4927, %v5099
        %v5101 = vpop.f32.mrb[0].mxu0
        %v5102 = vpop.f32.mrb[0].mxu0
        %v5103 = vadd.f32 %v4927, %v5102
        %v5104 = vpop.f32.mrb[0].mxu0
        %5105 = vmatprep.mubr.bf16.mxu0 0
        %5106 = vmatmul.mubr.bf16.gmra.mrb[0].mxu0 %v4963
        %v5107 = vpop.f32.mrb[0].mxu0
        %v5108 = vadd.f32 %v4927, %v5107
        %v5109 = vpop.f32.mrb[0].mxu0
        %v5110 = vpop.f32.mrb[0].mxu0
        %v5111 = vadd.f32 %v4927, %v5110
        %v5112 = vpop.f32.mrb[0].mxu0
        %5113 = vmatprep.mubr.bf16.mxu0 0
        %5114 = vmatmul.mubr.bf16.gmra.mrb[0].mxu0 %v4966
        %v5115 = vpop.f32.mrb[0].mxu0
        %v5116 = vadd.f32 %v4927, %v5115
        %v5117 = vpop.f32.mrb[0].mxu0
        %v5118 = vpop.f32.mrb[0].mxu0
        %v5119 = vadd.f32 %v4927, %v5118
        %v5120 = vpop.f32.mrb[0].mxu0
        %5121 = vmatprep.mubr.bf16.mxu0 0
        %5122 = vmatmul.mubr.bf16.gmra.mrb[0].mxu0 %v4969
        %v5123 = vpop.f32.mrb[0].mxu0
        %v5124 = vadd.f32 %v4927, %v5123
        %v5125 = vpop.f32.mrb[0].mxu0
        %v5126 = vpop.f32.mrb[0].mxu0
        %v5127 = vadd.f32 %v4927, %v5126
        %v5128 = vpop.f32.mrb[0].mxu0
        %5129 = vmatprep.mubr.bf16.mxu0 0
        %5130 = vmatmul.mubr.bf16.gmra.mrb[0].mxu0 %v4972
        %v5131 = vpop.f32.mrb[0].mxu0
        %v5132 = vadd.f32 %v4927, %v5131
        %v5133 = vpop.f32.mrb[0].mxu0
        %v5134 = vpop.f32.mrb[0].mxu0
        %v5135 = vadd.f32 %v4927, %v5134
        %v5136 = vpop.f32.mrb[0].mxu0
        %5137 = vmatprep.mubr.bf16.mxu0 0
        %5138 = vmatmul.mubr.bf16.gmra.mrb[0].mxu0 %v4975
        %v5139 = vpop.f32.mrb[0].mxu0
        %v5140 = vadd.f32 %v4927, %v5139
        %v5141 = vpop.f32.mrb[0].mxu0
        %v5142 = vpop.f32.mrb[0].mxu0
        %v5143 = vadd.f32 %v4927, %v5142
        %v5144 = vpop.f32.mrb[0].mxu0
        %5145 = vmatprep.mubr.bf16.mxu0 0
        %5146 = vmatmul.mubr.bf16.gmra.mrb[0].mxu0 %v4978
        %v5147 = vpop.f32.mrb[0].mxu0
        %v5148 = vadd.f32 %v4927, %v5147
        %v5149 = vpop.f32.mrb[0].mxu0
        %v5150 = vpop.f32.mrb[0].mxu0
        %v5151 = vadd.f32 %v4927, %v5150
        %v5152 = vpop.f32.mrb[0].mxu0
        %5153 = vmatprep.mubr.bf16.mxu0 0
        %5154 = vmatmul.mubr.bf16.gmra.mrb[0].mxu0 %v4981
        %v5155 = vpop.f32.mrb[0].mxu0
        %v5156 = vadd.f32 %v4927, %v5155
        %v5157 = vpop.f32.mrb[0].mxu0
        %v5158 = vpop.f32.mrb[0].mxu0
        %v5159 = vadd.f32 %v4927, %v5158
        %v5160 = vpop.f32.mrb[0].mxu0
        %5161 = vmatprep.mubr.bf16.mxu0 0
        %5162 = vmatmul.mubr.bf16.gmra.mrb[0].mxu0 %v4984
        %v5163 = vpop.f32.mrb[0].mxu0
        %v5164 = vadd.f32 %v4927, %v5163
        %v5165 = vpop.f32.mrb[0].mxu0
        %v5166 = vpop.f32.mrb[0].mxu0
        %v5167 = vadd.f32 %v4927, %v5166
        %v5168 = vpop.f32.mrb[0].mxu0
        %5169 = vmatprep.mubr.bf16.mxu0 0
        %5170 = vmatmul.mubr.bf16.gmra.mrb[0].mxu0 %v4987
        %v5171 = vpop.f32.mrb[0].mxu0
        %v5172 = vadd.f32 %v4927, %v5171
        %v5173 = vpop.f32.mrb[0].mxu0
        %v5174 = vpop.f32.mrb[0].mxu0
        %v5175 = vadd.f32 %v4927, %v5174
        %v5176 = vpop.f32.mrb[0].mxu0
        %5177 = vmatprep.mubr.bf16.mxu0 0
        %5178 = vmatmul.mubr.bf16.gmra.mrb[0].mxu0 %v4990
        %v5179 = vpop.f32.mrb[0].mxu0
        %v5180 = vadd.f32 %v4927, %v5179
        %v5181 = vpop.f32.mrb[0].mxu0
        %v5182 = vpop.f32.mrb[0].mxu0
        %v5183 = vadd.f32 %v4927, %v5182
        %v5184 = vpop.f32.mrb[0].mxu0
        %5185 = vmatprep.mubr.bf16.mxu0 0
        %5186 = vmatmul.mubr.bf16.gmra.mrb[0].mxu0 %v4993
        %v5187 = vpop.f32.mrb[0].mxu0
        %v5188 = vadd.f32 %v4927, %v5187
        %v5189 = vpop.f32.mrb[0].mxu0
        %v5190 = vpop.f32.mrb[0].mxu0
        %v5191 = vadd.f32 %v4927, %v5190
        %v5192 = vpop.f32.mrb[0].mxu0
        %5193 = vmatprep.mubr.bf16.mxu0 0
        %5194 = vmatmul.mubr.bf16.gmra.mrb[0].mxu0 %v4996
        %v5195 = vpop.f32.mrb[0].mxu0
        %v5196 = vadd.f32 %v4927, %v5195
        %v5197 = vpop.f32.mrb[0].mxu0
        %v5198 = vpop.f32.mrb[0].mxu0
        %v5199 = vadd.f32 %v4927, %v5198
        %v5200 = vpop.f32.mrb[0].mxu0
        %5201 = vmatprep.mubr.bf16.mxu0 0
        %5202 = vmatmul.mubr.bf16.gmra.mrb[0].mxu0 %v4999
        %v5203 = vpop.f32.mrb[0].mxu0
        %v5204 = vadd.f32 %v4927, %v5203
        %v5205 = vpop.f32.mrb[0].mxu0
        %v5206 = vpop.f32.mrb[0].mxu0
        %v5207 = vadd.f32 %v4927, %v5206
        %v5208 = vpop.f32.mrb[0].mxu0
        %5209 = vmatprep.mubr.bf16.mxu0 0
        %5210 = vmatmul.mubr.bf16.gmra.mrb[0].mxu0 %v5002
        %v5211 = vpop.f32.mrb[0].mxu0
        %v5212 = vadd.f32 %v4927, %v5211
        %v5213 = vpop.f32.mrb[0].mxu0
        %v5214 = vpop.f32.mrb[0].mxu0
        %v5215 = vadd.f32 %v4927, %v5214
        %v5216 = vpop.f32.mrb[0].mxu0
        %5217 = vmatprep.mubr.bf16.mxu0 0
        %5218 = vmatmul.mubr.bf16.gmra.mrb[0].mxu0 %v5005
        %v5219 = vpop.f32.mrb[0].mxu0
        %v5220 = vadd.f32 %v4927, %v5219
        %v5221 = vpop.f32.mrb[0].mxu0
        %v5222 = vpop.f32.mrb[0].mxu0
        %v5223 = vadd.f32 %v4927, %v5222
        %v5224 = vpop.f32.mrb[0].mxu0
        %5225 = vmatprep.mubr.bf16.mxu0 0
        %5226 = vmatmul.mubr.bf16.gmra.mrb[0].mxu0 %v5008
        %v5227 = vpop.f32.mrb[0].mxu0
        %v5228 = vadd.f32 %v4927, %v5227
        %v5229 = vpop.f32.mrb[0].mxu0
        %v5230 = vpop.f32.mrb[0].mxu0
        %v5231 = vadd.f32 %v4927, %v5230
        %v5232 = vpop.f32.mrb[0].mxu0
        %5233 = vmatprep.mubr.bf16.mxu0 0
        %5234 = vmatmul.mubr.bf16.gmra.mrb[0].mxu0 %v5011
        %v5235 = vpop.f32.mrb[0].mxu0
        %v5236 = vadd.f32 %v4927, %v5235
        %v5237 = vpop.f32.mrb[0].mxu0
        %v5238 = vpop.f32.mrb[0].mxu0
        %v5239 = vadd.f32 %v4927, %v5238
        %v5240 = vpop.f32.mrb[0].mxu0
        %5241 = vmatprep.mubr.bf16.mxu0 0
        %5242 = vmatmul.mubr.bf16.gmra.mrb[0].mxu0 %v5014
        %v5243 = vpop.f32.mrb[0].mxu0
        %v5244 = vadd.f32 %v4927, %v5243
        %v5245 = vpop.f32.mrb[0].mxu0
        %v5246 = vpop.f32.mrb[0].mxu0
        %v5247 = vadd.f32 %v4927, %v5246
        %v5248 = vpop.f32.mrb[0].mxu0
        %5249 = vmatprep.mubr.bf16.mxu0 0
        %5250 = vmatmul.mubr.bf16.gmra.mrb[0].mxu0 %v5017
        %v5251 = vpop.f32.mrb[0].mxu0
        %v5252 = vadd.f32 %v4927, %v5251
        %v5253 = vpop.f32.mrb[0].mxu0
        %v5254 = vpop.f32.mrb[0].mxu0
        %v5255 = vadd.f32 %v4927, %v5254
        %v5256 = vpop.f32.mrb[0].mxu0
        %5257 = vmatprep.mubr.bf16.mxu0 0
        %5258 = vmatmul.mubr.bf16.gmra.mrb[0].mxu0 %v5020
        %v5259 = vpop.f32.mrb[0].mxu0
        %v5260 = vadd.f32 %v4927, %v5259
        %v5261 = vpop.f32.mrb[0].mxu0
        %v5262 = vpop.f32.mrb[0].mxu0
        %v5263 = vadd.f32 %v4927, %v5262
        %v5264 = vpop.f32.mrb[0].mxu0
        %5265 = vmatprep.mubr.bf16.mxu0 0
        %5266 = vmatmul.mubr.bf16.gmra.mrb[0].mxu0 %v5023
        %v5267 = vpop.f32.mrb[0].mxu0
        %v5268 = vadd.f32 %v4927, %v5267
        %v5269 = vpop.f32.mrb[0].mxu0
        %v5270 = vpop.f32.mrb[0].mxu0
        %v5271 = vadd.f32 %v4927, %v5270
        %v5272 = vpop.f32.mrb[0].mxu0
        %5273 = vmatprep.mubr.bf16.mxu0 0
        %5274 = vmatmul.mubr.bf16.gmra.mrb[0].mxu0 %v5026
        %v5275 = vpop.f32.mrb[0].mxu0
        %v5276 = vadd.f32 %v4927, %v5275
        %v5277 = vpop.f32.mrb[0].mxu0
        %v5278 = vpop.f32.mrb[0].mxu0
        %v5279 = vadd.f32 %v4927, %v5278
        %v5280 = vpop.f32.mrb[0].mxu0
        %5281 = vmatprep.mubr.bf16.mxu0 0
        %5282 = vmatmul.mubr.bf16.gmra.mrb[0].mxu0 %v5029
        %v5283 = vpop.f32.mrb[0].mxu0
        %v5284 = vadd.f32 %v4927, %v5283
        %v5285 = vpop.f32.mrb[0].mxu0
        %v5286 = vpop.f32.mrb[0].mxu0
        %v5287 = vadd.f32 %v4927, %v5286
        %v5288 = vpop.f32.mrb[0].mxu0
        %5289 = vmatprep.mubr.bf16.mxu0 0
        %5290 = vmatmul.mubr.bf16.gmra.mrb[0].mxu0 %v5032
        %v5291 = vpop.f32.mrb[0].mxu0
        %v5292 = vadd.f32 %v4927, %v5291
        %v5293 = vpop.f32.mrb[0].mxu0
        %v5294 = vpop.f32.mrb[0].mxu0
        %v5295 = vadd.f32 %v4927, %v5294
        %v5296 = vpop.f32.mrb[0].mxu0
        %5297 = vmatprep.mubr.bf16.mxu0 0
        %5298 = vmatmul.mubr.bf16.gmra.mrb[0].mxu0 %v5035
        %v5299 = vpop.f32.mrb[0].mxu0
        %v5300 = vadd.f32 %v4927, %v5299
        %v5301 = vpop.f32.mrb[0].mxu0
        %v5302 = vpop.f32.mrb[0].mxu0
        %v5303 = vadd.f32 %v4927, %v5302
        %v5304 = vpop.f32.mrb[0].mxu0
        %5305 = vmatprep.mubr.bf16.mxu0 0
        %5306 = vmatmul.mubr.bf16.gmra.mrb[0].mxu0 %v5038
        %v5307 = vpop.f32.mrb[0].mxu0
        %v5308 = vadd.f32 %v4927, %v5307
        %v5309 = vpop.f32.mrb[0].mxu0
        %v5310 = vpop.f32.mrb[0].mxu0
        %v5311 = vadd.f32 %v4927, %v5310
        %v5312 = vpop.f32.mrb[0].mxu0
        %5313 = vmatprep.mubr.bf16.mxu0 0
        %5314 = vmatmul.mubr.bf16.gmra.mrb[0].mxu0 %v5041
        %v5315 = vpop.f32.mrb[0].mxu0
        %v5316 = vadd.f32 %v4927, %v5315
        %v5317 = vpop.f32.mrb[0].mxu0
        %v5318 = vpop.f32.mrb[0].mxu0
        %v5319 = vadd.f32 %v4927, %v5318
        %v5320 = vpop.f32.mrb[0].mxu0
        %5321 = vmatprep.mubr.bf16.mxu0 0
        %5322 = vmatmul.mubr.bf16.gmra.mrb[0].mxu0 %v5044
        %v5323 = vpop.f32.mrb[0].mxu0
        %v5324 = vadd.f32 %v4927, %v5323
        %v5325 = vpop.f32.mrb[0].mxu0
        %v5326 = vpop.f32.mrb[0].mxu0
        %v5327 = vadd.f32 %v4927, %v5326
        %v5328 = vpop.f32.mrb[0].mxu0
        %5329 = vmatprep.mubr.bf16.mxu0 0
        %5330 = vmatmul.mubr.bf16.gmra.mrb[0].mxu0 %v5047
        %v5331 = vpop.f32.mrb[0].mxu0
        %v5332 = vadd.f32 %v4927, %v5331
        %v5333 = vpop.f32.mrb[0].mxu0
        %v5334 = vpop.f32.mrb[0].mxu0
        %v5335 = vadd.f32 %v4927, %v5334
        %v5336 = vpop.f32.mrb[0].mxu0
        %5337 = vdwg.mxu0
        %v5338 = vxor.u32 %v5084, 2147483648
        %v5339 = vxor.u32 %v5087, 2147483648
        %v5340 = vxor.u32 %v5092, 2147483648
        %v5341 = vxor.u32 %v5095, 2147483648
        %v5342 = vxor.u32 %v5100, 2147483648
        %v5343 = vxor.u32 %v5103, 2147483648
        %v5344 = vxor.u32 %v5108, 2147483648
        %v5345 = vxor.u32 %v5111, 2147483648
        %v5346 = vxor.u32 %v5116, 2147483648
        %v5347 = vxor.u32 %v5119, 2147483648
        %v5348 = vxor.u32 %v5124, 2147483648
        %v5349 = vxor.u32 %v5127, 2147483648
        %v5350 = vxor.u32 %v5132, 2147483648
        %v5351 = vxor.u32 %v5135, 2147483648
        %v5352 = vxor.u32 %v5140, 2147483648
        %v5353 = vxor.u32 %v5143, 2147483648
        %v5354 = vxor.u32 %v5148, 2147483648
        %v5355 = vxor.u32 %v5151, 2147483648
        %v5356 = vxor.u32 %v5156, 2147483648
        %v5357 = vxor.u32 %v5159, 2147483648
        %v5358 = vxor.u32 %v5164, 2147483648
        %v5359 = vxor.u32 %v5167, 2147483648
        %v5360 = vxor.u32 %v5172, 2147483648
        %v5361 = vxor.u32 %v5175, 2147483648
        %v5362 = vxor.u32 %v5180, 2147483648
        %v5363 = vxor.u32 %v5183, 2147483648
        %v5364 = vxor.u32 %v5188, 2147483648
        %v5365 = vxor.u32 %v5191, 2147483648
        %v5366 = vxor.u32 %v5196, 2147483648
        %v5367 = vxor.u32 %v5199, 2147483648
        %v5368 = vxor.u32 %v5204, 2147483648
        %v5369 = vxor.u32 %v5207, 2147483648
        %v5370 = vxor.u32 %v5212, 2147483648
        %v5371 = vxor.u32 %v5215, 2147483648
        %v5372 = vxor.u32 %v5220, 2147483648
        %v5373 = vxor.u32 %v5223, 2147483648
        %v5374 = vxor.u32 %v5228, 2147483648
        %v5375 = vxor.u32 %v5231, 2147483648
        %v5376 = vxor.u32 %v5236, 2147483648
        %v5377 = vxor.u32 %v5239, 2147483648
        %v5378 = vxor.u32 %v5244, 2147483648
        %v5379 = vxor.u32 %v5247, 2147483648
        %v5380 = vxor.u32 %v5252, 2147483648
        %v5381 = vxor.u32 %v5255, 2147483648
        %v5382 = vxor.u32 %v5260, 2147483648
        %v5383 = vxor.u32 %v5263, 2147483648
        %v5384 = vxor.u32 %v5268, 2147483648
        %v5385 = vxor.u32 %v5271, 2147483648
        %v5386 = vxor.u32 %v5276, 2147483648
        %v5387 = vxor.u32 %v5279, 2147483648
        %v5388 = vxor.u32 %v5284, 2147483648
        %v5389 = vxor.u32 %v5287, 2147483648
        %v5390 = vxor.u32 %v5292, 2147483648
        %v5391 = vxor.u32 %v5295, 2147483648
        %v5392 = vxor.u32 %v5300, 2147483648
        %v5393 = vxor.u32 %v5303, 2147483648
        %v5394 = vxor.u32 %v5308, 2147483648
        %v5395 = vxor.u32 %v5311, 2147483648
        %v5396 = vxor.u32 %v5316, 2147483648
        %v5397 = vxor.u32 %v5319, 2147483648
        %v5398 = vxor.u32 %v5324, 2147483648
        %v5399 = vxor.u32 %v5327, 2147483648
        %v5400 = vxor.u32 %v5332, 2147483648
        %v5401 = vxor.u32 %v5335, 2147483648
        %v5402 = vmul.f32 %v5338, 1.442695
        %v5403 = vpow.pop %v5402
        %v5404 = vmul.f32 %v5339, 1.442695
        %v5405 = vpow.pop %v5404
        %v5406 = vmul.f32 %v5340, 1.442695
        %v5407 = vpow.pop %v5406
        %v5408 = vmul.f32 %v5341, 1.442695
        %v5409 = vpow.pop %v5408
        %v5410 = vmul.f32 %v5342, 1.442695
        %v5411 = vpow.pop %v5410
        %v5412 = vmul.f32 %v5343, 1.442695
        %v5413 = vpow.pop %v5412
        %v5414 = vmul.f32 %v5344, 1.442695
        %v5415 = vpow.pop %v5414
        %v5416 = vmul.f32 %v5345, 1.442695
        %v5417 = vpow.pop %v5416
        %v5418 = vmul.f32 %v5346, 1.442695
        %v5419 = vpow.pop %v5418
        %v5420 = vmul.f32 %v5347, 1.442695
        %v5421 = vpow.pop %v5420
        %v5422 = vmul.f32 %v5348, 1.442695
        %v5423 = vpow.pop %v5422
        %v5424 = vmul.f32 %v5349, 1.442695
        %v5425 = vpow.pop %v5424
        %v5426 = vmul.f32 %v5350, 1.442695
        %v5427 = vpow.pop %v5426
        %v5428 = vmul.f32 %v5351, 1.442695
        %v5429 = vpow.pop %v5428
        %v5430 = vmul.f32 %v5352, 1.442695
        %v5431 = vpow.pop %v5430
        %v5432 = vmul.f32 %v5353, 1.442695
        %v5433 = vpow.pop %v5432
        %v5434 = vmul.f32 %v5354, 1.442695
        %v5435 = vpow.pop %v5434
        %v5436 = vmul.f32 %v5355, 1.442695
        %v5437 = vpow.pop %v5436
        %v5438 = vmul.f32 %v5356, 1.442695
        %v5439 = vpow.pop %v5438
        %v5440 = vmul.f32 %v5357, 1.442695
        %v5441 = vpow.pop %v5440
        %v5442 = vmul.f32 %v5358, 1.442695
        %v5443 = vpow.pop %v5442
        %v5444 = vmul.f32 %v5359, 1.442695
        %v5445 = vpow.pop %v5444
        %v5446 = vmul.f32 %v5360, 1.442695
        %v5447 = vpow.pop %v5446
        %v5448 = vmul.f32 %v5361, 1.442695
        %v5449 = vpow.pop %v5448
        %v5450 = vmul.f32 %v5362, 1.442695
        %v5451 = vpow.pop %v5450
        %v5452 = vmul.f32 %v5363, 1.442695
        %v5453 = vpow.pop %v5452
        %v5454 = vmul.f32 %v5364, 1.442695
        %v5455 = vpow.pop %v5454
        %v5456 = vmul.f32 %v5365, 1.442695
        %v5457 = vpow.pop %v5456
        %v5458 = vmul.f32 %v5366, 1.442695
        %v5459 = vpow.pop %v5458
        %v5460 = vmul.f32 %v5367, 1.442695
        %v5461 = vpow.pop %v5460
        %v5462 = vmul.f32 %v5368, 1.442695
        %v5463 = vpow.pop %v5462
        %v5464 = vmul.f32 %v5369, 1.442695
        %v5465 = vpow.pop %v5464
        %v5466 = vmul.f32 %v5370, 1.442695
        %v5467 = vpow.pop %v5466
        %v5468 = vmul.f32 %v5371, 1.442695
        %v5469 = vpow.pop %v5468
        %v5470 = vmul.f32 %v5372, 1.442695
        %v5471 = vpow.pop %v5470
        %v5472 = vmul.f32 %v5373, 1.442695
        %v5473 = vpow.pop %v5472
        %v5474 = vmul.f32 %v5374, 1.442695
        %v5475 = vpow.pop %v5474
        %v5476 = vmul.f32 %v5375, 1.442695
        %v5477 = vpow.pop %v5476
        %v5478 = vmul.f32 %v5376, 1.442695
        %v5479 = vpow.pop %v5478
        %v5480 = vmul.f32 %v5377, 1.442695
        %v5481 = vpow.pop %v5480
        %v5482 = vmul.f32 %v5378, 1.442695
        %v5483 = vpow.pop %v5482
        %v5484 = vmul.f32 %v5379, 1.442695
        %v5485 = vpow.pop %v5484
        %v5486 = vmul.f32 %v5380, 1.442695
        %v5487 = vpow.pop %v5486
        %v5488 = vmul.f32 %v5381, 1.442695
        %v5489 = vpow.pop %v5488
        %v5490 = vmul.f32 %v5382, 1.442695
        %v5491 = vpow.pop %v5490
        %v5492 = vmul.f32 %v5383, 1.442695
        %v5493 = vpow.pop %v5492
        %v5494 = vmul.f32 %v5384, 1.442695
        %v5495 = vpow.pop %v5494
        %v5496 = vmul.f32 %v5385, 1.442695
        %v5497 = vpow.pop %v5496
        %v5498 = vmul.f32 %v5386, 1.442695
        %v5499 = vpow.pop %v5498
        %v5500 = vmul.f32 %v5387, 1.442695
        %v5501 = vpow.pop %v5500
        %v5502 = vmul.f32 %v5388, 1.442695
        %v5503 = vpow.pop %v5502
        %v5504 = vmul.f32 %v5389, 1.442695
        %v5505 = vpow.pop %v5504
        %v5506 = vmul.f32 %v5390, 1.442695
        %v5507 = vpow.pop %v5506
        %v5508 = vmul.f32 %v5391, 1.442695
        %v5509 = vpow.pop %v5508
        %v5510 = vmul.f32 %v5392, 1.442695
        %v5511 = vpow.pop %v5510
        %v5512 = vmul.f32 %v5393, 1.442695
        %v5513 = vpow.pop %v5512
        %v5514 = vmul.f32 %v5394, 1.442695
        %v5515 = vpow.pop %v5514
        %v5516 = vmul.f32 %v5395, 1.442695
        %v5517 = vpow.pop %v5516
        %v5518 = vmul.f32 %v5396, 1.442695
        %v5519 = vpow.pop %v5518
        %v5520 = vmul.f32 %v5397, 1.442695
        %v5521 = vpow.pop %v5520
        %v5522 = vmul.f32 %v5398, 1.442695
        %v5523 = vpow.pop %v5522
        %v5524 = vmul.f32 %v5399, 1.442695
        %v5525 = vpow.pop %v5524
        %v5526 = vmul.f32 %v5400, 1.442695
        %v5527 = vpow.pop %v5526
        %v5528 = vmul.f32 %v5401, 1.442695
        %v5529 = vpow.pop %v5528
        %v5530 = vadd.f32 %v5403, 1.0
        %v5531 = vadd.f32 %v5405, 1.0
        %v5532 = vadd.f32 %v5407, 1.0
        %v5533 = vadd.f32 %v5409, 1.0
        %v5534 = vadd.f32 %v5411, 1.0
        %v5535 = vadd.f32 %v5413, 1.0
        %v5536 = vadd.f32 %v5415, 1.0
        %v5537 = vadd.f32 %v5417, 1.0
        %v5538 = vadd.f32 %v5419, 1.0
        %v5539 = vadd.f32 %v5421, 1.0
        %v5540 = vadd.f32 %v5423, 1.0
        %v5541 = vadd.f32 %v5425, 1.0
        %v5542 = vadd.f32 %v5427, 1.0
        %v5543 = vadd.f32 %v5429, 1.0
        %v5544 = vadd.f32 %v5431, 1.0
        %v5545 = vadd.f32 %v5433, 1.0
        %v5546 = vadd.f32 %v5435, 1.0
        %v5547 = vadd.f32 %v5437, 1.0
        %v5548 = vadd.f32 %v5439, 1.0
        %v5549 = vadd.f32 %v5441, 1.0
        %v5550 = vadd.f32 %v5443, 1.0
        %v5551 = vadd.f32 %v5445, 1.0
        %v5552 = vadd.f32 %v5447, 1.0
        %v5553 = vadd.f32 %v5449, 1.0
        %v5554 = vadd.f32 %v5451, 1.0
        %v5555 = vadd.f32 %v5453, 1.0
        %v5556 = vadd.f32 %v5455, 1.0
        %v5557 = vadd.f32 %v5457, 1.0
        %v5558 = vadd.f32 %v5459, 1.0
        %v5559 = vadd.f32 %v5461, 1.0
        %v5560 = vadd.f32 %v5463, 1.0
        %v5561 = vadd.f32 %v5465, 1.0
        %v5562 = vadd.f32 %v5467, 1.0
        %v5563 = vadd.f32 %v5469, 1.0
        %v5564 = vadd.f32 %v5471, 1.0
        %v5565 = vadd.f32 %v5473, 1.0
        %v5566 = vadd.f32 %v5475, 1.0
        %v5567 = vadd.f32 %v5477, 1.0
        %v5568 = vadd.f32 %v5479, 1.0
        %v5569 = vadd.f32 %v5481, 1.0
        %v5570 = vadd.f32 %v5483, 1.0
        %v5571 = vadd.f32 %v5485, 1.0
        %v5572 = vadd.f32 %v5487, 1.0
        %v5573 = vadd.f32 %v5489, 1.0
        %v5574 = vadd.f32 %v5491, 1.0
        %v5575 = vadd.f32 %v5493, 1.0
        %v5576 = vadd.f32 %v5495, 1.0
        %v5577 = vadd.f32 %v5497, 1.0
        %v5578 = vadd.f32 %v5499, 1.0
        %v5579 = vadd.f32 %v5501, 1.0
        %v5580 = vadd.f32 %v5503, 1.0
        %v5581 = vadd.f32 %v5505, 1.0
        %v5582 = vadd.f32 %v5507, 1.0
        %v5583 = vadd.f32 %v5509, 1.0
        %v5584 = vadd.f32 %v5511, 1.0
        %v5585 = vadd.f32 %v5513, 1.0
        %v5586 = vadd.f32 %v5515, 1.0
        %v5587 = vadd.f32 %v5517, 1.0
        %v5588 = vadd.f32 %v5519, 1.0
        %v5589 = vadd.f32 %v5521, 1.0
        %v5590 = vadd.f32 %v5523, 1.0
        %v5591 = vadd.f32 %v5525, 1.0
        %v5592 = vadd.f32 %v5527, 1.0
        %v5593 = vadd.f32 %v5529, 1.0
        %v5594 = vrcp.pop %v5530
        %v5595 = vmul.f32 1.0, %v5594
        %v5596 = vrcp.pop %v5531
        %v5597 = vmul.f32 1.0, %v5596
        %v5598 = vrcp.pop %v5532
        %v5599 = vmul.f32 1.0, %v5598
        %v5600 = vrcp.pop %v5533
        %v5601 = vmul.f32 1.0, %v5600
        %v5602 = vrcp.pop %v5534
        %v5603 = vmul.f32 1.0, %v5602
        %v5604 = vrcp.pop %v5535
        %v5605 = vmul.f32 1.0, %v5604
        %v5606 = vrcp.pop %v5536
        %v5607 = vmul.f32 1.0, %v5606
        %v5608 = vrcp.pop %v5537
        %v5609 = vmul.f32 1.0, %v5608
        %v5610 = vrcp.pop %v5538
        %v5611 = vmul.f32 1.0, %v5610
        %v5612 = vrcp.pop %v5539
        %v5613 = vmul.f32 1.0, %v5612
        %v5614 = vrcp.pop %v5540
        %v5615 = vmul.f32 1.0, %v5614
        %v5616 = vrcp.pop %v5541
        %v5617 = vmul.f32 1.0, %v5616
        %v5618 = vrcp.pop %v5542
        %v5619 = vmul.f32 1.0, %v5618
        %v5620 = vrcp.pop %v5543
        %v5621 = vmul.f32 1.0, %v5620
        %v5622 = vrcp.pop %v5544
        %v5623 = vmul.f32 1.0, %v5622
        %v5624 = vrcp.pop %v5545
        %v5625 = vmul.f32 1.0, %v5624
        %v5626 = vrcp.pop %v5546
        %v5627 = vmul.f32 1.0, %v5626
        %v5628 = vrcp.pop %v5547
        %v5629 = vmul.f32 1.0, %v5628
        %v5630 = vrcp.pop %v5548
        %v5631 = vmul.f32 1.0, %v5630
        %v5632 = vrcp.pop %v5549
        %v5633 = vmul.f32 1.0, %v5632
        %v5634 = vrcp.pop %v5550
        %v5635 = vmul.f32 1.0, %v5634
        %v5636 = vrcp.pop %v5551
        %v5637 = vmul.f32 1.0, %v5636
        %v5638 = vrcp.pop %v5552
        %v5639 = vmul.f32 1.0, %v5638
        %v5640 = vrcp.pop %v5553
        %v5641 = vmul.f32 1.0, %v5640
        %v5642 = vrcp.pop %v5554
        %v5643 = vmul.f32 1.0, %v5642
        %v5644 = vrcp.pop %v5555
        %v5645 = vmul.f32 1.0, %v5644
        %v5646 = vrcp.pop %v5556
        %v5647 = vmul.f32 1.0, %v5646
        %v5648 = vrcp.pop %v5557
        %v5649 = vmul.f32 1.0, %v5648
        %v5650 = vrcp.pop %v5558
        %v5651 = vmul.f32 1.0, %v5650
        %v5652 = vrcp.pop %v5559
        %v5653 = vmul.f32 1.0, %v5652
        %v5654 = vrcp.pop %v5560
        %v5655 = vmul.f32 1.0, %v5654
        %v5656 = vrcp.pop %v5561
        %v5657 = vmul.f32 1.0, %v5656
        %v5658 = vrcp.pop %v5562
        %v5659 = vmul.f32 1.0, %v5658
        %v5660 = vrcp.pop %v5563
        %v5661 = vmul.f32 1.0, %v5660
        %v5662 = vrcp.pop %v5564
        %v5663 = vmul.f32 1.0, %v5662
        %v5664 = vrcp.pop %v5565
        %v5665 = vmul.f32 1.0, %v5664
        %v5666 = vrcp.pop %v5566
        %v5667 = vmul.f32 1.0, %v5666
        %v5668 = vrcp.pop %v5567
        %v5669 = vmul.f32 1.0, %v5668
        %v5670 = vrcp.pop %v5568
        %v5671 = vmul.f32 1.0, %v5670
        %v5672 = vrcp.pop %v5569
        %v5673 = vmul.f32 1.0, %v5672
        %v5674 = vrcp.pop %v5570
        %v5675 = vmul.f32 1.0, %v5674
        %v5676 = vrcp.pop %v5571
        %v5677 = vmul.f32 1.0, %v5676
        %v5678 = vrcp.pop %v5572
        %v5679 = vmul.f32 1.0, %v5678
        %v5680 = vrcp.pop %v5573
        %v5681 = vmul.f32 1.0, %v5680
        %v5682 = vrcp.pop %v5574
        %v5683 = vmul.f32 1.0, %v5682
        %v5684 = vrcp.pop %v5575
        %v5685 = vmul.f32 1.0, %v5684
        %v5686 = vrcp.pop %v5576
        %v5687 = vmul.f32 1.0, %v5686
        %v5688 = vrcp.pop %v5577
        %v5689 = vmul.f32 1.0, %v5688
        %v5690 = vrcp.pop %v5578
        %v5691 = vmul.f32 1.0, %v5690
        %v5692 = vrcp.pop %v5579
        %v5693 = vmul.f32 1.0, %v5692
        %v5694 = vrcp.pop %v5580
        %v5695 = vmul.f32 1.0, %v5694
        %v5696 = vrcp.pop %v5581
        %v5697 = vmul.f32 1.0, %v5696
        %v5698 = vrcp.pop %v5582
        %v5699 = vmul.f32 1.0, %v5698
        %v5700 = vrcp.pop %v5583
        %v5701 = vmul.f32 1.0, %v5700
        %v5702 = vrcp.pop %v5584
        %v5703 = vmul.f32 1.0, %v5702
        %v5704 = vrcp.pop %v5585
        %v5705 = vmul.f32 1.0, %v5704
        %v5706 = vrcp.pop %v5586
        %v5707 = vmul.f32 1.0, %v5706
        %v5708 = vrcp.pop %v5587
        %v5709 = vmul.f32 1.0, %v5708
        %v5710 = vrcp.pop %v5588
        %v5711 = vmul.f32 1.0, %v5710
        %v5712 = vrcp.pop %v5589
        %v5713 = vmul.f32 1.0, %v5712
        %v5714 = vrcp.pop %v5590
        %v5715 = vmul.f32 1.0, %v5714
        %v5716 = vrcp.pop %v5591
        %v5717 = vmul.f32 1.0, %v5716
        %v5718 = vrcp.pop %v5592
        %v5719 = vmul.f32 1.0, %v5718
        %v5720 = vrcp.pop %v5593
        %v5721 = vmul.f32 1.0, %v5720
        %vm5722 = vcmask 23552
        %5723 = vst.msk [vmem:[%s253] sm:$0xff] %vm5722, %v5595
        %5724 = vst.msk [vmem:[%s253 + $0x8] sm:$0xff] %vm5722, %v5597
        %5725 = vst.msk [vmem:[%s253 + $0x10] sm:$0xff] %vm5722, %v5599
        %5726 = vst.msk [vmem:[%s253 + $0x18] sm:$0xff] %vm5722, %v5601
        %5727 = vst.msk [vmem:[%s253 + $0x20] sm:$0xff] %vm5722, %v5603
        %5728 = vst.msk [vmem:[%s253 + $0x28] sm:$0xff] %vm5722, %v5605
        %5729 = vst.msk [vmem:[%s253 + $0x30] sm:$0xff] %vm5722, %v5607
        %5730 = vst.msk [vmem:[%s253 + $0x38] sm:$0xff] %vm5722, %v5609
        %5731 = vst.msk [vmem:[%s253 + $0x40] sm:$0xff] %vm5722, %v5611
        %5732 = vst.msk [vmem:[%s253 + $0x48] sm:$0xff] %vm5722, %v5613
        %5733 = vst.msk [vmem:[%s253 + $0x50] sm:$0xff] %vm5722, %v5615
        %5734 = vst.msk [vmem:[%s253 + $0x58] sm:$0xff] %vm5722, %v5617
        %5735 = vst.msk [vmem:[%s253 + $0x60] sm:$0xff] %vm5722, %v5619
        %5736 = vst.msk [vmem:[%s253 + $0x68] sm:$0xff] %vm5722, %v5621
        %5737 = vst.msk [vmem:[%s253 + $0x70] sm:$0xff] %vm5722, %v5623
        %5738 = vst.msk [vmem:[%s253 + $0x78] sm:$0xff] %vm5722, %v5625
        %5739 = vst.msk [vmem:[%s253 + $0x80] sm:$0xff] %vm5722, %v5627
        %5740 = vst.msk [vmem:[%s253 + $0x88] sm:$0xff] %vm5722, %v5629
        %5741 = vst.msk [vmem:[%s253 + $0x90] sm:$0xff] %vm5722, %v5631
        %5742 = vst.msk [vmem:[%s253 + $0x98] sm:$0xff] %vm5722, %v5633
        %5743 = vst.msk [vmem:[%s253 + $0xa0] sm:$0xff] %vm5722, %v5635
        %5744 = vst.msk [vmem:[%s253 + $0xa8] sm:$0xff] %vm5722, %v5637
        %5745 = vst.msk [vmem:[%s253 + $0xb0] sm:$0xff] %vm5722, %v5639
        %5746 = vst.msk [vmem:[%s253 + $0xb8] sm:$0xff] %vm5722, %v5641
        %5747 = vst.msk [vmem:[%s253 + $0xc0] sm:$0xff] %vm5722, %v5643
        %5748 = vst.msk [vmem:[%s253 + $0xc8] sm:$0xff] %vm5722, %v5645
        %5749 = vst.msk [vmem:[%s253 + $0xd0] sm:$0xff] %vm5722, %v5647
        %5750 = vst.msk [vmem:[%s253 + $0xd8] sm:$0xff] %vm5722, %v5649
        %5751 = vst.msk [vmem:[%s253 + $0xe0] sm:$0xff] %vm5722, %v5651
        %5752 = vst.msk [vmem:[%s253 + $0xe8] sm:$0xff] %vm5722, %v5653
        %5753 = vst.msk [vmem:[%s253 + $0xf0] sm:$0xff] %vm5722, %v5655
        %5754 = vst.msk [vmem:[%s253 + $0xf8] sm:$0xff] %vm5722, %v5657
        %5755 = vst.msk [vmem:[%s253 + $0x100] sm:$0xff] %vm5722, %v5659
        %5756 = vst.msk [vmem:[%s253 + $0x108] sm:$0xff] %vm5722, %v5661
        %5757 = vst.msk [vmem:[%s253 + $0x110] sm:$0xff] %vm5722, %v5663
        %5758 = vst.msk [vmem:[%s253 + $0x118] sm:$0xff] %vm5722, %v5665
        %5759 = vst.msk [vmem:[%s253 + $0x120] sm:$0xff] %vm5722, %v5667
        %5760 = vst.msk [vmem:[%s253 + $0x128] sm:$0xff] %vm5722, %v5669
        %5761 = vst.msk [vmem:[%s253 + $0x130] sm:$0xff] %vm5722, %v5671
        %5762 = vst.msk [vmem:[%s253 + $0x138] sm:$0xff] %vm5722, %v5673
        %5763 = vst.msk [vmem:[%s253 + $0x140] sm:$0xff] %vm5722, %v5675
        %5764 = vst.msk [vmem:[%s253 + $0x148] sm:$0xff] %vm5722, %v5677
        %5765 = vst.msk [vmem:[%s253 + $0x150] sm:$0xff] %vm5722, %v5679
        %5766 = vst.msk [vmem:[%s253 + $0x158] sm:$0xff] %vm5722, %v5681
        %5767 = vst.msk [vmem:[%s253 + $0x160] sm:$0xff] %vm5722, %v5683
        %5768 = vst.msk [vmem:[%s253 + $0x168] sm:$0xff] %vm5722, %v5685
        %5769 = vst.msk [vmem:[%s253 + $0x170] sm:$0xff] %vm5722, %v5687
        %5770 = vst.msk [vmem:[%s253 + $0x178] sm:$0xff] %vm5722, %v5689
        %5771 = vst.msk [vmem:[%s253 + $0x180] sm:$0xff] %vm5722, %v5691
        %5772 = vst.msk [vmem:[%s253 + $0x188] sm:$0xff] %vm5722, %v5693
        %5773 = vst.msk [vmem:[%s253 + $0x190] sm:$0xff] %vm5722, %v5695
        %5774 = vst.msk [vmem:[%s253 + $0x198] sm:$0xff] %vm5722, %v5697
        %5775 = vst.msk [vmem:[%s253 + $0x1a0] sm:$0xff] %vm5722, %v5699
        %5776 = vst.msk [vmem:[%s253 + $0x1a8] sm:$0xff] %vm5722, %v5701
        %5777 = vst.msk [vmem:[%s253 + $0x1b0] sm:$0xff] %vm5722, %v5703
        %5778 = vst.msk [vmem:[%s253 + $0x1b8] sm:$0xff] %vm5722, %v5705
        %5779 = vst.msk [vmem:[%s253 + $0x1c0] sm:$0xff] %vm5722, %v5707
        %5780 = vst.msk [vmem:[%s253 + $0x1c8] sm:$0xff] %vm5722, %v5709
        %5781 = vst.msk [vmem:[%s253 + $0x1d0] sm:$0xff] %vm5722, %v5711
        %5782 = vst.msk [vmem:[%s253 + $0x1d8] sm:$0xff] %vm5722, %v5713
        %5783 = vst.msk [vmem:[%s253 + $0x1e0] sm:$0xff] %vm5722, %v5715
        %5784 = vst.msk [vmem:[%s253 + $0x1e8] sm:$0xff] %vm5722, %v5717
        %5785 = vst.msk [vmem:[%s253 + $0x1f0] sm:$0xff] %vm5722, %v5719
        %5786 = vst.msk [vmem:[%s253 + $0x1f8] sm:$0xff] %vm5722, %v5721
        %s5787 = sand.u32 %s156, 1
        %s5788 = sand.u32 %s156, 1
        %s5789 = smul.addr %s5788, 512
        %s5790 = scalar_lea.vmem [#allocation2], %s5789
        // Predicated region
        $region45: #{tpu_custom_call.1} parent=43 // pred_check
          %p5791 = pneg %p166
        $region46: #{tpu_custom_call.1} parent=43 // pred_check_branch
          %5793 = sbr.rel (%p5791) target = $region48
        $region47: #{tpu_custom_call.1} parent=43 // pred_region
          %s5794 = smul.u32 64, %s17
          %s5795 = ssub.s32 125, %s5794
          %p5796 = scmp.lt.s32.totalorder %s5795, 64
          %s5797 = scalar_select %p5796, %s5795, 64
          %s5798 = smul.u32 128, %s5797
          %p5799 = scmp.ne.s32.totalorder 0, %s5798
          %s5800 = smul.addr %s5794, 8
          %s5801 = scalar_lea.vmem %s6, %s5800
          // Predicated region
          $region49: #{tpu_custom_call.1} parent=47 // pred_check
            %p5802 = pneg %p5799
          $region50: #{tpu_custom_call.1} parent=47 // pred_check_branch
            %5804 = sbr.rel (%p5802) target = $region52
          $region51: #{tpu_custom_call.1} parent=47 // pred_region
            // Predicated region
            $region53: #{tpu_custom_call.1} parent=51 // pred_check
              _
            $region54: #{tpu_custom_call.1} parent=51 // pred_check_branch
              %5806 = sbr.rel (0) target = $region56
            $region55: #{tpu_custom_call.1} parent=51 // pred_region
              // Predicated region
              $region75: #{tpu_custom_call.1} parent=55 // pred_check
                _
              $region76: #{tpu_custom_call.1} parent=55 // pred_check_branch
                %5981 = sbr.rel (0) target = $region78
              $region77: #{tpu_custom_call.1} parent=55 // pred_region
                %s5982 = sshrl.u32 %s5797, 6
                // While loop
                $region79: #{tpu_custom_call.1} parent=77 // loop_pre_header
                  _
                $region80: #{tpu_custom_call.1} parent=77 // loop_header
                  %s5984 = sphi 0, %s5986
                  %p5985 = scmp.ge.s32.totalorder %s5984, %s5982
                  %s5989 = sphi 0, %s6122
                  %s5990 = sphi %s5790, %s6125
                  %s5991 = sphi %s5801, %s6126
                $region81: #{tpu_custom_call.1} parent=77 // loop_header_branch
                  %5988 = sbr.rel (%p5985) target = $region85
                $region82: #{tpu_custom_call.1} parent=77 // loop_body
                  %v5992 = vld [vmem:[%s5990] sm:$0xff]
                  %5993 = vst [vmem:[%s5991] sm:$0xff] %v5992
                  %v5994 = vld [vmem:[%s5990 + $0x8] sm:$0xff]
                  %5995 = vst [vmem:[%s5991 + $0x8] sm:$0xff] %v5994
                  %v5996 = vld [vmem:[%s5990 + $0x10] sm:$0xff]
                  %5997 = vst [vmem:[%s5991 + $0x10] sm:$0xff] %v5996
                  %v5998 = vld [vmem:[%s5990 + $0x18] sm:$0xff]
                  %5999 = vst [vmem:[%s5991 + $0x18] sm:$0xff] %v5998
                  %v6000 = vld [vmem:[%s5990 + $0x20] sm:$0xff]
                  %6001 = vst [vmem:[%s5991 + $0x20] sm:$0xff] %v6000
                  %v6002 = vld [vmem:[%s5990 + $0x28] sm:$0xff]
                  %6003 = vst [vmem:[%s5991 + $0x28] sm:$0xff] %v6002
                  %v6004 = vld [vmem:[%s5990 + $0x30] sm:$0xff]
                  %6005 = vst [vmem:[%s5991 + $0x30] sm:$0xff] %v6004
                  %v6006 = vld [vmem:[%s5990 + $0x38] sm:$0xff]
                  %6007 = vst [vmem:[%s5991 + $0x38] sm:$0xff] %v6006
                  %v6008 = vld [vmem:[%s5990 + $0x40] sm:$0xff]
                  %6009 = vst [vmem:[%s5991 + $0x40] sm:$0xff] %v6008
                  %v6010 = vld [vmem:[%s5990 + $0x48] sm:$0xff]
                  %6011 = vst [vmem:[%s5991 + $0x48] sm:$0xff] %v6010
                  %v6012 = vld [vmem:[%s5990 + $0x50] sm:$0xff]
                  %6013 = vst [vmem:[%s5991 + $0x50] sm:$0xff] %v6012
                  %v6014 = vld [vmem:[%s5990 + $0x58] sm:$0xff]
                  %6015 = vst [vmem:[%s5991 + $0x58] sm:$0xff] %v6014
                  %v6016 = vld [vmem:[%s5990 + $0x60] sm:$0xff]
                  %6017 = vst [vmem:[%s5991 + $0x60] sm:$0xff] %v6016
                  %v6018 = vld [vmem:[%s5990 + $0x68] sm:$0xff]
                  %6019 = vst [vmem:[%s5991 + $0x68] sm:$0xff] %v6018
                  %v6020 = vld [vmem:[%s5990 + $0x70] sm:$0xff]
                  %6021 = vst [vmem:[%s5991 + $0x70] sm:$0xff] %v6020
                  %v6022 = vld [vmem:[%s5990 + $0x78] sm:$0xff]
                  %6023 = vst [vmem:[%s5991 + $0x78] sm:$0xff] %v6022
                  %v6024 = vld [vmem:[%s5990 + $0x80] sm:$0xff]
                  %6025 = vst [vmem:[%s5991 + $0x80] sm:$0xff] %v6024
                  %v6026 = vld [vmem:[%s5990 + $0x88] sm:$0xff]
                  %6027 = vst [vmem:[%s5991 + $0x88] sm:$0xff] %v6026
                  %v6028 = vld [vmem:[%s5990 + $0x90] sm:$0xff]
                  %6029 = vst [vmem:[%s5991 + $0x90] sm:$0xff] %v6028
                  %v6030 = vld [vmem:[%s5990 + $0x98] sm:$0xff]
                  %6031 = vst [vmem:[%s5991 + $0x98] sm:$0xff] %v6030
                  %v6032 = vld [vmem:[%s5990 + $0xa0] sm:$0xff]
                  %6033 = vst [vmem:[%s5991 + $0xa0] sm:$0xff] %v6032
                  %v6034 = vld [vmem:[%s5990 + $0xa8] sm:$0xff]
                  %6035 = vst [vmem:[%s5991 + $0xa8] sm:$0xff] %v6034
                  %v6036 = vld [vmem:[%s5990 + $0xb0] sm:$0xff]
                  %6037 = vst [vmem:[%s5991 + $0xb0] sm:$0xff] %v6036
                  %v6038 = vld [vmem:[%s5990 + $0xb8] sm:$0xff]
                  %6039 = vst [vmem:[%s5991 + $0xb8] sm:$0xff] %v6038
                  %v6040 = vld [vmem:[%s5990 + $0xc0] sm:$0xff]
                  %6041 = vst [vmem:[%s5991 + $0xc0] sm:$0xff] %v6040
                  %v6042 = vld [vmem:[%s5990 + $0xc8] sm:$0xff]
                  %6043 = vst [vmem:[%s5991 + $0xc8] sm:$0xff] %v6042
                  %v6044 = vld [vmem:[%s5990 + $0xd0] sm:$0xff]
                  %6045 = vst [vmem:[%s5991 + $0xd0] sm:$0xff] %v6044
                  %v6046 = vld [vmem:[%s5990 + $0xd8] sm:$0xff]
                  %6047 = vst [vmem:[%s5991 + $0xd8] sm:$0xff] %v6046
                  %v6048 = vld [vmem:[%s5990 + $0xe0] sm:$0xff]
                  %6049 = vst [vmem:[%s5991 + $0xe0] sm:$0xff] %v6048
                  %v6050 = vld [vmem:[%s5990 + $0xe8] sm:$0xff]
                  %6051 = vst [vmem:[%s5991 + $0xe8] sm:$0xff] %v6050
                  %v6052 = vld [vmem:[%s5990 + $0xf0] sm:$0xff]
                  %6053 = vst [vmem:[%s5991 + $0xf0] sm:$0xff] %v6052
                  %v6054 = vld [vmem:[%s5990 + $0xf8] sm:$0xff]
                  %6055 = vst [vmem:[%s5991 + $0xf8] sm:$0xff] %v6054
                  %v6056 = vld [vmem:[%s5990 + $0x100] sm:$0xff]
                  %6057 = vst [vmem:[%s5991 + $0x100] sm:$0xff] %v6056
                  %v6058 = vld [vmem:[%s5990 + $0x108] sm:$0xff]
                  %6059 = vst [vmem:[%s5991 + $0x108] sm:$0xff] %v6058
                  %v6060 = vld [vmem:[%s5990 + $0x110] sm:$0xff]
                  %6061 = vst [vmem:[%s5991 + $0x110] sm:$0xff] %v6060
                  %v6062 = vld [vmem:[%s5990 + $0x118] sm:$0xff]
                  %6063 = vst [vmem:[%s5991 + $0x118] sm:$0xff] %v6062
                  %v6064 = vld [vmem:[%s5990 + $0x120] sm:$0xff]
                  %6065 = vst [vmem:[%s5991 + $0x120] sm:$0xff] %v6064
                  %v6066 = vld [vmem:[%s5990 + $0x128] sm:$0xff]
                  %6067 = vst [vmem:[%s5991 + $0x128] sm:$0xff] %v6066
                  %v6068 = vld [vmem:[%s5990 + $0x130] sm:$0xff]
                  %6069 = vst [vmem:[%s5991 + $0x130] sm:$0xff] %v6068
                  %v6070 = vld [vmem:[%s5990 + $0x138] sm:$0xff]
                  %6071 = vst [vmem:[%s5991 + $0x138] sm:$0xff] %v6070
                  %v6072 = vld [vmem:[%s5990 + $0x140] sm:$0xff]
                  %6073 = vst [vmem:[%s5991 + $0x140] sm:$0xff] %v6072
                  %v6074 = vld [vmem:[%s5990 + $0x148] sm:$0xff]
                  %6075 = vst [vmem:[%s5991 + $0x148] sm:$0xff] %v6074
                  %v6076 = vld [vmem:[%s5990 + $0x150] sm:$0xff]
                  %6077 = vst [vmem:[%s5991 + $0x150] sm:$0xff] %v6076
                  %v6078 = vld [vmem:[%s5990 + $0x158] sm:$0xff]
                  %6079 = vst [vmem:[%s5991 + $0x158] sm:$0xff] %v6078
                  %v6080 = vld [vmem:[%s5990 + $0x160] sm:$0xff]
                  %6081 = vst [vmem:[%s5991 + $0x160] sm:$0xff] %v6080
                  %v6082 = vld [vmem:[%s5990 + $0x168] sm:$0xff]
                  %6083 = vst [vmem:[%s5991 + $0x168] sm:$0xff] %v6082
                  %v6084 = vld [vmem:[%s5990 + $0x170] sm:$0xff]
                  %6085 = vst [vmem:[%s5991 + $0x170] sm:$0xff] %v6084
                  %v6086 = vld [vmem:[%s5990 + $0x178] sm:$0xff]
                  %6087 = vst [vmem:[%s5991 + $0x178] sm:$0xff] %v6086
                  %v6088 = vld [vmem:[%s5990 + $0x180] sm:$0xff]
                  %6089 = vst [vmem:[%s5991 + $0x180] sm:$0xff] %v6088
                  %v6090 = vld [vmem:[%s5990 + $0x188] sm:$0xff]
                  %6091 = vst [vmem:[%s5991 + $0x188] sm:$0xff] %v6090
                  %v6092 = vld [vmem:[%s5990 + $0x190] sm:$0xff]
                  %6093 = vst [vmem:[%s5991 + $0x190] sm:$0xff] %v6092
                  %v6094 = vld [vmem:[%s5990 + $0x198] sm:$0xff]
                  %6095 = vst [vmem:[%s5991 + $0x198] sm:$0xff] %v6094
                  %v6096 = vld [vmem:[%s5990 + $0x1a0] sm:$0xff]
                  %6097 = vst [vmem:[%s5991 + $0x1a0] sm:$0xff] %v6096
                  %v6098 = vld [vmem:[%s5990 + $0x1a8] sm:$0xff]
                  %6099 = vst [vmem:[%s5991 + $0x1a8] sm:$0xff] %v6098
                  %v6100 = vld [vmem:[%s5990 + $0x1b0] sm:$0xff]
                  %6101 = vst [vmem:[%s5991 + $0x1b0] sm:$0xff] %v6100
                  %v6102 = vld [vmem:[%s5990 + $0x1b8] sm:$0xff]
                  %6103 = vst [vmem:[%s5991 + $0x1b8] sm:$0xff] %v6102
                  %v6104 = vld [vmem:[%s5990 + $0x1c0] sm:$0xff]
                  %6105 = vst [vmem:[%s5991 + $0x1c0] sm:$0xff] %v6104
                  %v6106 = vld [vmem:[%s5990 + $0x1c8] sm:$0xff]
                  %6107 = vst [vmem:[%s5991 + $0x1c8] sm:$0xff] %v6106
                  %v6108 = vld [vmem:[%s5990 + $0x1d0] sm:$0xff]
                  %6109 = vst [vmem:[%s5991 + $0x1d0] sm:$0xff] %v6108
                  %v6110 = vld [vmem:[%s5990 + $0x1d8] sm:$0xff]
                  %6111 = vst [vmem:[%s5991 + $0x1d8] sm:$0xff] %v6110
                  %v6112 = vld [vmem:[%s5990 + $0x1e0] sm:$0xff]
                  %6113 = vst [vmem:[%s5991 + $0x1e0] sm:$0xff] %v6112
                  %v6114 = vld [vmem:[%s5990 + $0x1e8] sm:$0xff]
                  %6115 = vst [vmem:[%s5991 + $0x1e8] sm:$0xff] %v6114
                  %v6116 = vld [vmem:[%s5990 + $0x1f0] sm:$0xff]
                  %6117 = vst [vmem:[%s5991 + $0x1f0] sm:$0xff] %v6116
                  %v6118 = vld [vmem:[%s5990 + $0x1f8] sm:$0xff]
                  %6119 = vst [vmem:[%s5991 + $0x1f8] sm:$0xff] %v6118
                  %s6120 = sadd.s32 1, %s5989
                  %p6121 = scmp.ge.s32.totalorder %s6120, %s5982
                  %s6122 = scalar_select %p6121, 0, %s6120
                  %s6123 = smul.u32 %s6122, 512
                  %s6124 = smul.u32 %s6122, 512
                  %s6125 = scalar_lea.vmem %s5790, %s6123 [#allocation2]
                  %s6126 = scalar_lea.vmem %s5801, %s6124
                $region83: #{tpu_custom_call.1} parent=77 // loop_footer
                  %s5986 = sadd.s32 %s5984, 1
                $region84: #{tpu_custom_call.1} parent=77 // loop_footer_branch
                  %5983 = sbr.rel target = $region80
                $region85: #{tpu_custom_call.1} parent=77 // loop_exit
                  _
                %s6127 = sshrl.u32 %s5797, 6
                %s6128 = sand.u32 %s5797, 63
                %s6129 = smul.u32 %s6127, 64
                %s6130 = smul.u32 8, %s6129
                %s6131 = scalar_lea.vmem %s5790, %s6130 [#allocation2]
                %s6132 = smul.u32 8, %s6129
                %s6133 = scalar_lea.vmem %s5801, %s6132
                // While loop
                $region86: #{tpu_custom_call.1} parent=77 // loop_pre_header
                  _
                $region87: #{tpu_custom_call.1} parent=77 // loop_header
                  %s6135 = sphi 0, %s6137
                  %p6136 = scmp.ge.s32.totalorder %s6135, %s6128
                  %s6140 = sphi 0, %s6147
                  %s6141 = sphi %s6131, %s6150
                  %s6142 = sphi %s6133, %s6151
                $region88: #{tpu_custom_call.1} parent=77 // loop_header_branch
                  %6139 = sbr.rel (%p6136) target = $region92
                $region89: #{tpu_custom_call.1} parent=77 // loop_body
                  %v6143 = vld [vmem:[%s6141] sm:$0xff]
                  %6144 = vst [vmem:[%s6142] sm:$0xff] %v6143
                  %s6145 = sadd.s32 1, %s6140
                  %p6146 = scmp.ge.s32.totalorder %s6145, %s6128
                  %s6147 = scalar_select %p6146, 0, %s6145
                  %s6148 = smul.u32 %s6147, 8
                  %s6149 = smul.u32 %s6147, 8
                  %s6150 = scalar_lea.vmem %s6131, %s6148 [#allocation2]
                  %s6151 = scalar_lea.vmem %s6133, %s6149
                $region90: #{tpu_custom_call.1} parent=77 // loop_footer
                  %s6137 = sadd.s32 %s6135, 1
                $region91: #{tpu_custom_call.1} parent=77 // loop_footer_branch
                  %6134 = sbr.rel target = $region87
                $region92: #{tpu_custom_call.1} parent=77 // loop_exit
                  _
              $region78: #{tpu_custom_call.1} parent=55 // pred_fallthru
                _
              // Predicated region
              $region93: #{tpu_custom_call.1} parent=55 // pred_check
                _
              $region94: #{tpu_custom_call.1} parent=55 // pred_check_branch
                %6153 = sbr.rel target = $region96
              $region95: #{tpu_custom_call.1} parent=55 // pred_region
                _
              $region96: #{tpu_custom_call.1} parent=55 // pred_fallthru
                _
            $region56: #{tpu_custom_call.1} parent=51 // pred_fallthru
              _
            // Predicated region
            $region57: #{tpu_custom_call.1} parent=51 // pred_check
              _
            $region58: #{tpu_custom_call.1} parent=51 // pred_check_branch
              %5808 = sbr.rel target = $region60
            $region59: #{tpu_custom_call.1} parent=51 // pred_region
              %s5810 = sshrl.u32 %s5797, 6
              // While loop
              $region61: #{tpu_custom_call.1} parent=59 // loop_pre_header
                _
              $region62: #{tpu_custom_call.1} parent=59 // loop_header
                %s5812 = sphi 0, %s5814
                %p5813 = scmp.ge.s32.totalorder %s5812, %s5810
                %s5817 = sphi 0, %s5950
                %s5818 = sphi %s5790, %s5953
                %s5819 = sphi %s5801, %s5954
              $region63: #{tpu_custom_call.1} parent=59 // loop_header_branch
                %5816 = sbr.rel (%p5813) target = $region67
              $region64: #{tpu_custom_call.1} parent=59 // loop_body
                %v5820 = vld [vmem:[%s5818] sm:$0xff]
                %5821 = vst [vmem:[%s5819] sm:$0xff] %v5820
                %v5822 = vld [vmem:[%s5818 + $0x8] sm:$0xff]
                %5823 = vst [vmem:[%s5819 + $0x8] sm:$0xff] %v5822
                %v5824 = vld [vmem:[%s5818 + $0x10] sm:$0xff]
                %5825 = vst [vmem:[%s5819 + $0x10] sm:$0xff] %v5824
                %v5826 = vld [vmem:[%s5818 + $0x18] sm:$0xff]
                %5827 = vst [vmem:[%s5819 + $0x18] sm:$0xff] %v5826
                %v5828 = vld [vmem:[%s5818 + $0x20] sm:$0xff]
                %5829 = vst [vmem:[%s5819 + $0x20] sm:$0xff] %v5828
                %v5830 = vld [vmem:[%s5818 + $0x28] sm:$0xff]
                %5831 = vst [vmem:[%s5819 + $0x28] sm:$0xff] %v5830
                %v5832 = vld [vmem:[%s5818 + $0x30] sm:$0xff]
                %5833 = vst [vmem:[%s5819 + $0x30] sm:$0xff] %v5832
                %v5834 = vld [vmem:[%s5818 + $0x38] sm:$0xff]
                %5835 = vst [vmem:[%s5819 + $0x38] sm:$0xff] %v5834
                %v5836 = vld [vmem:[%s5818 + $0x40] sm:$0xff]
                %5837 = vst [vmem:[%s5819 + $0x40] sm:$0xff] %v5836
                %v5838 = vld [vmem:[%s5818 + $0x48] sm:$0xff]
                %5839 = vst [vmem:[%s5819 + $0x48] sm:$0xff] %v5838
                %v5840 = vld [vmem:[%s5818 + $0x50] sm:$0xff]
                %5841 = vst [vmem:[%s5819 + $0x50] sm:$0xff] %v5840
                %v5842 = vld [vmem:[%s5818 + $0x58] sm:$0xff]
                %5843 = vst [vmem:[%s5819 + $0x58] sm:$0xff] %v5842
                %v5844 = vld [vmem:[%s5818 + $0x60] sm:$0xff]
                %5845 = vst [vmem:[%s5819 + $0x60] sm:$0xff] %v5844
                %v5846 = vld [vmem:[%s5818 + $0x68] sm:$0xff]
                %5847 = vst [vmem:[%s5819 + $0x68] sm:$0xff] %v5846
                %v5848 = vld [vmem:[%s5818 + $0x70] sm:$0xff]
                %5849 = vst [vmem:[%s5819 + $0x70] sm:$0xff] %v5848
                %v5850 = vld [vmem:[%s5818 + $0x78] sm:$0xff]
                %5851 = vst [vmem:[%s5819 + $0x78] sm:$0xff] %v5850
                %v5852 = vld [vmem:[%s5818 + $0x80] sm:$0xff]
                %5853 = vst [vmem:[%s5819 + $0x80] sm:$0xff] %v5852
                %v5854 = vld [vmem:[%s5818 + $0x88] sm:$0xff]
                %5855 = vst [vmem:[%s5819 + $0x88] sm:$0xff] %v5854
                %v5856 = vld [vmem:[%s5818 + $0x90] sm:$0xff]
                %5857 = vst [vmem:[%s5819 + $0x90] sm:$0xff] %v5856
                %v5858 = vld [vmem:[%s5818 + $0x98] sm:$0xff]
                %5859 = vst [vmem:[%s5819 + $0x98] sm:$0xff] %v5858
                %v5860 = vld [vmem:[%s5818 + $0xa0] sm:$0xff]
                %5861 = vst [vmem:[%s5819 + $0xa0] sm:$0xff] %v5860
                %v5862 = vld [vmem:[%s5818 + $0xa8] sm:$0xff]
                %5863 = vst [vmem:[%s5819 + $0xa8] sm:$0xff] %v5862
                %v5864 = vld [vmem:[%s5818 + $0xb0] sm:$0xff]
                %5865 = vst [vmem:[%s5819 + $0xb0] sm:$0xff] %v5864
                %v5866 = vld [vmem:[%s5818 + $0xb8] sm:$0xff]
                %5867 = vst [vmem:[%s5819 + $0xb8] sm:$0xff] %v5866
                %v5868 = vld [vmem:[%s5818 + $0xc0] sm:$0xff]
                %5869 = vst [vmem:[%s5819 + $0xc0] sm:$0xff] %v5868
                %v5870 = vld [vmem:[%s5818 + $0xc8] sm:$0xff]
                %5871 = vst [vmem:[%s5819 + $0xc8] sm:$0xff] %v5870
                %v5872 = vld [vmem:[%s5818 + $0xd0] sm:$0xff]
                %5873 = vst [vmem:[%s5819 + $0xd0] sm:$0xff] %v5872
                %v5874 = vld [vmem:[%s5818 + $0xd8] sm:$0xff]
                %5875 = vst [vmem:[%s5819 + $0xd8] sm:$0xff] %v5874
                %v5876 = vld [vmem:[%s5818 + $0xe0] sm:$0xff]
                %5877 = vst [vmem:[%s5819 + $0xe0] sm:$0xff] %v5876
                %v5878 = vld [vmem:[%s5818 + $0xe8] sm:$0xff]
                %5879 = vst [vmem:[%s5819 + $0xe8] sm:$0xff] %v5878
                %v5880 = vld [vmem:[%s5818 + $0xf0] sm:$0xff]
                %5881 = vst [vmem:[%s5819 + $0xf0] sm:$0xff] %v5880
                %v5882 = vld [vmem:[%s5818 + $0xf8] sm:$0xff]
                %5883 = vst [vmem:[%s5819 + $0xf8] sm:$0xff] %v5882
                %v5884 = vld [vmem:[%s5818 + $0x100] sm:$0xff]
                %5885 = vst [vmem:[%s5819 + $0x100] sm:$0xff] %v5884
                %v5886 = vld [vmem:[%s5818 + $0x108] sm:$0xff]
                %5887 = vst [vmem:[%s5819 + $0x108] sm:$0xff] %v5886
                %v5888 = vld [vmem:[%s5818 + $0x110] sm:$0xff]
                %5889 = vst [vmem:[%s5819 + $0x110] sm:$0xff] %v5888
                %v5890 = vld [vmem:[%s5818 + $0x118] sm:$0xff]
                %5891 = vst [vmem:[%s5819 + $0x118] sm:$0xff] %v5890
                %v5892 = vld [vmem:[%s5818 + $0x120] sm:$0xff]
                %5893 = vst [vmem:[%s5819 + $0x120] sm:$0xff] %v5892
                %v5894 = vld [vmem:[%s5818 + $0x128] sm:$0xff]
                %5895 = vst [vmem:[%s5819 + $0x128] sm:$0xff] %v5894
                %v5896 = vld [vmem:[%s5818 + $0x130] sm:$0xff]
                %5897 = vst [vmem:[%s5819 + $0x130] sm:$0xff] %v5896
                %v5898 = vld [vmem:[%s5818 + $0x138] sm:$0xff]
                %5899 = vst [vmem:[%s5819 + $0x138] sm:$0xff] %v5898
                %v5900 = vld [vmem:[%s5818 + $0x140] sm:$0xff]
                %5901 = vst [vmem:[%s5819 + $0x140] sm:$0xff] %v5900
                %v5902 = vld [vmem:[%s5818 + $0x148] sm:$0xff]
                %5903 = vst [vmem:[%s5819 + $0x148] sm:$0xff] %v5902
                %v5904 = vld [vmem:[%s5818 + $0x150] sm:$0xff]
                %5905 = vst [vmem:[%s5819 + $0x150] sm:$0xff] %v5904
                %v5906 = vld [vmem:[%s5818 + $0x158] sm:$0xff]
                %5907 = vst [vmem:[%s5819 + $0x158] sm:$0xff] %v5906
                %v5908 = vld [vmem:[%s5818 + $0x160] sm:$0xff]
                %5909 = vst [vmem:[%s5819 + $0x160] sm:$0xff] %v5908
                %v5910 = vld [vmem:[%s5818 + $0x168] sm:$0xff]
                %5911 = vst [vmem:[%s5819 + $0x168] sm:$0xff] %v5910
                %v5912 = vld [vmem:[%s5818 + $0x170] sm:$0xff]
                %5913 = vst [vmem:[%s5819 + $0x170] sm:$0xff] %v5912
                %v5914 = vld [vmem:[%s5818 + $0x178] sm:$0xff]
                %5915 = vst [vmem:[%s5819 + $0x178] sm:$0xff] %v5914
                %v5916 = vld [vmem:[%s5818 + $0x180] sm:$0xff]
                %5917 = vst [vmem:[%s5819 + $0x180] sm:$0xff] %v5916
                %v5918 = vld [vmem:[%s5818 + $0x188] sm:$0xff]
                %5919 = vst [vmem:[%s5819 + $0x188] sm:$0xff] %v5918
                %v5920 = vld [vmem:[%s5818 + $0x190] sm:$0xff]
                %5921 = vst [vmem:[%s5819 + $0x190] sm:$0xff] %v5920
                %v5922 = vld [vmem:[%s5818 + $0x198] sm:$0xff]
                %5923 = vst [vmem:[%s5819 + $0x198] sm:$0xff] %v5922
                %v5924 = vld [vmem:[%s5818 + $0x1a0] sm:$0xff]
                %5925 = vst [vmem:[%s5819 + $0x1a0] sm:$0xff] %v5924
                %v5926 = vld [vmem:[%s5818 + $0x1a8] sm:$0xff]
                %5927 = vst [vmem:[%s5819 + $0x1a8] sm:$0xff] %v5926
                %v5928 = vld [vmem:[%s5818 + $0x1b0] sm:$0xff]
                %5929 = vst [vmem:[%s5819 + $0x1b0] sm:$0xff] %v5928
                %v5930 = vld [vmem:[%s5818 + $0x1b8] sm:$0xff]
                %5931 = vst [vmem:[%s5819 + $0x1b8] sm:$0xff] %v5930
                %v5932 = vld [vmem:[%s5818 + $0x1c0] sm:$0xff]
                %5933 = vst [vmem:[%s5819 + $0x1c0] sm:$0xff] %v5932
                %v5934 = vld [vmem:[%s5818 + $0x1c8] sm:$0xff]
                %5935 = vst [vmem:[%s5819 + $0x1c8] sm:$0xff] %v5934
                %v5936 = vld [vmem:[%s5818 + $0x1d0] sm:$0xff]
                %5937 = vst [vmem:[%s5819 + $0x1d0] sm:$0xff] %v5936
                %v5938 = vld [vmem:[%s5818 + $0x1d8] sm:$0xff]
                %5939 = vst [vmem:[%s5819 + $0x1d8] sm:$0xff] %v5938
                %v5940 = vld [vmem:[%s5818 + $0x1e0] sm:$0xff]
                %5941 = vst [vmem:[%s5819 + $0x1e0] sm:$0xff] %v5940
                %v5942 = vld [vmem:[%s5818 + $0x1e8] sm:$0xff]
                %5943 = vst [vmem:[%s5819 + $0x1e8] sm:$0xff] %v5942
                %v5944 = vld [vmem:[%s5818 + $0x1f0] sm:$0xff]
                %5945 = vst [vmem:[%s5819 + $0x1f0] sm:$0xff] %v5944
                %v5946 = vld [vmem:[%s5818 + $0x1f8] sm:$0xff]
                %5947 = vst [vmem:[%s5819 + $0x1f8] sm:$0xff] %v5946
                %s5948 = sadd.s32 1, %s5817
                %p5949 = scmp.ge.s32.totalorder %s5948, %s5810
                %s5950 = scalar_select %p5949, 0, %s5948
                %s5951 = smul.u32 %s5950, 512
                %s5952 = smul.u32 %s5950, 512
                %s5953 = scalar_lea.vmem %s5790, %s5951 [#allocation2]
                %s5954 = scalar_lea.vmem %s5801, %s5952
              $region65: #{tpu_custom_call.1} parent=59 // loop_footer
                %s5814 = sadd.s32 %s5812, 1
              $region66: #{tpu_custom_call.1} parent=59 // loop_footer_branch
                %5811 = sbr.rel target = $region62
              $region67: #{tpu_custom_call.1} parent=59 // loop_exit
                _
              %s5955 = sshrl.u32 %s5797, 6
              %s5956 = sand.u32 %s5797, 63
              %s5957 = smul.u32 %s5955, 64
              %s5958 = smul.u32 8, %s5957
              %s5959 = scalar_lea.vmem %s5790, %s5958 [#allocation2]
              %s5960 = smul.u32 8, %s5957
              %s5961 = scalar_lea.vmem %s5801, %s5960
              // While loop
              $region68: #{tpu_custom_call.1} parent=59 // loop_pre_header
                _
              $region69: #{tpu_custom_call.1} parent=59 // loop_header
                %s5963 = sphi 0, %s5965
                %p5964 = scmp.ge.s32.totalorder %s5963, %s5956
                %s5968 = sphi 0, %s5975
                %s5969 = sphi %s5959, %s5978
                %s5970 = sphi %s5961, %s5979
              $region70: #{tpu_custom_call.1} parent=59 // loop_header_branch
                %5967 = sbr.rel (%p5964) target = $region74
              $region71: #{tpu_custom_call.1} parent=59 // loop_body
                %v5971 = vld [vmem:[%s5969] sm:$0xff]
                %5972 = vst [vmem:[%s5970] sm:$0xff] %v5971
                %s5973 = sadd.s32 1, %s5968
                %p5974 = scmp.ge.s32.totalorder %s5973, %s5956
                %s5975 = scalar_select %p5974, 0, %s5973
                %s5976 = smul.u32 %s5975, 8
                %s5977 = smul.u32 %s5975, 8
                %s5978 = scalar_lea.vmem %s5959, %s5976 [#allocation2]
                %s5979 = scalar_lea.vmem %s5961, %s5977
              $region72: #{tpu_custom_call.1} parent=59 // loop_footer
                %s5965 = sadd.s32 %s5963, 1
              $region73: #{tpu_custom_call.1} parent=59 // loop_footer_branch
                %5962 = sbr.rel target = $region69
              $region74: #{tpu_custom_call.1} parent=59 // loop_exit
                _
            $region60: #{tpu_custom_call.1} parent=51 // pred_fallthru
              _
          $region52: #{tpu_custom_call.1} parent=47 // pred_fallthru
            _
          %6154 = vnop
        $region48: #{tpu_custom_call.1} parent=43 // pred_fallthru
          _
      $region44: #{tpu_custom_call.1} parent=5 // pred_fallthru
        _
      %p6155 = scmp.le.s32.totalorder 2, %s12
      // Predicated region
      $region97: #{tpu_custom_call.1} parent=5 // pred_check
        %p6156 = pneg %p6155
      $region98: #{tpu_custom_call.1} parent=5 // pred_check_branch
        %6158 = sbr.rel (%p6156) target = $region100
      $region99: #{tpu_custom_call.1} parent=5 // pred_region
        %s6159 = ssub.s32 %s12, 2
        // Predicated region
        $region101: #{tpu_custom_call.1} parent=99 // pred_check
          %p6160 = pneg %p172
        $region102: #{tpu_custom_call.1} parent=99 // pred_check_branch
          %6162 = sbr.rel (%p6160) target = $region104
        $region103: #{tpu_custom_call.1} parent=99 // pred_region
          %s6163 = sand.u32 %s157, 1
          %s6164 = sand.u32 %s157, 1
          %s6165 = smul.addr %s6164, 512
          %s6166 = scalar_lea.vmem [#allocation2], %s6165
        $region104: #{tpu_custom_call.1} parent=99 // pred_fallthru
          _
      $region100: #{tpu_custom_call.1} parent=5 // pred_fallthru
        _
    $region6: #{tpu_custom_call.1} parent=1 // loop_footer
      %s16 = sadd.s32 1, %s12
    $region7: #{tpu_custom_call.1} parent=1 // loop_footer_branch
      %11 = sbr.rel target = $region3
    $region8: #{tpu_custom_call.1} parent=1 // loop_exit
      _

</llo_original>
